<compile_context>
chip_gen: v5e
topology: v5e:2x2
jax: 0.10.0
libtpu: 0.0.40
codegen_flags: <defaults>
</compile_context>

<pallas_src>
import functools

import jax
import jax.numpy as jnp
from jax.experimental import pallas as pl
from jax.experimental.pallas import tpu as pltpu

# ---------------------------------------------------------------------------
# Shapes consistent with RecNN_Clas(seq_len, n_feats, hidden_dim, n_layers,
# rnn='lstm', out_size, bidir=False); out_size=4 so log_softmax is non-trivial.
# ---------------------------------------------------------------------------
SEQ_LEN = 8     # T
N_FEATS = 8     # F
HIDDEN = 32     # H
N_LAYERS = 2    # L
OUT_SIZE = 4    # O
BATCH = 2       # B

LANE = 128      # padded feature / hidden / per-gate width (one lane group)
BATCH_PAD = 8   # padded batch (one sublane tile)


def _lstm_head_kernel(x_ref, h0_ref, c0_ref, wih_ref, whh_ref, b_ref,
                      lw_ref, lb_ref, out_ref, seq_ref, pre_ref,
                      *, n_layers, seq_len):
    T = seq_len
    Bp = h0_ref.shape[1]
    GW = h0_ref.shape[2]          # per-gate (and padded hidden) width == 128

    h = h0_ref[0]
    for layer in range(n_layers):
        # ---- hoisted input projection for ALL timesteps (one MXU matmul) ----
        inp = x_ref[...] if layer == 0 else seq_ref[...]          # (T*Bp, GW)
        wih = wih_ref[layer]                                      # (GW, 4*GW)
        bias = b_ref[layer]                                       # (1, 4*GW)
        pre_ref[...] = (jnp.dot(inp, wih, preferred_element_type=jnp.float32)
                        + bias)                                   # (T*Bp, 4*GW)

        whh = whh_ref[layer]                                      # (GW, 4*GW)
        h = h0_ref[layer]                                         # (Bp, GW)
        c = c0_ref[layer]                                         # (Bp, GW)

        # Fully unrolled (trace-time) recurrence; h, c stay in registers.
        for t in range(T):
            gates = (pre_ref[pl.ds(t * Bp, Bp), :]
                     + jnp.dot(h, whh, preferred_element_type=jnp.float32))
            # PyTorch gate order i, f, g, o; each gate owns a full lane group.
            i_g = jax.nn.sigmoid(gates[:, 0 * GW:1 * GW])
            f_g = jax.nn.sigmoid(gates[:, 1 * GW:2 * GW])
            g_g = jnp.tanh(gates[:, 2 * GW:3 * GW])
            o_g = jax.nn.sigmoid(gates[:, 3 * GW:4 * GW])
            c = f_g * c + i_g * g_g
            h = o_g * jnp.tanh(c)
            if layer < n_layers - 1:
                seq_ref[pl.ds(t * Bp, Bp), :] = h                 # next layer input
        # TODO(synk): nn.LSTM inter-layer dropout applies only in training mode;
        # eval semantics (no dropout) are implemented here.

    # x[:, -1, :] of the last layer == current hidden state h.
    logits = (jnp.dot(h, lw_ref[...], preferred_element_type=jnp.float32)
              + lb_ref[...])                                      # (Bp, O)
    # log_softmax over dim=1.
    m = jnp.max(logits, axis=1, keepdims=True)
    shifted = logits - m
    lse = jnp.log(jnp.sum(jnp.exp(shifted), axis=1, keepdims=True))
    out_ref[...] = shifted - lse


def _pad_gates_cols(w_t, hidden, lane):
    """(in_dim, 4*H) -> (lane, 4*lane): each gate in its own 128-lane group."""
    in_dim = w_t.shape[0]
    out = jnp.zeros((lane, 4 * lane), jnp.float32)
    for g in range(4):
        out = out.at[:in_dim, g * lane:g * lane + hidden].set(
            w_t[:, g * hidden:(g + 1) * hidden])
    return out


def _pad_gates_bias(b, hidden, lane):
    """(4*H,) -> (1, 4*lane): per-gate bias into its 128-lane group."""
    out = jnp.zeros((1, 4 * lane), jnp.float32)
    for g in range(4):
        out = out.at[0, g * lane:g * lane + hidden].set(
            b[g * hidden:(g + 1) * hidden])
    return out


def recnn_clas_pallas(x, h0, c0, params):
    B, T, F = x.shape
    L, H, O = N_LAYERS, HIDDEN, OUT_SIZE
    Bp, LN = BATCH_PAD, LANE
    assert F <= LN and H <= LN and B <= Bp

    # ---- glue (plain JAX): pad, go time-major, pre-transpose/pack weights ---
    x_tm = jnp.transpose(x, (1, 0, 2))                               # (T, B, F)
    x_p = (jnp.zeros((T, Bp, LN), jnp.float32)
           .at[:, :B, :F].set(x_tm)
           .reshape(T * Bp, LN))                                     # (T*Bp, LN)

    wih_p = jnp.stack([_pad_gates_cols(params["w_ih"][l].T, H, LN)
                       for l in range(L)])                           # (L, LN, 4LN)
    whh_p = jnp.stack([_pad_gates_cols(params["w_hh"][l].T, H, LN)
                       for l in range(L)])                           # (L, LN, 4LN)
    bias_p = jnp.stack([_pad_gates_bias(params["b_ih"][l] + params["b_hh"][l],
                                        H, LN) for l in range(L)])   # (L, 1, 4LN)

    h0_p = jnp.zeros((L, Bp, LN), jnp.float32).at[:, :B, :H].set(h0)
    c0_p = jnp.zeros((L, Bp, LN), jnp.float32).at[:, :B, :H].set(c0)

    lw_p = jnp.zeros((LN, O), jnp.float32).at[:H, :].set(params["lin_w"].T)
    lb = params["lin_b"][None, :]                                    # (1, O)

    kernel = functools.partial(_lstm_head_kernel, n_layers=L, seq_len=T)

    out = pl.pallas_call(
        kernel,
        out_shape=jax.ShapeDtypeStruct((Bp, O), jnp.float32),
        in_specs=[pl.BlockSpec(memory_space=pltpu.MemorySpace.VMEM)] * 8,
        out_specs=pl.BlockSpec(memory_space=pltpu.MemorySpace.VMEM),
        scratch_shapes=[
            pltpu.VMEM((T * Bp, LN), jnp.float32),        # inter-layer seq buffer
            pltpu.VMEM((T * Bp, 4 * LN), jnp.float32),    # hoisted x@W_ih + bias
        ],
        # No grid -> single TensorCore; right call at B=2.  For large batches,
        # add a leading "parallel" batch grid axis to use the second TC (v7x).
    )(x_p, h0_p, c0_p, wih_p, whh_p, bias_p, lw_p, lb)
    return out[:B]


# ---------------------------------------------------------------------------
# Deterministic parameter init mirroring RecNN_Clas.init_weights():
#   LSTM weights: xavier_normal_, LSTM biases: constant 1,
#   Linear: default nn.Linear-style uniform init.
# ---------------------------------------------------------------------------
def init_params(key):
    keys = jax.random.split(key, 2 * N_LAYERS + 2)
    w_ih, w_hh, b_ih, b_hh = [], [], [], []
    for l in range(N_LAYERS):
        in_dim = N_FEATS if l == 0 else HIDDEN
        std_ih = (2.0 / (4 * HIDDEN + in_dim)) ** 0.5
        std_hh = (2.0 / (4 * HIDDEN + HIDDEN)) ** 0.5
        w_ih.append(std_ih * jax.random.normal(
            keys[2 * l], (4 * HIDDEN, in_dim), jnp.float32))
        w_hh.append(std_hh * jax.random.normal(
            keys[2 * l + 1], (4 * HIDDEN, HIDDEN), jnp.float32))
        b_ih.append(jnp.ones((4 * HIDDEN,), jnp.float32))
        b_hh.append(jnp.ones((4 * HIDDEN,), jnp.float32))
    bound = 1.0 / (HIDDEN ** 0.5)
    lin_w = jax.random.uniform(keys[-2], (OUT_SIZE, HIDDEN), jnp.float32,
                               -bound, bound)
    lin_b = jax.random.uniform(keys[-1], (OUT_SIZE,), jnp.float32,
                               -bound, bound)
    return dict(w_ih=w_ih, w_hh=w_hh, b_ih=b_ih, b_hh=b_hh,
                lin_w=lin_w, lin_b=lin_b)


# Pure-JAX reference (mirrors the PyTorch forward, eval mode).
def recnn_clas_ref(x, h0, c0, params):
    L, H = N_LAYERS, HIDDEN
    inp = x
    for l in range(L):
        h, c = h0[l], c0[l]
        outs = []
        for t in range(inp.shape[1]):
            gates = (inp[:, t] @ params["w_ih"][l].T + params["b_ih"][l]
                     + h @ params["w_hh"][l].T + params["b_hh"][l])
            i_g = jax.nn.sigmoid(gates[:, :H])
            f_g = jax.nn.sigmoid(gates[:, H:2 * H])
            g_g = jnp.tanh(gates[:, 2 * H:3 * H])
            o_g = jax.nn.sigmoid(gates[:, 3 * H:])
            c = f_g * c + i_g * g_g
            h = o_g * jnp.tanh(c)
            outs.append(h)
        inp = jnp.stack(outs, axis=1)
    logits = inp[:, -1] @ params["lin_w"].T + params["lin_b"]
    return jax.nn.log_softmax(logits, axis=1)


if __name__ == "__main__":
    key = jax.random.PRNGKey(0)
    kp, kx, kh, kc = jax.random.split(key, 4)
    params = init_params(kp)

    x = jax.random.normal(kx, (BATCH, SEQ_LEN, N_FEATS), jnp.float32)
    # h_0 / c_0 are torch.randn(...) inside the PyTorch forward; deterministic here.
    h0 = jax.random.normal(kh, (N_LAYERS, BATCH, HIDDEN), jnp.float32)
    c0 = jax.random.normal(kc, (N_LAYERS, BATCH, HIDDEN), jnp.float32)

    out = recnn_clas_pallas(x, h0, c0, params)
    out = jax.block_until_ready(out)

    ref = recnn_clas_ref(x, h0, c0, params)
    assert out.shape == (BATCH, OUT_SIZE)
    assert jnp.allclose(out, ref, atol=1e-5, rtol=1e-5)
    print("KERNEL_OK")
</pallas_src>

<mosaic_0001>
module attributes {stable_mosaic.version = 11 : i64} {
  func.func @_lstm_head_kernel(%arg0: memref<64x128xf32, #tpu.memory_space<vmem>>, %arg1: memref<2x8x128xf32, #tpu.memory_space<vmem>>, %arg2: memref<2x8x128xf32, #tpu.memory_space<vmem>>, %arg3: memref<2x128x512xf32, #tpu.memory_space<vmem>>, %arg4: memref<2x128x512xf32, #tpu.memory_space<vmem>>, %arg5: memref<2x1x512xf32, #tpu.memory_space<vmem>>, %arg6: memref<128x4xf32, #tpu.memory_space<vmem>>, %arg7: memref<1x4xf32, #tpu.memory_space<vmem>>, %arg8: memref<8x4xf32, #tpu.memory_space<vmem>>, %arg9: memref<64x128xf32, #tpu.memory_space<vmem>>, %arg10: memref<64x512xf32, #tpu.memory_space<vmem>>) attributes {dimension_semantics = [], scalar_prefetch = 0 : i64, scratch_operands = 2 : i64, tpu.core_type = #tpu.core_type<tc>} {
    %c0 = arith.constant 0 : index
    %c0_0 = arith.constant 0 : index
    %0 = vector.load %arg0[%c0, %c0_0] : memref<64x128xf32, #tpu.memory_space<vmem>>, vector<64x128xf32>
    %c0_1 = arith.constant 0 : index
    %c0_2 = arith.constant 0 : index
    %c0_3 = arith.constant 0 : index
    %1 = vector.load %arg3[%c0_1, %c0_2, %c0_3] : memref<2x128x512xf32, #tpu.memory_space<vmem>>, vector<1x128x512xf32>
    %2 = vector.shape_cast %1 : vector<1x128x512xf32> to vector<128x512xf32>
    %c0_4 = arith.constant 0 : index
    %c0_5 = arith.constant 0 : index
    %c0_6 = arith.constant 0 : index
    %3 = vector.load %arg5[%c0_4, %c0_5, %c0_6] : memref<2x1x512xf32, #tpu.memory_space<vmem>>, vector<1x1x512xf32>
    %4 = vector.shape_cast %3 : vector<1x1x512xf32> to vector<1x512xf32>
    %cst = arith.constant dense<0.000000e+00> : vector<64x512xf32>
    %5 = tpu.matmul %0, %2, %cst {dimension_numbers = #tpu.dot_dimension_numbers<[1], [0], [0], [1], [0, 0, 1, 1], [], []>} : vector<64x128xf32>, vector<128x512xf32>, vector<64x512xf32> -> vector<64x512xf32>
    %6 = vector.broadcast %4 : vector<1x512xf32> to vector<64x512xf32>
    %7 = arith.addf %5, %6 : vector<64x512xf32>
    %c0_7 = arith.constant 0 : index
    %c0_8 = arith.constant 0 : index
    %8 = vector.load %arg10[%c0_7, %c0_8] : memref<64x512xf32, #tpu.memory_space<vmem>>, vector<64x512xf32>
    tpu.vector_store %arg10[%c0_7, %c0_8], %7 {strides = array<i32>} : memref<64x512xf32, #tpu.memory_space<vmem>>, vector<64x512xf32>,
    %c0_9 = arith.constant 0 : index
    %c0_10 = arith.constant 0 : index
    %c0_11 = arith.constant 0 : index
    %9 = vector.load %arg4[%c0_9, %c0_10, %c0_11] : memref<2x128x512xf32, #tpu.memory_space<vmem>>, vector<1x128x512xf32>
    %10 = vector.shape_cast %9 : vector<1x128x512xf32> to vector<128x512xf32>
    %c0_12 = arith.constant 0 : index
    %c0_13 = arith.constant 0 : index
    %c0_14 = arith.constant 0 : index
    %11 = vector.load %arg1[%c0_12, %c0_13, %c0_14] : memref<2x8x128xf32, #tpu.memory_space<vmem>>, vector<1x8x128xf32>
    %12 = vector.shape_cast %11 : vector<1x8x128xf32> to vector<8x128xf32>
    %c0_15 = arith.constant 0 : index
    %c0_16 = arith.constant 0 : index
    %c0_17 = arith.constant 0 : index
    %13 = vector.load %arg2[%c0_15, %c0_16, %c0_17] : memref<2x8x128xf32, #tpu.memory_space<vmem>>, vector<1x8x128xf32>
    %14 = vector.shape_cast %13 : vector<1x8x128xf32> to vector<8x128xf32>
    %c0_18 = arith.constant 0 : index
    %c0_19 = arith.constant 0 : index
    %15 = vector.load %arg10[%c0_18, %c0_19] : memref<64x512xf32, #tpu.memory_space<vmem>>, vector<8x512xf32>
    %cst_20 = arith.constant dense<0.000000e+00> : vector<8x512xf32>
    %16 = tpu.matmul %12, %10, %cst_20 {dimension_numbers = #tpu.dot_dimension_numbers<[1], [0], [0], [1], [0, 0, 1, 1], [], []>} : vector<8x128xf32>, vector<128x512xf32>, vector<8x512xf32> -> vector<8x512xf32>
    %17 = arith.addf %15, %16 : vector<8x512xf32>
    %18 = vector.extract_strided_slice %17 {offsets = [0, 0], sizes = [8, 128], strides = [1, 1]} : vector<8x512xf32> to vector<8x128xf32>
    %19 = arith.negf %18 : vector<8x128xf32>
    %20 = math.exp %19 : vector<8x128xf32>
    %cst_21 = arith.constant 1.000000e+00 : f32
    %21 = vector.broadcast %cst_21 : f32 to vector<8x128xf32>
    %22 = arith.addf %21, %20 : vector<8x128xf32>
    %23 = arith.divf %21, %22 : vector<8x128xf32>
    %24 = vector.extract_strided_slice %17 {offsets = [0, 128], sizes = [8, 128], strides = [1, 1]} : vector<8x512xf32> to vector<8x128xf32>
    %25 = arith.negf %24 : vector<8x128xf32>
    %26 = math.exp %25 : vector<8x128xf32>
    %cst_22 = arith.constant 1.000000e+00 : f32
    %27 = vector.broadcast %cst_22 : f32 to vector<8x128xf32>
    %28 = arith.addf %27, %26 : vector<8x128xf32>
    %29 = arith.divf %27, %28 : vector<8x128xf32>
    %30 = vector.extract_strided_slice %17 {offsets = [0, 256], sizes = [8, 128], strides = [1, 1]} : vector<8x512xf32> to vector<8x128xf32>
    %31 = math.tanh %30 : vector<8x128xf32>
    %32 = vector.extract_strided_slice %17 {offsets = [0, 384], sizes = [8, 128], strides = [1, 1]} : vector<8x512xf32> to vector<8x128xf32>
    %33 = arith.negf %32 : vector<8x128xf32>
    %34 = math.exp %33 : vector<8x128xf32>
    %cst_23 = arith.constant 1.000000e+00 : f32
    %35 = vector.broadcast %cst_23 : f32 to vector<8x128xf32>
    %36 = arith.addf %35, %34 : vector<8x128xf32>
    %37 = arith.divf %35, %36 : vector<8x128xf32>
    %38 = arith.mulf %29, %14 : vector<8x128xf32>
    %39 = arith.mulf %23, %31 : vector<8x128xf32>
    %40 = arith.addf %38, %39 : vector<8x128xf32>
    %41 = math.tanh %40 : vector<8x128xf32>
    %42 = arith.mulf %37, %41 : vector<8x128xf32>
    %c0_24 = arith.constant 0 : index
    %c0_25 = arith.constant 0 : index
    %43 = vector.load %arg9[%c0_24, %c0_25] : memref<64x128xf32, #tpu.memory_space<vmem>>, vector<8x128xf32>
    tpu.vector_store %arg9[%c0_24, %c0_25], %42 {strides = array<i32>} : memref<64x128xf32, #tpu.memory_space<vmem>>, vector<8x128xf32>,
    %c8 = arith.constant 8 : index
    %c0_26 = arith.constant 0 : index
    %44 = vector.load %arg10[%c8, %c0_26] : memref<64x512xf32, #tpu.memory_space<vmem>>, vector<8x512xf32>
    %cst_27 = arith.constant dense<0.000000e+00> : vector<8x512xf32>
    %45 = tpu.matmul %42, %10, %cst_27 {dimension_numbers = #tpu.dot_dimension_numbers<[1], [0], [0], [1], [0, 0, 1, 1], [], []>} : vector<8x128xf32>, vector<128x512xf32>, vector<8x512xf32> -> vector<8x512xf32>
    %46 = arith.addf %44, %45 : vector<8x512xf32>
    %47 = vector.extract_strided_slice %46 {offsets = [0, 0], sizes = [8, 128], strides = [1, 1]} : vector<8x512xf32> to vector<8x128xf32>
    %48 = arith.negf %47 : vector<8x128xf32>
    %49 = math.exp %48 : vector<8x128xf32>
    %cst_28 = arith.constant 1.000000e+00 : f32
    %50 = vector.broadcast %cst_28 : f32 to vector<8x128xf32>
    %51 = arith.addf %50, %49 : vector<8x128xf32>
    %52 = arith.divf %50, %51 : vector<8x128xf32>
    %53 = vector.extract_strided_slice %46 {offsets = [0, 128], sizes = [8, 128], strides = [1, 1]} : vector<8x512xf32> to vector<8x128xf32>
    %54 = arith.negf %53 : vector<8x128xf32>
    %55 = math.exp %54 : vector<8x128xf32>
    %cst_29 = arith.constant 1.000000e+00 : f32
    %56 = vector.broadcast %cst_29 : f32 to vector<8x128xf32>
    %57 = arith.addf %56, %55 : vector<8x128xf32>
    %58 = arith.divf %56, %57 : vector<8x128xf32>
    %59 = vector.extract_strided_slice %46 {offsets = [0, 256], sizes = [8, 128], strides = [1, 1]} : vector<8x512xf32> to vector<8x128xf32>
    %60 = math.tanh %59 : vector<8x128xf32>
    %61 = vector.extract_strided_slice %46 {offsets = [0, 384], sizes = [8, 128], strides = [1, 1]} : vector<8x512xf32> to vector<8x128xf32>
    %62 = arith.negf %61 : vector<8x128xf32>
    %63 = math.exp %62 : vector<8x128xf32>
    %cst_30 = arith.constant 1.000000e+00 : f32
    %64 = vector.broadcast %cst_30 : f32 to vector<8x128xf32>
    %65 = arith.addf %64, %63 : vector<8x128xf32>
    %66 = arith.divf %64, %65 : vector<8x128xf32>
    %67 = arith.mulf %58, %40 : vector<8x128xf32>
    %68 = arith.mulf %52, %60 : vector<8x128xf32>
    %69 = arith.addf %67, %68 : vector<8x128xf32>
    %70 = math.tanh %69 : vector<8x128xf32>
    %71 = arith.mulf %66, %70 : vector<8x128xf32>
    %c8_31 = arith.constant 8 : index
    %c0_32 = arith.constant 0 : index
    %72 = vector.load %arg9[%c8_31, %c0_32] : memref<64x128xf32, #tpu.memory_space<vmem>>, vector<8x128xf32>
    tpu.vector_store %arg9[%c8_31, %c0_32], %71 {strides = array<i32>} : memref<64x128xf32, #tpu.memory_space<vmem>>, vector<8x128xf32>,
    %c16 = arith.constant 16 : index
    %c0_33 = arith.constant 0 : index
    %73 = vector.load %arg10[%c16, %c0_33] : memref<64x512xf32, #tpu.memory_space<vmem>>, vector<8x512xf32>
    %cst_34 = arith.constant dense<0.000000e+00> : vector<8x512xf32>
    %74 = tpu.matmul %71, %10, %cst_34 {dimension_numbers = #tpu.dot_dimension_numbers<[1], [0], [0], [1], [0, 0, 1, 1], [], []>} : vector<8x128xf32>, vector<128x512xf32>, vector<8x512xf32> -> vector<8x512xf32>
    %75 = arith.addf %73, %74 : vector<8x512xf32>
    %76 = vector.extract_strided_slice %75 {offsets = [0, 0], sizes = [8, 128], strides = [1, 1]} : vector<8x512xf32> to vector<8x128xf32>
    %77 = arith.negf %76 : vector<8x128xf32>
    %78 = math.exp %77 : vector<8x128xf32>
    %cst_35 = arith.constant 1.000000e+00 : f32
    %79 = vector.broadcast %cst_35 : f32 to vector<8x128xf32>
    %80 = arith.addf %79, %78 : vector<8x128xf32>
    %81 = arith.divf %79, %80 : vector<8x128xf32>
    %82 = vector.extract_strided_slice %75 {offsets = [0, 128], sizes = [8, 128], strides = [1, 1]} : vector<8x512xf32> to vector<8x128xf32>
    %83 = arith.negf %82 : vector<8x128xf32>
    %84 = math.exp %83 : vector<8x128xf32>
    %cst_36 = arith.constant 1.000000e+00 : f32
    %85 = vector.broadcast %cst_36 : f32 to vector<8x128xf32>
    %86 = arith.addf %85, %84 : vector<8x128xf32>
    %87 = arith.divf %85, %86 : vector<8x128xf32>
    %88 = vector.extract_strided_slice %75 {offsets = [0, 256], sizes = [8, 128], strides = [1, 1]} : vector<8x512xf32> to vector<8x128xf32>
    %89 = math.tanh %88 : vector<8x128xf32>
    %90 = vector.extract_strided_slice %75 {offsets = [0, 384], sizes = [8, 128], strides = [1, 1]} : vector<8x512xf32> to vector<8x128xf32>
    %91 = arith.negf %90 : vector<8x128xf32>
    %92 = math.exp %91 : vector<8x128xf32>
    %cst_37 = arith.constant 1.000000e+00 : f32
    %93 = vector.broadcast %cst_37 : f32 to vector<8x128xf32>
    %94 = arith.addf %93, %92 : vector<8x128xf32>
    %95 = arith.divf %93, %94 : vector<8x128xf32>
    %96 = arith.mulf %87, %69 : vector<8x128xf32>
    %97 = arith.mulf %81, %89 : vector<8x128xf32>
    %98 = arith.addf %96, %97 : vector<8x128xf32>
    %99 = math.tanh %98 : vector<8x128xf32>
    %100 = arith.mulf %95, %99 : vector<8x128xf32>
    %c16_38 = arith.constant 16 : index
    %c0_39 = arith.constant 0 : index
    %101 = vector.load %arg9[%c16_38, %c0_39] : memref<64x128xf32, #tpu.memory_space<vmem>>, vector<8x128xf32>
    tpu.vector_store %arg9[%c16_38, %c0_39], %100 {strides = array<i32>} : memref<64x128xf32, #tpu.memory_space<vmem>>, vector<8x128xf32>,
    %c24 = arith.constant 24 : index
    %c0_40 = arith.constant 0 : index
    %102 = vector.load %arg10[%c24, %c0_40] : memref<64x512xf32, #tpu.memory_space<vmem>>, vector<8x512xf32>
    %cst_41 = arith.constant dense<0.000000e+00> : vector<8x512xf32>
    %103 = tpu.matmul %100, %10, %cst_41 {dimension_numbers = #tpu.dot_dimension_numbers<[1], [0], [0], [1], [0, 0, 1, 1], [], []>} : vector<8x128xf32>, vector<128x512xf32>, vector<8x512xf32> -> vector<8x512xf32>
    %104 = arith.addf %102, %103 : vector<8x512xf32>
    %105 = vector.extract_strided_slice %104 {offsets = [0, 0], sizes = [8, 128], strides = [1, 1]} : vector<8x512xf32> to vector<8x128xf32>
    %106 = arith.negf %105 : vector<8x128xf32>
    %107 = math.exp %106 : vector<8x128xf32>
    %cst_42 = arith.constant 1.000000e+00 : f32
    %108 = vector.broadcast %cst_42 : f32 to vector<8x128xf32>
    %109 = arith.addf %108, %107 : vector<8x128xf32>
    %110 = arith.divf %108, %109 : vector<8x128xf32>
    %111 = vector.extract_strided_slice %104 {offsets = [0, 128], sizes = [8, 128], strides = [1, 1]} : vector<8x512xf32> to vector<8x128xf32>
    %112 = arith.negf %111 : vector<8x128xf32>
    %113 = math.exp %112 : vector<8x128xf32>
    %cst_43 = arith.constant 1.000000e+00 : f32
    %114 = vector.broadcast %cst_43 : f32 to vector<8x128xf32>
    %115 = arith.addf %114, %113 : vector<8x128xf32>
    %116 = arith.divf %114, %115 : vector<8x128xf32>
    %117 = vector.extract_strided_slice %104 {offsets = [0, 256], sizes = [8, 128], strides = [1, 1]} : vector<8x512xf32> to vector<8x128xf32>
    %118 = math.tanh %117 : vector<8x128xf32>
    %119 = vector.extract_strided_slice %104 {offsets = [0, 384], sizes = [8, 128], strides = [1, 1]} : vector<8x512xf32> to vector<8x128xf32>
    %120 = arith.negf %119 : vector<8x128xf32>
    %121 = math.exp %120 : vector<8x128xf32>
    %cst_44 = arith.constant 1.000000e+00 : f32
    %122 = vector.broadcast %cst_44 : f32 to vector<8x128xf32>
    %123 = arith.addf %122, %121 : vector<8x128xf32>
    %124 = arith.divf %122, %123 : vector<8x128xf32>
    %125 = arith.mulf %116, %98 : vector<8x128xf32>
    %126 = arith.mulf %110, %118 : vector<8x128xf32>
    %127 = arith.addf %125, %126 : vector<8x128xf32>
    %128 = math.tanh %127 : vector<8x128xf32>
    %129 = arith.mulf %124, %128 : vector<8x128xf32>
    %c24_45 = arith.constant 24 : index
    %c0_46 = arith.constant 0 : index
    %130 = vector.load %arg9[%c24_45, %c0_46] : memref<64x128xf32, #tpu.memory_space<vmem>>, vector<8x128xf32>
    tpu.vector_store %arg9[%c24_45, %c0_46], %129 {strides = array<i32>} : memref<64x128xf32, #tpu.memory_space<vmem>>, vector<8x128xf32>,
    %c32 = arith.constant 32 : index
    %c0_47 = arith.constant 0 : index
    %131 = vector.load %arg10[%c32, %c0_47] : memref<64x512xf32, #tpu.memory_space<vmem>>, vector<8x512xf32>
    %cst_48 = arith.constant dense<0.000000e+00> : vector<8x512xf32>
    %132 = tpu.matmul %129, %10, %cst_48 {dimension_numbers = #tpu.dot_dimension_numbers<[1], [0], [0], [1], [0, 0, 1, 1], [], []>} : vector<8x128xf32>, vector<128x512xf32>, vector<8x512xf32> -> vector<8x512xf32>
    %133 = arith.addf %131, %132 : vector<8x512xf32>
    %134 = vector.extract_strided_slice %133 {offsets = [0, 0], sizes = [8, 128], strides = [1, 1]} : vector<8x512xf32> to vector<8x128xf32>
    %135 = arith.negf %134 : vector<8x128xf32>
    %136 = math.exp %135 : vector<8x128xf32>
    %cst_49 = arith.constant 1.000000e+00 : f32
    %137 = vector.broadcast %cst_49 : f32 to vector<8x128xf32>
    %138 = arith.addf %137, %136 : vector<8x128xf32>
    %139 = arith.divf %137, %138 : vector<8x128xf32>
    %140 = vector.extract_strided_slice %133 {offsets = [0, 128], sizes = [8, 128], strides = [1, 1]} : vector<8x512xf32> to vector<8x128xf32>
    %141 = arith.negf %140 : vector<8x128xf32>
    %142 = math.exp %141 : vector<8x128xf32>
    %cst_50 = arith.constant 1.000000e+00 : f32
    %143 = vector.broadcast %cst_50 : f32 to vector<8x128xf32>
    %144 = arith.addf %143, %142 : vector<8x128xf32>
    %145 = arith.divf %143, %144 : vector<8x128xf32>
    %146 = vector.extract_strided_slice %133 {offsets = [0, 256], sizes = [8, 128], strides = [1, 1]} : vector<8x512xf32> to vector<8x128xf32>
    %147 = math.tanh %146 : vector<8x128xf32>
    %148 = vector.extract_strided_slice %133 {offsets = [0, 384], sizes = [8, 128], strides = [1, 1]} : vector<8x512xf32> to vector<8x128xf32>
    %149 = arith.negf %148 : vector<8x128xf32>
    %150 = math.exp %149 : vector<8x128xf32>
    %cst_51 = arith.constant 1.000000e+00 : f32
    %151 = vector.broadcast %cst_51 : f32 to vector<8x128xf32>
    %152 = arith.addf %151, %150 : vector<8x128xf32>
    %153 = arith.divf %151, %152 : vector<8x128xf32>
    %154 = arith.mulf %145, %127 : vector<8x128xf32>
    %155 = arith.mulf %139, %147 : vector<8x128xf32>
    %156 = arith.addf %154, %155 : vector<8x128xf32>
    %157 = math.tanh %156 : vector<8x128xf32>
    %158 = arith.mulf %153, %157 : vector<8x128xf32>
    %c32_52 = arith.constant 32 : index
    %c0_53 = arith.constant 0 : index
    %159 = vector.load %arg9[%c32_52, %c0_53] : memref<64x128xf32, #tpu.memory_space<vmem>>, vector<8x128xf32>
    tpu.vector_store %arg9[%c32_52, %c0_53], %158 {strides = array<i32>} : memref<64x128xf32, #tpu.memory_space<vmem>>, vector<8x128xf32>,
    %c40 = arith.constant 40 : index
    %c0_54 = arith.constant 0 : index
    %160 = vector.load %arg10[%c40, %c0_54] : memref<64x512xf32, #tpu.memory_space<vmem>>, vector<8x512xf32>
    %cst_55 = arith.constant dense<0.000000e+00> : vector<8x512xf32>
    %161 = tpu.matmul %158, %10, %cst_55 {dimension_numbers = #tpu.dot_dimension_numbers<[1], [0], [0], [1], [0, 0, 1, 1], [], []>} : vector<8x128xf32>, vector<128x512xf32>, vector<8x512xf32> -> vector<8x512xf32>
    %162 = arith.addf %160, %161 : vector<8x512xf32>
    %163 = vector.extract_strided_slice %162 {offsets = [0, 0], sizes = [8, 128], strides = [1, 1]} : vector<8x512xf32> to vector<8x128xf32>
    %164 = arith.negf %163 : vector<8x128xf32>
    %165 = math.exp %164 : vector<8x128xf32>
    %cst_56 = arith.constant 1.000000e+00 : f32
    %166 = vector.broadcast %cst_56 : f32 to vector<8x128xf32>
    %167 = arith.addf %166, %165 : vector<8x128xf32>
    %168 = arith.divf %166, %167 : vector<8x128xf32>
    %169 = vector.extract_strided_slice %162 {offsets = [0, 128], sizes = [8, 128], strides = [1, 1]} : vector<8x512xf32> to vector<8x128xf32>
    %170 = arith.negf %169 : vector<8x128xf32>
    %171 = math.exp %170 : vector<8x128xf32>
    %cst_57 = arith.constant 1.000000e+00 : f32
    %172 = vector.broadcast %cst_57 : f32 to vector<8x128xf32>
    %173 = arith.addf %172, %171 : vector<8x128xf32>
    %174 = arith.divf %172, %173 : vector<8x128xf32>
    %175 = vector.extract_strided_slice %162 {offsets = [0, 256], sizes = [8, 128], strides = [1, 1]} : vector<8x512xf32> to vector<8x128xf32>
    %176 = math.tanh %175 : vector<8x128xf32>
    %177 = vector.extract_strided_slice %162 {offsets = [0, 384], sizes = [8, 128], strides = [1, 1]} : vector<8x512xf32> to vector<8x128xf32>
    %178 = arith.negf %177 : vector<8x128xf32>
    %179 = math.exp %178 : vector<8x128xf32>
    %cst_58 = arith.constant 1.000000e+00 : f32
    %180 = vector.broadcast %cst_58 : f32 to vector<8x128xf32>
    %181 = arith.addf %180, %179 : vector<8x128xf32>
    %182 = arith.divf %180, %181 : vector<8x128xf32>
    %183 = arith.mulf %174, %156 : vector<8x128xf32>
    %184 = arith.mulf %168, %176 : vector<8x128xf32>
    %185 = arith.addf %183, %184 : vector<8x128xf32>
    %186 = math.tanh %185 : vector<8x128xf32>
    %187 = arith.mulf %182, %186 : vector<8x128xf32>
    %c40_59 = arith.constant 40 : index
    %c0_60 = arith.constant 0 : index
    %188 = vector.load %arg9[%c40_59, %c0_60] : memref<64x128xf32, #tpu.memory_space<vmem>>, vector<8x128xf32>
    tpu.vector_store %arg9[%c40_59, %c0_60], %187 {strides = array<i32>} : memref<64x128xf32, #tpu.memory_space<vmem>>, vector<8x128xf32>,
    %c48 = arith.constant 48 : index
    %c0_61 = arith.constant 0 : index
    %189 = vector.load %arg10[%c48, %c0_61] : memref<64x512xf32, #tpu.memory_space<vmem>>, vector<8x512xf32>
    %cst_62 = arith.constant dense<0.000000e+00> : vector<8x512xf32>
    %190 = tpu.matmul %187, %10, %cst_62 {dimension_numbers = #tpu.dot_dimension_numbers<[1], [0], [0], [1], [0, 0, 1, 1], [], []>} : vector<8x128xf32>, vector<128x512xf32>, vector<8x512xf32> -> vector<8x512xf32>
    %191 = arith.addf %189, %190 : vector<8x512xf32>
    %192 = vector.extract_strided_slice %191 {offsets = [0, 0], sizes = [8, 128], strides = [1, 1]} : vector<8x512xf32> to vector<8x128xf32>
    %193 = arith.negf %192 : vector<8x128xf32>
    %194 = math.exp %193 : vector<8x128xf32>
    %cst_63 = arith.constant 1.000000e+00 : f32
    %195 = vector.broadcast %cst_63 : f32 to vector<8x128xf32>
    %196 = arith.addf %195, %194 : vector<8x128xf32>
    %197 = arith.divf %195, %196 : vector<8x128xf32>
    %198 = vector.extract_strided_slice %191 {offsets = [0, 128], sizes = [8, 128], strides = [1, 1]} : vector<8x512xf32> to vector<8x128xf32>
    %199 = arith.negf %198 : vector<8x128xf32>
    %200 = math.exp %199 : vector<8x128xf32>
    %cst_64 = arith.constant 1.000000e+00 : f32
    %201 = vector.broadcast %cst_64 : f32 to vector<8x128xf32>
    %202 = arith.addf %201, %200 : vector<8x128xf32>
    %203 = arith.divf %201, %202 : vector<8x128xf32>
    %204 = vector.extract_strided_slice %191 {offsets = [0, 256], sizes = [8, 128], strides = [1, 1]} : vector<8x512xf32> to vector<8x128xf32>
    %205 = math.tanh %204 : vector<8x128xf32>
    %206 = vector.extract_strided_slice %191 {offsets = [0, 384], sizes = [8, 128], strides = [1, 1]} : vector<8x512xf32> to vector<8x128xf32>
    %207 = arith.negf %206 : vector<8x128xf32>
    %208 = math.exp %207 : vector<8x128xf32>
    %cst_65 = arith.constant 1.000000e+00 : f32
    %209 = vector.broadcast %cst_65 : f32 to vector<8x128xf32>
    %210 = arith.addf %209, %208 : vector<8x128xf32>
    %211 = arith.divf %209, %210 : vector<8x128xf32>
    %212 = arith.mulf %203, %185 : vector<8x128xf32>
    %213 = arith.mulf %197, %205 : vector<8x128xf32>
    %214 = arith.addf %212, %213 : vector<8x128xf32>
    %215 = math.tanh %214 : vector<8x128xf32>
    %216 = arith.mulf %211, %215 : vector<8x128xf32>
    %c48_66 = arith.constant 48 : index
    %c0_67 = arith.constant 0 : index
    %217 = vector.load %arg9[%c48_66, %c0_67] : memref<64x128xf32, #tpu.memory_space<vmem>>, vector<8x128xf32>
    tpu.vector_store %arg9[%c48_66, %c0_67], %216 {strides = array<i32>} : memref<64x128xf32, #tpu.memory_space<vmem>>, vector<8x128xf32>,
    %c56 = arith.constant 56 : index
    %c0_68 = arith.constant 0 : index
    %218 = vector.load %arg10[%c56, %c0_68] : memref<64x512xf32, #tpu.memory_space<vmem>>, vector<8x512xf32>
    %cst_69 = arith.constant dense<0.000000e+00> : vector<8x512xf32>
    %219 = tpu.matmul %216, %10, %cst_69 {dimension_numbers = #tpu.dot_dimension_numbers<[1], [0], [0], [1], [0, 0, 1, 1], [], []>} : vector<8x128xf32>, vector<128x512xf32>, vector<8x512xf32> -> vector<8x512xf32>
    %220 = arith.addf %218, %219 : vector<8x512xf32>
    %221 = vector.extract_strided_slice %220 {offsets = [0, 0], sizes = [8, 128], strides = [1, 1]} : vector<8x512xf32> to vector<8x128xf32>
    %222 = arith.negf %221 : vector<8x128xf32>
    %223 = math.exp %222 : vector<8x128xf32>
    %cst_70 = arith.constant 1.000000e+00 : f32
    %224 = vector.broadcast %cst_70 : f32 to vector<8x128xf32>
    %225 = arith.addf %224, %223 : vector<8x128xf32>
    %226 = arith.divf %224, %225 : vector<8x128xf32>
    %227 = vector.extract_strided_slice %220 {offsets = [0, 128], sizes = [8, 128], strides = [1, 1]} : vector<8x512xf32> to vector<8x128xf32>
    %228 = arith.negf %227 : vector<8x128xf32>
    %229 = math.exp %228 : vector<8x128xf32>
    %cst_71 = arith.constant 1.000000e+00 : f32
    %230 = vector.broadcast %cst_71 : f32 to vector<8x128xf32>
    %231 = arith.addf %230, %229 : vector<8x128xf32>
    %232 = arith.divf %230, %231 : vector<8x128xf32>
    %233 = vector.extract_strided_slice %220 {offsets = [0, 256], sizes = [8, 128], strides = [1, 1]} : vector<8x512xf32> to vector<8x128xf32>
    %234 = math.tanh %233 : vector<8x128xf32>
    %235 = vector.extract_strided_slice %220 {offsets = [0, 384], sizes = [8, 128], strides = [1, 1]} : vector<8x512xf32> to vector<8x128xf32>
    %236 = arith.negf %235 : vector<8x128xf32>
    %237 = math.exp %236 : vector<8x128xf32>
    %cst_72 = arith.constant 1.000000e+00 : f32
    %238 = vector.broadcast %cst_72 : f32 to vector<8x128xf32>
    %239 = arith.addf %238, %237 : vector<8x128xf32>
    %240 = arith.divf %238, %239 : vector<8x128xf32>
    %241 = arith.mulf %232, %214 : vector<8x128xf32>
    %242 = arith.mulf %226, %234 : vector<8x128xf32>
    %243 = arith.addf %241, %242 : vector<8x128xf32>
    %244 = math.tanh %243 : vector<8x128xf32>
    %245 = arith.mulf %240, %244 : vector<8x128xf32>
    %c56_73 = arith.constant 56 : index
    %c0_74 = arith.constant 0 : index
    %246 = vector.load %arg9[%c56_73, %c0_74] : memref<64x128xf32, #tpu.memory_space<vmem>>, vector<8x128xf32>
    tpu.vector_store %arg9[%c56_73, %c0_74], %245 {strides = array<i32>} : memref<64x128xf32, #tpu.memory_space<vmem>>, vector<8x128xf32>,
    %c0_75 = arith.constant 0 : index
    %c0_76 = arith.constant 0 : index
    %247 = vector.load %arg9[%c0_75, %c0_76] : memref<64x128xf32, #tpu.memory_space<vmem>>, vector<64x128xf32>
    %c1 = arith.constant 1 : index
    %c0_77 = arith.constant 0 : index
    %c0_78 = arith.constant 0 : index
    %248 = vector.load %arg3[%c1, %c0_77, %c0_78] : memref<2x128x512xf32, #tpu.memory_space<vmem>>, vector<1x128x512xf32>
    %249 = vector.shape_cast %248 : vector<1x128x512xf32> to vector<128x512xf32>
    %c1_79 = arith.constant 1 : index
    %c0_80 = arith.constant 0 : index
    %c0_81 = arith.constant 0 : index
    %250 = vector.load %arg5[%c1_79, %c0_80, %c0_81] : memref<2x1x512xf32, #tpu.memory_space<vmem>>, vector<1x1x512xf32>
    %251 = vector.shape_cast %250 : vector<1x1x512xf32> to vector<1x512xf32>
    %cst_82 = arith.constant dense<0.000000e+00> : vector<64x512xf32>
    %252 = tpu.matmul %247, %249, %cst_82 {dimension_numbers = #tpu.dot_dimension_numbers<[1], [0], [0], [1], [0, 0, 1, 1], [], []>} : vector<64x128xf32>, vector<128x512xf32>, vector<64x512xf32> -> vector<64x512xf32>
    %253 = vector.broadcast %251 : vector<1x512xf32> to vector<64x512xf32>
    %254 = arith.addf %252, %253 : vector<64x512xf32>
    %c0_83 = arith.constant 0 : index
    %c0_84 = arith.constant 0 : index
    %255 = vector.load %arg10[%c0_83, %c0_84] : memref<64x512xf32, #tpu.memory_space<vmem>>, vector<64x512xf32>
    tpu.vector_store %arg10[%c0_83, %c0_84], %254 {strides = array<i32>} : memref<64x512xf32, #tpu.memory_space<vmem>>, vector<64x512xf32>,
    %c1_85 = arith.constant 1 : index
    %c0_86 = arith.constant 0 : index
    %c0_87 = arith.constant 0 : index
    %256 = vector.load %arg4[%c1_85, %c0_86, %c0_87] : memref<2x128x512xf32, #tpu.memory_space<vmem>>, vector<1x128x512xf32>
    %257 = vector.shape_cast %256 : vector<1x128x512xf32> to vector<128x512xf32>
    %c1_88 = arith.constant 1 : index
    %c0_89 = arith.constant 0 : index
    %c0_90 = arith.constant 0 : index
    %258 = vector.load %arg1[%c1_88, %c0_89, %c0_90] : memref<2x8x128xf32, #tpu.memory_space<vmem>>, vector<1x8x128xf32>
    %259 = vector.shape_cast %258 : vector<1x8x128xf32> to vector<8x128xf32>
    %c1_91 = arith.constant 1 : index
    %c0_92 = arith.constant 0 : index
    %c0_93 = arith.constant 0 : index
    %260 = vector.load %arg2[%c1_91, %c0_92, %c0_93] : memref<2x8x128xf32, #tpu.memory_space<vmem>>, vector<1x8x128xf32>
    %261 = vector.shape_cast %260 : vector<1x8x128xf32> to vector<8x128xf32>
    %c0_94 = arith.constant 0 : index
    %c0_95 = arith.constant 0 : index
    %262 = vector.load %arg10[%c0_94, %c0_95] : memref<64x512xf32, #tpu.memory_space<vmem>>, vector<8x512xf32>
    %cst_96 = arith.constant dense<0.000000e+00> : vector<8x512xf32>
    %263 = tpu.matmul %259, %257, %cst_96 {dimension_numbers = #tpu.dot_dimension_numbers<[1], [0], [0], [1], [0, 0, 1, 1], [], []>} : vector<8x128xf32>, vector<128x512xf32>, vector<8x512xf32> -> vector<8x512xf32>
    %264 = arith.addf %262, %263 : vector<8x512xf32>
    %265 = vector.extract_strided_slice %264 {offsets = [0, 0], sizes = [8, 128], strides = [1, 1]} : vector<8x512xf32> to vector<8x128xf32>
    %266 = arith.negf %265 : vector<8x128xf32>
    %267 = math.exp %266 : vector<8x128xf32>
    %cst_97 = arith.constant 1.000000e+00 : f32
    %268 = vector.broadcast %cst_97 : f32 to vector<8x128xf32>
    %269 = arith.addf %268, %267 : vector<8x128xf32>
    %270 = arith.divf %268, %269 : vector<8x128xf32>
    %271 = vector.extract_strided_slice %264 {offsets = [0, 128], sizes = [8, 128], strides = [1, 1]} : vector<8x512xf32> to vector<8x128xf32>
    %272 = arith.negf %271 : vector<8x128xf32>
    %273 = math.exp %272 : vector<8x128xf32>
    %cst_98 = arith.constant 1.000000e+00 : f32
    %274 = vector.broadcast %cst_98 : f32 to vector<8x128xf32>
    %275 = arith.addf %274, %273 : vector<8x128xf32>
    %276 = arith.divf %274, %275 : vector<8x128xf32>
    %277 = vector.extract_strided_slice %264 {offsets = [0, 256], sizes = [8, 128], strides = [1, 1]} : vector<8x512xf32> to vector<8x128xf32>
    %278 = math.tanh %277 : vector<8x128xf32>
    %279 = vector.extract_strided_slice %264 {offsets = [0, 384], sizes = [8, 128], strides = [1, 1]} : vector<8x512xf32> to vector<8x128xf32>
    %280 = arith.negf %279 : vector<8x128xf32>
    %281 = math.exp %280 : vector<8x128xf32>
    %cst_99 = arith.constant 1.000000e+00 : f32
    %282 = vector.broadcast %cst_99 : f32 to vector<8x128xf32>
    %283 = arith.addf %282, %281 : vector<8x128xf32>
    %284 = arith.divf %282, %283 : vector<8x128xf32>
    %285 = arith.mulf %276, %261 : vector<8x128xf32>
    %286 = arith.mulf %270, %278 : vector<8x128xf32>
    %287 = arith.addf %285, %286 : vector<8x128xf32>
    %288 = math.tanh %287 : vector<8x128xf32>
    %289 = arith.mulf %284, %288 : vector<8x128xf32>
    %c8_100 = arith.constant 8 : index
    %c0_101 = arith.constant 0 : index
    %290 = vector.load %arg10[%c8_100, %c0_101] : memref<64x512xf32, #tpu.memory_space<vmem>>, vector<8x512xf32>
    %cst_102 = arith.constant dense<0.000000e+00> : vector<8x512xf32>
    %291 = tpu.matmul %289, %257, %cst_102 {dimension_numbers = #tpu.dot_dimension_numbers<[1], [0], [0], [1], [0, 0, 1, 1], [], []>} : vector<8x128xf32>, vector<128x512xf32>, vector<8x512xf32> -> vector<8x512xf32>
    %292 = arith.addf %290, %291 : vector<8x512xf32>
    %293 = vector.extract_strided_slice %292 {offsets = [0, 0], sizes = [8, 128], strides = [1, 1]} : vector<8x512xf32> to vector<8x128xf32>
    %294 = arith.negf %293 : vector<8x128xf32>
    %295 = math.exp %294 : vector<8x128xf32>
    %cst_103 = arith.constant 1.000000e+00 : f32
    %296 = vector.broadcast %cst_103 : f32 to vector<8x128xf32>
    %297 = arith.addf %296, %295 : vector<8x128xf32>
    %298 = arith.divf %296, %297 : vector<8x128xf32>
    %299 = vector.extract_strided_slice %292 {offsets = [0, 128], sizes = [8, 128], strides = [1, 1]} : vector<8x512xf32> to vector<8x128xf32>
    %300 = arith.negf %299 : vector<8x128xf32>
    %301 = math.exp %300 : vector<8x128xf32>
    %cst_104 = arith.constant 1.000000e+00 : f32
    %302 = vector.broadcast %cst_104 : f32 to vector<8x128xf32>
    %303 = arith.addf %302, %301 : vector<8x128xf32>
    %304 = arith.divf %302, %303 : vector<8x128xf32>
    %305 = vector.extract_strided_slice %292 {offsets = [0, 256], sizes = [8, 128], strides = [1, 1]} : vector<8x512xf32> to vector<8x128xf32>
    %306 = math.tanh %305 : vector<8x128xf32>
    %307 = vector.extract_strided_slice %292 {offsets = [0, 384], sizes = [8, 128], strides = [1, 1]} : vector<8x512xf32> to vector<8x128xf32>
    %308 = arith.negf %307 : vector<8x128xf32>
    %309 = math.exp %308 : vector<8x128xf32>
    %cst_105 = arith.constant 1.000000e+00 : f32
    %310 = vector.broadcast %cst_105 : f32 to vector<8x128xf32>
    %311 = arith.addf %310, %309 : vector<8x128xf32>
    %312 = arith.divf %310, %311 : vector<8x128xf32>
    %313 = arith.mulf %304, %287 : vector<8x128xf32>
    %314 = arith.mulf %298, %306 : vector<8x128xf32>
    %315 = arith.addf %313, %314 : vector<8x128xf32>
    %316 = math.tanh %315 : vector<8x128xf32>
    %317 = arith.mulf %312, %316 : vector<8x128xf32>
    %c16_106 = arith.constant 16 : index
    %c0_107 = arith.constant 0 : index
    %318 = vector.load %arg10[%c16_106, %c0_107] : memref<64x512xf32, #tpu.memory_space<vmem>>, vector<8x512xf32>
    %cst_108 = arith.constant dense<0.000000e+00> : vector<8x512xf32>
    %319 = tpu.matmul %317, %257, %cst_108 {dimension_numbers = #tpu.dot_dimension_numbers<[1], [0], [0], [1], [0, 0, 1, 1], [], []>} : vector<8x128xf32>, vector<128x512xf32>, vector<8x512xf32> -> vector<8x512xf32>
    %320 = arith.addf %318, %319 : vector<8x512xf32>
    %321 = vector.extract_strided_slice %320 {offsets = [0, 0], sizes = [8, 128], strides = [1, 1]} : vector<8x512xf32> to vector<8x128xf32>
    %322 = arith.negf %321 : vector<8x128xf32>
    %323 = math.exp %322 : vector<8x128xf32>
    %cst_109 = arith.constant 1.000000e+00 : f32
    %324 = vector.broadcast %cst_109 : f32 to vector<8x128xf32>
    %325 = arith.addf %324, %323 : vector<8x128xf32>
    %326 = arith.divf %324, %325 : vector<8x128xf32>
    %327 = vector.extract_strided_slice %320 {offsets = [0, 128], sizes = [8, 128], strides = [1, 1]} : vector<8x512xf32> to vector<8x128xf32>
    %328 = arith.negf %327 : vector<8x128xf32>
    %329 = math.exp %328 : vector<8x128xf32>
    %cst_110 = arith.constant 1.000000e+00 : f32
    %330 = vector.broadcast %cst_110 : f32 to vector<8x128xf32>
    %331 = arith.addf %330, %329 : vector<8x128xf32>
    %332 = arith.divf %330, %331 : vector<8x128xf32>
    %333 = vector.extract_strided_slice %320 {offsets = [0, 256], sizes = [8, 128], strides = [1, 1]} : vector<8x512xf32> to vector<8x128xf32>
    %334 = math.tanh %333 : vector<8x128xf32>
    %335 = vector.extract_strided_slice %320 {offsets = [0, 384], sizes = [8, 128], strides = [1, 1]} : vector<8x512xf32> to vector<8x128xf32>
    %336 = arith.negf %335 : vector<8x128xf32>
    %337 = math.exp %336 : vector<8x128xf32>
    %cst_111 = arith.constant 1.000000e+00 : f32
    %338 = vector.broadcast %cst_111 : f32 to vector<8x128xf32>
    %339 = arith.addf %338, %337 : vector<8x128xf32>
    %340 = arith.divf %338, %339 : vector<8x128xf32>
    %341 = arith.mulf %332, %315 : vector<8x128xf32>
    %342 = arith.mulf %326, %334 : vector<8x128xf32>
    %343 = arith.addf %341, %342 : vector<8x128xf32>
    %344 = math.tanh %343 : vector<8x128xf32>
    %345 = arith.mulf %340, %344 : vector<8x128xf32>
    %c24_112 = arith.constant 24 : index
    %c0_113 = arith.constant 0 : index
    %346 = vector.load %arg10[%c24_112, %c0_113] : memref<64x512xf32, #tpu.memory_space<vmem>>, vector<8x512xf32>
    %cst_114 = arith.constant dense<0.000000e+00> : vector<8x512xf32>
    %347 = tpu.matmul %345, %257, %cst_114 {dimension_numbers = #tpu.dot_dimension_numbers<[1], [0], [0], [1], [0, 0, 1, 1], [], []>} : vector<8x128xf32>, vector<128x512xf32>, vector<8x512xf32> -> vector<8x512xf32>
    %348 = arith.addf %346, %347 : vector<8x512xf32>
    %349 = vector.extract_strided_slice %348 {offsets = [0, 0], sizes = [8, 128], strides = [1, 1]} : vector<8x512xf32> to vector<8x128xf32>
    %350 = arith.negf %349 : vector<8x128xf32>
    %351 = math.exp %350 : vector<8x128xf32>
    %cst_115 = arith.constant 1.000000e+00 : f32
    %352 = vector.broadcast %cst_115 : f32 to vector<8x128xf32>
    %353 = arith.addf %352, %351 : vector<8x128xf32>
    %354 = arith.divf %352, %353 : vector<8x128xf32>
    %355 = vector.extract_strided_slice %348 {offsets = [0, 128], sizes = [8, 128], strides = [1, 1]} : vector<8x512xf32> to vector<8x128xf32>
    %356 = arith.negf %355 : vector<8x128xf32>
    %357 = math.exp %356 : vector<8x128xf32>
    %cst_116 = arith.constant 1.000000e+00 : f32
    %358 = vector.broadcast %cst_116 : f32 to vector<8x128xf32>
    %359 = arith.addf %358, %357 : vector<8x128xf32>
    %360 = arith.divf %358, %359 : vector<8x128xf32>
    %361 = vector.extract_strided_slice %348 {offsets = [0, 256], sizes = [8, 128], strides = [1, 1]} : vector<8x512xf32> to vector<8x128xf32>
    %362 = math.tanh %361 : vector<8x128xf32>
    %363 = vector.extract_strided_slice %348 {offsets = [0, 384], sizes = [8, 128], strides = [1, 1]} : vector<8x512xf32> to vector<8x128xf32>
    %364 = arith.negf %363 : vector<8x128xf32>
    %365 = math.exp %364 : vector<8x128xf32>
    %cst_117 = arith.constant 1.000000e+00 : f32
    %366 = vector.broadcast %cst_117 : f32 to vector<8x128xf32>
    %367 = arith.addf %366, %365 : vector<8x128xf32>
    %368 = arith.divf %366, %367 : vector<8x128xf32>
    %369 = arith.mulf %360, %343 : vector<8x128xf32>
    %370 = arith.mulf %354, %362 : vector<8x128xf32>
    %371 = arith.addf %369, %370 : vector<8x128xf32>
    %372 = math.tanh %371 : vector<8x128xf32>
    %373 = arith.mulf %368, %372 : vector<8x128xf32>
    %c32_118 = arith.constant 32 : index
    %c0_119 = arith.constant 0 : index
    %374 = vector.load %arg10[%c32_118, %c0_119] : memref<64x512xf32, #tpu.memory_space<vmem>>, vector<8x512xf32>
    %cst_120 = arith.constant dense<0.000000e+00> : vector<8x512xf32>
    %375 = tpu.matmul %373, %257, %cst_120 {dimension_numbers = #tpu.dot_dimension_numbers<[1], [0], [0], [1], [0, 0, 1, 1], [], []>} : vector<8x128xf32>, vector<128x512xf32>, vector<8x512xf32> -> vector<8x512xf32>
    %376 = arith.addf %374, %375 : vector<8x512xf32>
    %377 = vector.extract_strided_slice %376 {offsets = [0, 0], sizes = [8, 128], strides = [1, 1]} : vector<8x512xf32> to vector<8x128xf32>
    %378 = arith.negf %377 : vector<8x128xf32>
    %379 = math.exp %378 : vector<8x128xf32>
    %cst_121 = arith.constant 1.000000e+00 : f32
    %380 = vector.broadcast %cst_121 : f32 to vector<8x128xf32>
    %381 = arith.addf %380, %379 : vector<8x128xf32>
    %382 = arith.divf %380, %381 : vector<8x128xf32>
    %383 = vector.extract_strided_slice %376 {offsets = [0, 128], sizes = [8, 128], strides = [1, 1]} : vector<8x512xf32> to vector<8x128xf32>
    %384 = arith.negf %383 : vector<8x128xf32>
    %385 = math.exp %384 : vector<8x128xf32>
    %cst_122 = arith.constant 1.000000e+00 : f32
    %386 = vector.broadcast %cst_122 : f32 to vector<8x128xf32>
    %387 = arith.addf %386, %385 : vector<8x128xf32>
    %388 = arith.divf %386, %387 : vector<8x128xf32>
    %389 = vector.extract_strided_slice %376 {offsets = [0, 256], sizes = [8, 128], strides = [1, 1]} : vector<8x512xf32> to vector<8x128xf32>
    %390 = math.tanh %389 : vector<8x128xf32>
    %391 = vector.extract_strided_slice %376 {offsets = [0, 384], sizes = [8, 128], strides = [1, 1]} : vector<8x512xf32> to vector<8x128xf32>
    %392 = arith.negf %391 : vector<8x128xf32>
    %393 = math.exp %392 : vector<8x128xf32>
    %cst_123 = arith.constant 1.000000e+00 : f32
    %394 = vector.broadcast %cst_123 : f32 to vector<8x128xf32>
    %395 = arith.addf %394, %393 : vector<8x128xf32>
    %396 = arith.divf %394, %395 : vector<8x128xf32>
    %397 = arith.mulf %388, %371 : vector<8x128xf32>
    %398 = arith.mulf %382, %390 : vector<8x128xf32>
    %399 = arith.addf %397, %398 : vector<8x128xf32>
    %400 = math.tanh %399 : vector<8x128xf32>
    %401 = arith.mulf %396, %400 : vector<8x128xf32>
    %c40_124 = arith.constant 40 : index
    %c0_125 = arith.constant 0 : index
    %402 = vector.load %arg10[%c40_124, %c0_125] : memref<64x512xf32, #tpu.memory_space<vmem>>, vector<8x512xf32>
    %cst_126 = arith.constant dense<0.000000e+00> : vector<8x512xf32>
    %403 = tpu.matmul %401, %257, %cst_126 {dimension_numbers = #tpu.dot_dimension_numbers<[1], [0], [0], [1], [0, 0, 1, 1], [], []>} : vector<8x128xf32>, vector<128x512xf32>, vector<8x512xf32> -> vector<8x512xf32>
    %404 = arith.addf %402, %403 : vector<8x512xf32>
    %405 = vector.extract_strided_slice %404 {offsets = [0, 0], sizes = [8, 128], strides = [1, 1]} : vector<8x512xf32> to vector<8x128xf32>
    %406 = arith.negf %405 : vector<8x128xf32>
    %407 = math.exp %406 : vector<8x128xf32>
    %cst_127 = arith.constant 1.000000e+00 : f32
    %408 = vector.broadcast %cst_127 : f32 to vector<8x128xf32>
    %409 = arith.addf %408, %407 : vector<8x128xf32>
    %410 = arith.divf %408, %409 : vector<8x128xf32>
    %411 = vector.extract_strided_slice %404 {offsets = [0, 128], sizes = [8, 128], strides = [1, 1]} : vector<8x512xf32> to vector<8x128xf32>
    %412 = arith.negf %411 : vector<8x128xf32>
    %413 = math.exp %412 : vector<8x128xf32>
    %cst_128 = arith.constant 1.000000e+00 : f32
    %414 = vector.broadcast %cst_128 : f32 to vector<8x128xf32>
    %415 = arith.addf %414, %413 : vector<8x128xf32>
    %416 = arith.divf %414, %415 : vector<8x128xf32>
    %417 = vector.extract_strided_slice %404 {offsets = [0, 256], sizes = [8, 128], strides = [1, 1]} : vector<8x512xf32> to vector<8x128xf32>
    %418 = math.tanh %417 : vector<8x128xf32>
    %419 = vector.extract_strided_slice %404 {offsets = [0, 384], sizes = [8, 128], strides = [1, 1]} : vector<8x512xf32> to vector<8x128xf32>
    %420 = arith.negf %419 : vector<8x128xf32>
    %421 = math.exp %420 : vector<8x128xf32>
    %cst_129 = arith.constant 1.000000e+00 : f32
    %422 = vector.broadcast %cst_129 : f32 to vector<8x128xf32>
    %423 = arith.addf %422, %421 : vector<8x128xf32>
    %424 = arith.divf %422, %423 : vector<8x128xf32>
    %425 = arith.mulf %416, %399 : vector<8x128xf32>
    %426 = arith.mulf %410, %418 : vector<8x128xf32>
    %427 = arith.addf %425, %426 : vector<8x128xf32>
    %428 = math.tanh %427 : vector<8x128xf32>
    %429 = arith.mulf %424, %428 : vector<8x128xf32>
    %c48_130 = arith.constant 48 : index
    %c0_131 = arith.constant 0 : index
    %430 = vector.load %arg10[%c48_130, %c0_131] : memref<64x512xf32, #tpu.memory_space<vmem>>, vector<8x512xf32>
    %cst_132 = arith.constant dense<0.000000e+00> : vector<8x512xf32>
    %431 = tpu.matmul %429, %257, %cst_132 {dimension_numbers = #tpu.dot_dimension_numbers<[1], [0], [0], [1], [0, 0, 1, 1], [], []>} : vector<8x128xf32>, vector<128x512xf32>, vector<8x512xf32> -> vector<8x512xf32>
    %432 = arith.addf %430, %431 : vector<8x512xf32>
    %433 = vector.extract_strided_slice %432 {offsets = [0, 0], sizes = [8, 128], strides = [1, 1]} : vector<8x512xf32> to vector<8x128xf32>
    %434 = arith.negf %433 : vector<8x128xf32>
    %435 = math.exp %434 : vector<8x128xf32>
    %cst_133 = arith.constant 1.000000e+00 : f32
    %436 = vector.broadcast %cst_133 : f32 to vector<8x128xf32>
    %437 = arith.addf %436, %435 : vector<8x128xf32>
    %438 = arith.divf %436, %437 : vector<8x128xf32>
    %439 = vector.extract_strided_slice %432 {offsets = [0, 128], sizes = [8, 128], strides = [1, 1]} : vector<8x512xf32> to vector<8x128xf32>
    %440 = arith.negf %439 : vector<8x128xf32>
    %441 = math.exp %440 : vector<8x128xf32>
    %cst_134 = arith.constant 1.000000e+00 : f32
    %442 = vector.broadcast %cst_134 : f32 to vector<8x128xf32>
    %443 = arith.addf %442, %441 : vector<8x128xf32>
    %444 = arith.divf %442, %443 : vector<8x128xf32>
    %445 = vector.extract_strided_slice %432 {offsets = [0, 256], sizes = [8, 128], strides = [1, 1]} : vector<8x512xf32> to vector<8x128xf32>
    %446 = math.tanh %445 : vector<8x128xf32>
    %447 = vector.extract_strided_slice %432 {offsets = [0, 384], sizes = [8, 128], strides = [1, 1]} : vector<8x512xf32> to vector<8x128xf32>
    %448 = arith.negf %447 : vector<8x128xf32>
    %449 = math.exp %448 : vector<8x128xf32>
    %cst_135 = arith.constant 1.000000e+00 : f32
    %450 = vector.broadcast %cst_135 : f32 to vector<8x128xf32>
    %451 = arith.addf %450, %449 : vector<8x128xf32>
    %452 = arith.divf %450, %451 : vector<8x128xf32>
    %453 = arith.mulf %444, %427 : vector<8x128xf32>
    %454 = arith.mulf %438, %446 : vector<8x128xf32>
    %455 = arith.addf %453, %454 : vector<8x128xf32>
    %456 = math.tanh %455 : vector<8x128xf32>
    %457 = arith.mulf %452, %456 : vector<8x128xf32>
    %c56_136 = arith.constant 56 : index
    %c0_137 = arith.constant 0 : index
    %458 = vector.load %arg10[%c56_136, %c0_137] : memref<64x512xf32, #tpu.memory_space<vmem>>, vector<8x512xf32>
    %cst_138 = arith.constant dense<0.000000e+00> : vector<8x512xf32>
    %459 = tpu.matmul %457, %257, %cst_138 {dimension_numbers = #tpu.dot_dimension_numbers<[1], [0], [0], [1], [0, 0, 1, 1], [], []>} : vector<8x128xf32>, vector<128x512xf32>, vector<8x512xf32> -> vector<8x512xf32>
    %460 = arith.addf %458, %459 : vector<8x512xf32>
    %461 = vector.extract_strided_slice %460 {offsets = [0, 0], sizes = [8, 128], strides = [1, 1]} : vector<8x512xf32> to vector<8x128xf32>
    %462 = arith.negf %461 : vector<8x128xf32>
    %463 = math.exp %462 : vector<8x128xf32>
    %cst_139 = arith.constant 1.000000e+00 : f32
    %464 = vector.broadcast %cst_139 : f32 to vector<8x128xf32>
    %465 = arith.addf %464, %463 : vector<8x128xf32>
    %466 = arith.divf %464, %465 : vector<8x128xf32>
    %467 = vector.extract_strided_slice %460 {offsets = [0, 128], sizes = [8, 128], strides = [1, 1]} : vector<8x512xf32> to vector<8x128xf32>
    %468 = arith.negf %467 : vector<8x128xf32>
    %469 = math.exp %468 : vector<8x128xf32>
    %cst_140 = arith.constant 1.000000e+00 : f32
    %470 = vector.broadcast %cst_140 : f32 to vector<8x128xf32>
    %471 = arith.addf %470, %469 : vector<8x128xf32>
    %472 = arith.divf %470, %471 : vector<8x128xf32>
    %473 = vector.extract_strided_slice %460 {offsets = [0, 256], sizes = [8, 128], strides = [1, 1]} : vector<8x512xf32> to vector<8x128xf32>
    %474 = math.tanh %473 : vector<8x128xf32>
    %475 = vector.extract_strided_slice %460 {offsets = [0, 384], sizes = [8, 128], strides = [1, 1]} : vector<8x512xf32> to vector<8x128xf32>
    %476 = arith.negf %475 : vector<8x128xf32>
    %477 = math.exp %476 : vector<8x128xf32>
    %cst_141 = arith.constant 1.000000e+00 : f32
    %478 = vector.broadcast %cst_141 : f32 to vector<8x128xf32>
    %479 = arith.addf %478, %477 : vector<8x128xf32>
    %480 = arith.divf %478, %479 : vector<8x128xf32>
    %481 = arith.mulf %472, %455 : vector<8x128xf32>
    %482 = arith.mulf %466, %474 : vector<8x128xf32>
    %483 = arith.addf %481, %482 : vector<8x128xf32>
    %484 = math.tanh %483 : vector<8x128xf32>
    %485 = arith.mulf %480, %484 : vector<8x128xf32>
    %c0_142 = arith.constant 0 : index
    %c0_143 = arith.constant 0 : index
    %486 = vector.load %arg6[%c0_142, %c0_143] : memref<128x4xf32, #tpu.memory_space<vmem>>, vector<128x4xf32>
    %cst_144 = arith.constant dense<0.000000e+00> : vector<8x4xf32>
    %487 = tpu.matmul %485, %486, %cst_144 {dimension_numbers = #tpu.dot_dimension_numbers<[1], [0], [0], [1], [0, 0, 1, 1], [], []>} : vector<8x128xf32>, vector<128x4xf32>, vector<8x4xf32> -> vector<8x4xf32>
    %c0_145 = arith.constant 0 : index
    %c0_146 = arith.constant 0 : index
    %488 = vector.load %arg7[%c0_145, %c0_146] : memref<1x4xf32, #tpu.memory_space<vmem>>, vector<1x4xf32>
    %489 = vector.broadcast %488 : vector<1x4xf32> to vector<8x4xf32>
    %490 = arith.addf %487, %489 : vector<8x4xf32>
    %cst_147 = arith.constant dense<0xFF800000> : vector<8xf32>
    %491 = vector.multi_reduction <maximumf>, %490, %cst_147 [1] : vector<8x4xf32> to vector<8xf32>
    %492 = vector.shape_cast %491 : vector<8xf32> to vector<8x1xf32>
    %493 = vector.broadcast %492 : vector<8x1xf32> to vector<8x4xf32>
    %494 = arith.subf %490, %493 : vector<8x4xf32>
    %495 = math.exp %494 : vector<8x4xf32>
    %cst_148 = arith.constant dense<0.000000e+00> : vector<8xf32>
    %496 = vector.multi_reduction <add>, %495, %cst_148 [1] : vector<8x4xf32> to vector<8xf32>
    %497 = vector.shape_cast %496 : vector<8xf32> to vector<8x1xf32>
    %498 = math.log %497 : vector<8x1xf32>
    %499 = vector.broadcast %498 : vector<8x1xf32> to vector<8x4xf32>
    %500 = arith.subf %494, %499 : vector<8x4xf32>
    %c0_149 = arith.constant 0 : index
    %c0_150 = arith.constant 0 : index
    %501 = vector.load %arg8[%c0_149, %c0_150] : memref<8x4xf32, #tpu.memory_space<vmem>>, vector<8x4xf32>
    tpu.vector_store %arg8[%c0_149, %c0_150], %500 {strides = array<i32>} : memref<8x4xf32, #tpu.memory_space<vmem>>, vector<8x4xf32>,
    return
  }
}

</mosaic_0001>

<llo_original>
// kernel: tpu_custom_call.1
$region0: #{tpu_custom_call.1}
  #allocation0 [shape = 'u32[]', space=smem, size = 0x4, offset = 0x4, fixed_abs, tag = 'smem constant byte address 0x4 - core index']
  #allocation1 [shape = 'u32[72,128]{1,0:T(1,128)}', space=vmem, size = 0x9000, scoped, tag = 'internal scratch']
  #allocation2 [shape = 'f32[64,128]{1,0:T(8,128)}', space=vmem, size = 0x8000, scoped, tag = 'scratch operand']
  #allocation3 [shape = 'f32[64,512]{1,0:T(8,128)}', space=vmem, size = 0x20000, scoped, tag = 'scratch operand']
  %s0 = inlined_call_operand.vmem [shape: f32[64,128], index: 0, kind: input, shape index: {}]
  %s1 = inlined_call_operand.vmem [shape: f32[2,8,128], index: 1, kind: input, shape index: {}]
  %s2 = inlined_call_operand.vmem [shape: f32[2,8,128], index: 2, kind: input, shape index: {}]
  %s3 = inlined_call_operand.hbm [shape: f32[2,128,512], index: 3, kind: input, shape index: {}]
  %s4 = inlined_call_operand.hbm [shape: f32[2,128,512], index: 4, kind: input, shape index: {}]
  %s5 = inlined_call_operand.vmem [shape: f32[2,1,512], index: 5, kind: input, shape index: {}]
  %s6 = inlined_call_operand.vmem [shape: f32[128,4], index: 6, kind: input, shape index: {}]
  %s7 = inlined_call_operand.vmem [shape: f32[1,4], index: 7, kind: input, shape index: {}]
  %s8 = inlined_call_operand.vmem [shape: f32[8,4], index: 8, kind: output, shape index: {}]
  %s9 = sld [smem:[#allocation0]]
  $region50: #{tpu_custom_call.1} parent=0
    _
  %s11 = ssub.s32 1, %s9
  %s12 = scalar_select 0, %s11, %s9
  $region1: #{tpu_custom_call.1} parent=0
    #allocation4 [shape = 'u8[524288]{0}', space=vmem, size = 0x80000, scoped, tag = 'input window, operand 3, single buffered']
    #allocation5 [shape = 's32[1]{0}', space=sflag, size = 0x4, scoped, tag = 'scoped memory for tpu_custom_call.1']
    #allocation6 [shape = 'u8[524288]{0}', space=vmem, size = 0x80000, scoped, tag = 'input window, operand 4, single buffered']
    #allocation7 [shape = 's32[1]{0}', space=sflag, size = 0x4, scoped, tag = 'scoped memory for tpu_custom_call.1']
    %13 = vsyncpa [#allocation5], 0
    %14 = vsyncpa [#allocation7], 0
    // Predicated region
    $region2: #{tpu_custom_call.1} parent=1 // pred_check
      _
    $region3: #{tpu_custom_call.1} parent=1 // pred_check_branch
      %16 = sbr.rel (0) target = $region5
    $region4: #{tpu_custom_call.1} parent=1 // pred_region
      _
    $region5: #{tpu_custom_call.1} parent=1 // pred_fallthru
      _
    // Predicated region
    $region6: #{tpu_custom_call.1} parent=1 // pred_check
      _
    $region7: #{tpu_custom_call.1} parent=1 // pred_check_branch
      %18 = sbr.rel (0) target = $region9
    $region8: #{tpu_custom_call.1} parent=1 // pred_region
      _
    $region9: #{tpu_custom_call.1} parent=1 // pred_fallthru
      _
    // Predicated region
    $region10: #{tpu_custom_call.1} parent=1 // pred_check
      _
    $region11: #{tpu_custom_call.1} parent=1 // pred_check_branch
      %20 = sbr.rel (0) target = $region13
    $region12: #{tpu_custom_call.1} parent=1 // pred_region
      _
    $region13: #{tpu_custom_call.1} parent=1 // pred_fallthru
      _
    // Predicated region
    $region14: #{tpu_custom_call.1} parent=1 // pred_check
      _
    $region15: #{tpu_custom_call.1} parent=1 // pred_check_branch
      %22 = sbr.rel (0) target = $region17
    $region16: #{tpu_custom_call.1} parent=1 // pred_region
      %24 = vsyncadd [#allocation5], 0
      %s25 = sshll.u32 %s3, 4
      %s26 = int_to_ptr.hbm [resolvable:$true] %s25
      %s27 = sshll.u32 [#allocation4], 4
      %s28 = int_to_ptr.vmem [resolvable:$true] %s27
      %33 = dma.hbm_to_vmem [thread:$0]  %s26, 16384, %s28, [#allocation5], 512, 512, 32
    $region17: #{tpu_custom_call.1} parent=1 // pred_fallthru
      _
    // Predicated region
    $region18: #{tpu_custom_call.1} parent=1 // pred_check
      _
    $region19: #{tpu_custom_call.1} parent=1 // pred_check_branch
      %35 = sbr.rel (0) target = $region21
    $region20: #{tpu_custom_call.1} parent=1 // pred_region
      %37 = vsyncadd [#allocation7], 0
      %s38 = sshll.u32 %s4, 4
      %s39 = int_to_ptr.hbm [resolvable:$true] %s38
      %s40 = sshll.u32 [#allocation6], 4
      %s41 = int_to_ptr.vmem [resolvable:$true] %s40
      %46 = dma.hbm_to_vmem [thread:$0]  %s39, 16384, %s41, [#allocation7], 512, 512, 32
    $region21: #{tpu_custom_call.1} parent=1 // pred_fallthru
      _
    // Predicated region
    $region22: #{tpu_custom_call.1} parent=1 // pred_check
      _
    $region23: #{tpu_custom_call.1} parent=1 // pred_check_branch
      %48 = sbr.rel (0) target = $region25
    $region24: #{tpu_custom_call.1} parent=1 // pred_region
      _
    $region25: #{tpu_custom_call.1} parent=1 // pred_fallthru
      _
    // Predicated region
    $region26: #{tpu_custom_call.1} parent=1 // pred_check
      _
    $region27: #{tpu_custom_call.1} parent=1 // pred_check_branch
      %50 = sbr.rel (0) target = $region29
    $region28: #{tpu_custom_call.1} parent=1 // pred_region
      _
    $region29: #{tpu_custom_call.1} parent=1 // pred_fallthru
      _
    // Predicated region
    $region30: #{tpu_custom_call.1} parent=1 // pred_check
      _
    $region31: #{tpu_custom_call.1} parent=1 // pred_check_branch
      %52 = sbr.rel (0) target = $region33
    $region32: #{tpu_custom_call.1} parent=1 // pred_region
      _
    $region33: #{tpu_custom_call.1} parent=1 // pred_fallthru
      _
    // Predicated region
    $region34: #{tpu_custom_call.1} parent=1 // pred_check
      _
    $region35: #{tpu_custom_call.1} parent=1 // pred_check_branch
      %54 = sbr.rel (0) target = $region37
    $region36: #{tpu_custom_call.1} parent=1 // pred_region
      %56 = dma.done [#allocation5], 16384
    $region37: #{tpu_custom_call.1} parent=1 // pred_fallthru
      _
    // Predicated region
    $region38: #{tpu_custom_call.1} parent=1 // pred_check
      _
    $region39: #{tpu_custom_call.1} parent=1 // pred_check_branch
      %58 = sbr.rel (0) target = $region41
    $region40: #{tpu_custom_call.1} parent=1 // pred_region
      %60 = dma.done [#allocation7], 16384
    $region41: #{tpu_custom_call.1} parent=1 // pred_fallthru
      _
    %v61 = vld [vmem:[%s0] sm:$0xff]
    %v62 = vld [vmem:[%s0 + $0x8] sm:$0xff]
    %v63 = vld [vmem:[%s0 + $0x10] sm:$0xff]
    %v64 = vld [vmem:[%s0 + $0x18] sm:$0xff]
    %v65 = vld [vmem:[%s0 + $0x20] sm:$0xff]
    %v66 = vld [vmem:[%s0 + $0x28] sm:$0xff]
    %v67 = vld [vmem:[%s0 + $0x30] sm:$0xff]
    %v68 = vld [vmem:[%s0 + $0x38] sm:$0xff]
    %v69 = vld [vmem:[#allocation4] sm:$0xff]
    %v70 = vld [vmem:[#allocation4 + $0x8] sm:$0xff]
    %v71 = vld [vmem:[#allocation4 + $0x10] sm:$0xff]
    %v72 = vld [vmem:[#allocation4 + $0x18] sm:$0xff]
    %v73 = vld [vmem:[#allocation4 + $0x20] sm:$0xff]
    %v74 = vld [vmem:[#allocation4 + $0x28] sm:$0xff]
    %v75 = vld [vmem:[#allocation4 + $0x30] sm:$0xff]
    %v76 = vld [vmem:[#allocation4 + $0x38] sm:$0xff]
    %v77 = vld [vmem:[#allocation4 + $0x40] sm:$0xff]
    %v78 = vld [vmem:[#allocation4 + $0x48] sm:$0xff]
    %v79 = vld [vmem:[#allocation4 + $0x50] sm:$0xff]
    %v80 = vld [vmem:[#allocation4 + $0x58] sm:$0xff]
    %v81 = vld [vmem:[#allocation4 + $0x60] sm:$0xff]
    %v82 = vld [vmem:[#allocation4 + $0x68] sm:$0xff]
    %v83 = vld [vmem:[#allocation4 + $0x70] sm:$0xff]
    %v84 = vld [vmem:[#allocation4 + $0x78] sm:$0xff]
    %v85 = vld [vmem:[#allocation4 + $0x80] sm:$0xff]
    %v86 = vld [vmem:[#allocation4 + $0x88] sm:$0xff]
    %v87 = vld [vmem:[#allocation4 + $0x90] sm:$0xff]
    %v88 = vld [vmem:[#allocation4 + $0x98] sm:$0xff]
    %v89 = vld [vmem:[#allocation4 + $0xa0] sm:$0xff]
    %v90 = vld [vmem:[#allocation4 + $0xa8] sm:$0xff]
    %v91 = vld [vmem:[#allocation4 + $0xb0] sm:$0xff]
    %v92 = vld [vmem:[#allocation4 + $0xb8] sm:$0xff]
    %v93 = vld [vmem:[#allocation4 + $0xc0] sm:$0xff]
    %v94 = vld [vmem:[#allocation4 + $0xc8] sm:$0xff]
    %v95 = vld [vmem:[#allocation4 + $0xd0] sm:$0xff]
    %v96 = vld [vmem:[#allocation4 + $0xd8] sm:$0xff]
    %v97 = vld [vmem:[#allocation4 + $0xe0] sm:$0xff]
    %v98 = vld [vmem:[#allocation4 + $0xe8] sm:$0xff]
    %v99 = vld [vmem:[#allocation4 + $0xf0] sm:$0xff]
    %v100 = vld [vmem:[#allocation4 + $0xf8] sm:$0xff]
    %v101 = vld [vmem:[#allocation4 + $0x100] sm:$0xff]
    %v102 = vld [vmem:[#allocation4 + $0x108] sm:$0xff]
    %v103 = vld [vmem:[#allocation4 + $0x110] sm:$0xff]
    %v104 = vld [vmem:[#allocation4 + $0x118] sm:$0xff]
    %v105 = vld [vmem:[#allocation4 + $0x120] sm:$0xff]
    %v106 = vld [vmem:[#allocation4 + $0x128] sm:$0xff]
    %v107 = vld [vmem:[#allocation4 + $0x130] sm:$0xff]
    %v108 = vld [vmem:[#allocation4 + $0x138] sm:$0xff]
    %v109 = vld [vmem:[#allocation4 + $0x140] sm:$0xff]
    %v110 = vld [vmem:[#allocation4 + $0x148] sm:$0xff]
    %v111 = vld [vmem:[#allocation4 + $0x150] sm:$0xff]
    %v112 = vld [vmem:[#allocation4 + $0x158] sm:$0xff]
    %v113 = vld [vmem:[#allocation4 + $0x160] sm:$0xff]
    %v114 = vld [vmem:[#allocation4 + $0x168] sm:$0xff]
    %v115 = vld [vmem:[#allocation4 + $0x170] sm:$0xff]
    %v116 = vld [vmem:[#allocation4 + $0x178] sm:$0xff]
    %v117 = vld [vmem:[#allocation4 + $0x180] sm:$0xff]
    %v118 = vld [vmem:[#allocation4 + $0x188] sm:$0xff]
    %v119 = vld [vmem:[#allocation4 + $0x190] sm:$0xff]
    %v120 = vld [vmem:[#allocation4 + $0x198] sm:$0xff]
    %v121 = vld [vmem:[#allocation4 + $0x1a0] sm:$0xff]
    %v122 = vld [vmem:[#allocation4 + $0x1a8] sm:$0xff]
    %v123 = vld [vmem:[#allocation4 + $0x1b0] sm:$0xff]
    %v124 = vld [vmem:[#allocation4 + $0x1b8] sm:$0xff]
    %v125 = vld [vmem:[#allocation4 + $0x1c0] sm:$0xff]
    %v126 = vld [vmem:[#allocation4 + $0x1c8] sm:$0xff]
    %v127 = vld [vmem:[#allocation4 + $0x1d0] sm:$0xff]
    %v128 = vld [vmem:[#allocation4 + $0x1d8] sm:$0xff]
    %v129 = vld [vmem:[#allocation4 + $0x1e0] sm:$0xff]
    %v130 = vld [vmem:[#allocation4 + $0x1e8] sm:$0xff]
    %v131 = vld [vmem:[#allocation4 + $0x1f0] sm:$0xff]
    %v132 = vld [vmem:[#allocation4 + $0x1f8] sm:$0xff]
    %v133 = vld [vmem:[%s5] sm:$0xf]
    %v135 = vperm.slane %v133, 0
    %v136 = vperm.slane %v133, 1
    %v137 = vperm.slane %v133, 2
    %v138 = vperm.slane %v133, 3
    %143 = vmatpush.msra.mxu0 %v129
    %144 = vmatpush.msra.mxu0 %v125
    %145 = vmatpush.msra.mxu0 %v121
    %146 = vmatpush.msra.mxu0 %v117
    %147 = vmatpush.msra.mxu0 %v113
    %148 = vmatpush.msra.mxu0 %v109
    %149 = vmatpush.msra.mxu0 %v105
    %150 = vmatpush.msra.mxu0 %v101
    %151 = vmatpush.msra.mxu0 %v97
    %152 = vmatpush.msra.mxu0 %v93
    %153 = vmatpush.msra.mxu0 %v89
    %154 = vmatpush.msra.mxu0 %v85
    %155 = vmatpush.msra.mxu0 %v81
    %156 = vmatpush.msra.mxu0 %v77
    %157 = vmatpush.msra.mxu0 %v73
    %158 = vmatpush.msra.mxu0 %v69
    %159 = vmatmul.f32.gmra.mxu0 %v61
    %v160 = vpop.f32.mrf.mxu0
    %v161 = vadd.f32 %v135, %v160
    %162 = vmatmul.f32.gmra.mxu0 %v62
    %v163 = vpop.f32.mrf.mxu0
    %v164 = vadd.f32 %v135, %v163
    %165 = vmatmul.f32.gmra.mxu0 %v63
    %v166 = vpop.f32.mrf.mxu0
    %v167 = vadd.f32 %v135, %v166
    %168 = vmatmul.f32.gmra.mxu0 %v64
    %v169 = vpop.f32.mrf.mxu0
    %v170 = vadd.f32 %v135, %v169
    %171 = vmatmul.f32.gmra.mxu0 %v65
    %v172 = vpop.f32.mrf.mxu0
    %v173 = vadd.f32 %v135, %v172
    %174 = vmatmul.f32.gmra.mxu0 %v66
    %v175 = vpop.f32.mrf.mxu0
    %v176 = vadd.f32 %v135, %v175
    %177 = vmatmul.f32.gmra.mxu0 %v67
    %v178 = vpop.f32.mrf.mxu0
    %v179 = vadd.f32 %v135, %v178
    %180 = vmatmul.f32.gmra.mxu0 %v68
    %v181 = vpop.f32.mrf.mxu0
    %v182 = vadd.f32 %v135, %v181
    %183 = vdwg.mxu0
    %184 = vmatpush.msra.mxu0 %v130
    %185 = vmatpush.msra.mxu0 %v126
    %186 = vmatpush.msra.mxu0 %v122
    %187 = vmatpush.msra.mxu0 %v118
    %188 = vmatpush.msra.mxu0 %v114
    %189 = vmatpush.msra.mxu0 %v110
    %190 = vmatpush.msra.mxu0 %v106
    %191 = vmatpush.msra.mxu0 %v102
    %192 = vmatpush.msra.mxu0 %v98
    %193 = vmatpush.msra.mxu0 %v94
    %194 = vmatpush.msra.mxu0 %v90
    %195 = vmatpush.msra.mxu0 %v86
    %196 = vmatpush.msra.mxu0 %v82
    %197 = vmatpush.msra.mxu0 %v78
    %198 = vmatpush.msra.mxu0 %v74
    %199 = vmatpush.msra.mxu0 %v70
    %200 = vmatmul.f32.gmra.mxu0 %v61
    %v201 = vpop.f32.mrf.mxu0
    %v202 = vadd.f32 %v136, %v201
    %203 = vmatmul.f32.gmra.mxu0 %v62
    %v204 = vpop.f32.mrf.mxu0
    %v205 = vadd.f32 %v136, %v204
    %206 = vmatmul.f32.gmra.mxu0 %v63
    %v207 = vpop.f32.mrf.mxu0
    %v208 = vadd.f32 %v136, %v207
    %209 = vmatmul.f32.gmra.mxu0 %v64
    %v210 = vpop.f32.mrf.mxu0
    %v211 = vadd.f32 %v136, %v210
    %212 = vmatmul.f32.gmra.mxu0 %v65
    %v213 = vpop.f32.mrf.mxu0
    %v214 = vadd.f32 %v136, %v213
    %215 = vmatmul.f32.gmra.mxu0 %v66
    %v216 = vpop.f32.mrf.mxu0
    %v217 = vadd.f32 %v136, %v216
    %218 = vmatmul.f32.gmra.mxu0 %v67
    %v219 = vpop.f32.mrf.mxu0
    %v220 = vadd.f32 %v136, %v219
    %221 = vmatmul.f32.gmra.mxu0 %v68
    %v222 = vpop.f32.mrf.mxu0
    %v223 = vadd.f32 %v136, %v222
    %224 = vdwg.mxu0
    %225 = vmatpush.msra.mxu0 %v131
    %226 = vmatpush.msra.mxu0 %v127
    %227 = vmatpush.msra.mxu0 %v123
    %228 = vmatpush.msra.mxu0 %v119
    %229 = vmatpush.msra.mxu0 %v115
    %230 = vmatpush.msra.mxu0 %v111
    %231 = vmatpush.msra.mxu0 %v107
    %232 = vmatpush.msra.mxu0 %v103
    %233 = vmatpush.msra.mxu0 %v99
    %234 = vmatpush.msra.mxu0 %v95
    %235 = vmatpush.msra.mxu0 %v91
    %236 = vmatpush.msra.mxu0 %v87
    %237 = vmatpush.msra.mxu0 %v83
    %238 = vmatpush.msra.mxu0 %v79
    %239 = vmatpush.msra.mxu0 %v75
    %240 = vmatpush.msra.mxu0 %v71
    %241 = vmatmul.f32.gmra.mxu0 %v61
    %v242 = vpop.f32.mrf.mxu0
    %v243 = vadd.f32 %v137, %v242
    %244 = vmatmul.f32.gmra.mxu0 %v62
    %v245 = vpop.f32.mrf.mxu0
    %v246 = vadd.f32 %v137, %v245
    %247 = vmatmul.f32.gmra.mxu0 %v63
    %v248 = vpop.f32.mrf.mxu0
    %v249 = vadd.f32 %v137, %v248
    %250 = vmatmul.f32.gmra.mxu0 %v64
    %v251 = vpop.f32.mrf.mxu0
    %v252 = vadd.f32 %v137, %v251
    %253 = vmatmul.f32.gmra.mxu0 %v65
    %v254 = vpop.f32.mrf.mxu0
    %v255 = vadd.f32 %v137, %v254
    %256 = vmatmul.f32.gmra.mxu0 %v66
    %v257 = vpop.f32.mrf.mxu0
    %v258 = vadd.f32 %v137, %v257
    %259 = vmatmul.f32.gmra.mxu0 %v67
    %v260 = vpop.f32.mrf.mxu0
    %v261 = vadd.f32 %v137, %v260
    %262 = vmatmul.f32.gmra.mxu0 %v68
    %v263 = vpop.f32.mrf.mxu0
    %v264 = vadd.f32 %v137, %v263
    %265 = vdwg.mxu0
    %266 = vmatpush.msra.mxu0 %v132
    %267 = vmatpush.msra.mxu0 %v128
    %268 = vmatpush.msra.mxu0 %v124
    %269 = vmatpush.msra.mxu0 %v120
    %270 = vmatpush.msra.mxu0 %v116
    %271 = vmatpush.msra.mxu0 %v112
    %272 = vmatpush.msra.mxu0 %v108
    %273 = vmatpush.msra.mxu0 %v104
    %274 = vmatpush.msra.mxu0 %v100
    %275 = vmatpush.msra.mxu0 %v96
    %276 = vmatpush.msra.mxu0 %v92
    %277 = vmatpush.msra.mxu0 %v88
    %278 = vmatpush.msra.mxu0 %v84
    %279 = vmatpush.msra.mxu0 %v80
    %280 = vmatpush.msra.mxu0 %v76
    %281 = vmatpush.msra.mxu0 %v72
    %282 = vmatmul.f32.gmra.mxu0 %v61
    %v283 = vpop.f32.mrf.mxu0
    %v284 = vadd.f32 %v138, %v283
    %285 = vmatmul.f32.gmra.mxu0 %v62
    %v286 = vpop.f32.mrf.mxu0
    %v287 = vadd.f32 %v138, %v286
    %288 = vmatmul.f32.gmra.mxu0 %v63
    %v289 = vpop.f32.mrf.mxu0
    %v290 = vadd.f32 %v138, %v289
    %291 = vmatmul.f32.gmra.mxu0 %v64
    %v292 = vpop.f32.mrf.mxu0
    %v293 = vadd.f32 %v138, %v292
    %294 = vmatmul.f32.gmra.mxu0 %v65
    %v295 = vpop.f32.mrf.mxu0
    %v296 = vadd.f32 %v138, %v295
    %297 = vmatmul.f32.gmra.mxu0 %v66
    %v298 = vpop.f32.mrf.mxu0
    %v299 = vadd.f32 %v138, %v298
    %300 = vmatmul.f32.gmra.mxu0 %v67
    %v301 = vpop.f32.mrf.mxu0
    %v302 = vadd.f32 %v138, %v301
    %303 = vmatmul.f32.gmra.mxu0 %v68
    %v304 = vpop.f32.mrf.mxu0
    %v305 = vadd.f32 %v138, %v304
    %306 = vdwg.mxu0
    %307 = vst [vmem:[#allocation3] sm:$0xff] %v161
    %308 = vst [vmem:[#allocation3 + $0x8] sm:$0xff] %v202
    %309 = vst [vmem:[#allocation3 + $0x10] sm:$0xff] %v243
    %310 = vst [vmem:[#allocation3 + $0x18] sm:$0xff] %v284
    %311 = vst [vmem:[#allocation3 + $0x20] sm:$0xff] %v164
    %312 = vst [vmem:[#allocation3 + $0x28] sm:$0xff] %v205
    %313 = vst [vmem:[#allocation3 + $0x30] sm:$0xff] %v246
    %314 = vst [vmem:[#allocation3 + $0x38] sm:$0xff] %v287
    %315 = vst [vmem:[#allocation3 + $0x40] sm:$0xff] %v167
    %316 = vst [vmem:[#allocation3 + $0x48] sm:$0xff] %v208
    %317 = vst [vmem:[#allocation3 + $0x50] sm:$0xff] %v249
    %318 = vst [vmem:[#allocation3 + $0x58] sm:$0xff] %v290
    %319 = vst [vmem:[#allocation3 + $0x60] sm:$0xff] %v170
    %320 = vst [vmem:[#allocation3 + $0x68] sm:$0xff] %v211
    %321 = vst [vmem:[#allocation3 + $0x70] sm:$0xff] %v252
    %322 = vst [vmem:[#allocation3 + $0x78] sm:$0xff] %v293
    %323 = vst [vmem:[#allocation3 + $0x80] sm:$0xff] %v173
    %324 = vst [vmem:[#allocation3 + $0x88] sm:$0xff] %v214
    %325 = vst [vmem:[#allocation3 + $0x90] sm:$0xff] %v255
    %326 = vst [vmem:[#allocation3 + $0x98] sm:$0xff] %v296
    %327 = vst [vmem:[#allocation3 + $0xa0] sm:$0xff] %v176
    %328 = vst [vmem:[#allocation3 + $0xa8] sm:$0xff] %v217
    %329 = vst [vmem:[#allocation3 + $0xb0] sm:$0xff] %v258
    %330 = vst [vmem:[#allocation3 + $0xb8] sm:$0xff] %v299
    %331 = vst [vmem:[#allocation3 + $0xc0] sm:$0xff] %v179
    %332 = vst [vmem:[#allocation3 + $0xc8] sm:$0xff] %v220
    %333 = vst [vmem:[#allocation3 + $0xd0] sm:$0xff] %v261
    %334 = vst [vmem:[#allocation3 + $0xd8] sm:$0xff] %v302
    %335 = vst [vmem:[#allocation3 + $0xe0] sm:$0xff] %v182
    %336 = vst [vmem:[#allocation3 + $0xe8] sm:$0xff] %v223
    %337 = vst [vmem:[#allocation3 + $0xf0] sm:$0xff] %v264
    %338 = vst [vmem:[#allocation3 + $0xf8] sm:$0xff] %v305
    %v339 = vld [vmem:[#allocation6] sm:$0xff]
    %v340 = vld [vmem:[#allocation6 + $0x8] sm:$0xff]
    %v341 = vld [vmem:[#allocation6 + $0x10] sm:$0xff]
    %v342 = vld [vmem:[#allocation6 + $0x18] sm:$0xff]
    %v343 = vld [vmem:[#allocation6 + $0x20] sm:$0xff]
    %v344 = vld [vmem:[#allocation6 + $0x28] sm:$0xff]
    %v345 = vld [vmem:[#allocation6 + $0x30] sm:$0xff]
    %v346 = vld [vmem:[#allocation6 + $0x38] sm:$0xff]
    %v347 = vld [vmem:[#allocation6 + $0x40] sm:$0xff]
    %v348 = vld [vmem:[#allocation6 + $0x48] sm:$0xff]
    %v349 = vld [vmem:[#allocation6 + $0x50] sm:$0xff]
    %v350 = vld [vmem:[#allocation6 + $0x58] sm:$0xff]
    %v351 = vld [vmem:[#allocation6 + $0x60] sm:$0xff]
    %v352 = vld [vmem:[#allocation6 + $0x68] sm:$0xff]
    %v353 = vld [vmem:[#allocation6 + $0x70] sm:$0xff]
    %v354 = vld [vmem:[#allocation6 + $0x78] sm:$0xff]
    %v355 = vld [vmem:[#allocation6 + $0x80] sm:$0xff]
    %v356 = vld [vmem:[#allocation6 + $0x88] sm:$0xff]
    %v357 = vld [vmem:[#allocation6 + $0x90] sm:$0xff]
    %v358 = vld [vmem:[#allocation6 + $0x98] sm:$0xff]
    %v359 = vld [vmem:[#allocation6 + $0xa0] sm:$0xff]
    %v360 = vld [vmem:[#allocation6 + $0xa8] sm:$0xff]
    %v361 = vld [vmem:[#allocation6 + $0xb0] sm:$0xff]
    %v362 = vld [vmem:[#allocation6 + $0xb8] sm:$0xff]
    %v363 = vld [vmem:[#allocation6 + $0xc0] sm:$0xff]
    %v364 = vld [vmem:[#allocation6 + $0xc8] sm:$0xff]
    %v365 = vld [vmem:[#allocation6 + $0xd0] sm:$0xff]
    %v366 = vld [vmem:[#allocation6 + $0xd8] sm:$0xff]
    %v367 = vld [vmem:[#allocation6 + $0xe0] sm:$0xff]
    %v368 = vld [vmem:[#allocation6 + $0xe8] sm:$0xff]
    %v369 = vld [vmem:[#allocation6 + $0xf0] sm:$0xff]
    %v370 = vld [vmem:[#allocation6 + $0xf8] sm:$0xff]
    %v371 = vld [vmem:[#allocation6 + $0x100] sm:$0xff]
    %v372 = vld [vmem:[#allocation6 + $0x108] sm:$0xff]
    %v373 = vld [vmem:[#allocation6 + $0x110] sm:$0xff]
    %v374 = vld [vmem:[#allocation6 + $0x118] sm:$0xff]
    %v375 = vld [vmem:[#allocation6 + $0x120] sm:$0xff]
    %v376 = vld [vmem:[#allocation6 + $0x128] sm:$0xff]
    %v377 = vld [vmem:[#allocation6 + $0x130] sm:$0xff]
    %v378 = vld [vmem:[#allocation6 + $0x138] sm:$0xff]
    %v379 = vld [vmem:[#allocation6 + $0x140] sm:$0xff]
    %v380 = vld [vmem:[#allocation6 + $0x148] sm:$0xff]
    %v381 = vld [vmem:[#allocation6 + $0x150] sm:$0xff]
    %v382 = vld [vmem:[#allocation6 + $0x158] sm:$0xff]
    %v383 = vld [vmem:[#allocation6 + $0x160] sm:$0xff]
    %v384 = vld [vmem:[#allocation6 + $0x168] sm:$0xff]
    %v385 = vld [vmem:[#allocation6 + $0x170] sm:$0xff]
    %v386 = vld [vmem:[#allocation6 + $0x178] sm:$0xff]
    %v387 = vld [vmem:[#allocation6 + $0x180] sm:$0xff]
    %v388 = vld [vmem:[#allocation6 + $0x188] sm:$0xff]
    %v389 = vld [vmem:[#allocation6 + $0x190] sm:$0xff]
    %v390 = vld [vmem:[#allocation6 + $0x198] sm:$0xff]
    %v391 = vld [vmem:[#allocation6 + $0x1a0] sm:$0xff]
    %v392 = vld [vmem:[#allocation6 + $0x1a8] sm:$0xff]
    %v393 = vld [vmem:[#allocation6 + $0x1b0] sm:$0xff]
    %v394 = vld [vmem:[#allocation6 + $0x1b8] sm:$0xff]
    %v395 = vld [vmem:[#allocation6 + $0x1c0] sm:$0xff]
    %v396 = vld [vmem:[#allocation6 + $0x1c8] sm:$0xff]
    %v397 = vld [vmem:[#allocation6 + $0x1d0] sm:$0xff]
    %v398 = vld [vmem:[#allocation6 + $0x1d8] sm:$0xff]
    %v399 = vld [vmem:[#allocation6 + $0x1e0] sm:$0xff]
    %v400 = vld [vmem:[#allocation6 + $0x1e8] sm:$0xff]
    %v401 = vld [vmem:[#allocation6 + $0x1f0] sm:$0xff]
    %v402 = vld [vmem:[#allocation6 + $0x1f8] sm:$0xff]
    %v403 = vld [vmem:[%s1] sm:$0xff]
    %v404 = vld [vmem:[%s2] sm:$0xff]
    %v405 = vld [vmem:[#allocation3] sm:$0xff]
    %v406 = vld [vmem:[#allocation3 + $0x8] sm:$0xff]
    %v407 = vld [vmem:[#allocation3 + $0x10] sm:$0xff]
    %v408 = vld [vmem:[#allocation3 + $0x18] sm:$0xff]
    %409 = vmatpush.msra.mxu0 %v399
    %410 = vmatpush.msra.mxu0 %v395
    %411 = vmatpush.msra.mxu0 %v391
    %412 = vmatpush.msra.mxu0 %v387
    %413 = vmatpush.msra.mxu0 %v383
    %414 = vmatpush.msra.mxu0 %v379
    %415 = vmatpush.msra.mxu0 %v375
    %416 = vmatpush.msra.mxu0 %v371
    %417 = vmatpush.msra.mxu0 %v367
    %418 = vmatpush.msra.mxu0 %v363
    %419 = vmatpush.msra.mxu0 %v359
    %420 = vmatpush.msra.mxu0 %v355
    %421 = vmatpush.msra.mxu0 %v351
    %422 = vmatpush.msra.mxu0 %v347
    %423 = vmatpush.msra.mxu0 %v343
    %424 = vmatpush.msra.mxu0 %v339
    %425 = vmatmul.f32.gmra.mxu0 %v403
    %v426 = vpop.f32.mrf.mxu0
    %v427 = vadd.f32 0.0, %v426
    %428 = vdwg.mxu0
    %429 = vmatpush.msra.mxu0 %v400
    %430 = vmatpush.msra.mxu0 %v396
    %431 = vmatpush.msra.mxu0 %v392
    %432 = vmatpush.msra.mxu0 %v388
    %433 = vmatpush.msra.mxu0 %v384
    %434 = vmatpush.msra.mxu0 %v380
    %435 = vmatpush.msra.mxu0 %v376
    %436 = vmatpush.msra.mxu0 %v372
    %437 = vmatpush.msra.mxu0 %v368
    %438 = vmatpush.msra.mxu0 %v364
    %439 = vmatpush.msra.mxu0 %v360
    %440 = vmatpush.msra.mxu0 %v356
    %441 = vmatpush.msra.mxu0 %v352
    %442 = vmatpush.msra.mxu0 %v348
    %443 = vmatpush.msra.mxu0 %v344
    %444 = vmatpush.msra.mxu0 %v340
    %445 = vmatmul.f32.gmra.mxu0 %v403
    %v446 = vpop.f32.mrf.mxu0
    %v447 = vadd.f32 0.0, %v446
    %448 = vdwg.mxu0
    %449 = vmatpush.msra.mxu0 %v401
    %450 = vmatpush.msra.mxu0 %v397
    %451 = vmatpush.msra.mxu0 %v393
    %452 = vmatpush.msra.mxu0 %v389
    %453 = vmatpush.msra.mxu0 %v385
    %454 = vmatpush.msra.mxu0 %v381
    %455 = vmatpush.msra.mxu0 %v377
    %456 = vmatpush.msra.mxu0 %v373
    %457 = vmatpush.msra.mxu0 %v369
    %458 = vmatpush.msra.mxu0 %v365
    %459 = vmatpush.msra.mxu0 %v361
    %460 = vmatpush.msra.mxu0 %v357
    %461 = vmatpush.msra.mxu0 %v353
    %462 = vmatpush.msra.mxu0 %v349
    %463 = vmatpush.msra.mxu0 %v345
    %464 = vmatpush.msra.mxu0 %v341
    %465 = vmatmul.f32.gmra.mxu0 %v403
    %v466 = vpop.f32.mrf.mxu0
    %v467 = vadd.f32 0.0, %v466
    %468 = vdwg.mxu0
    %469 = vmatpush.msra.mxu0 %v402
    %470 = vmatpush.msra.mxu0 %v398
    %471 = vmatpush.msra.mxu0 %v394
    %472 = vmatpush.msra.mxu0 %v390
    %473 = vmatpush.msra.mxu0 %v386
    %474 = vmatpush.msra.mxu0 %v382
    %475 = vmatpush.msra.mxu0 %v378
    %476 = vmatpush.msra.mxu0 %v374
    %477 = vmatpush.msra.mxu0 %v370
    %478 = vmatpush.msra.mxu0 %v366
    %479 = vmatpush.msra.mxu0 %v362
    %480 = vmatpush.msra.mxu0 %v358
    %481 = vmatpush.msra.mxu0 %v354
    %482 = vmatpush.msra.mxu0 %v350
    %483 = vmatpush.msra.mxu0 %v346
    %484 = vmatpush.msra.mxu0 %v342
    %485 = vmatmul.f32.gmra.mxu0 %v403
    %v486 = vpop.f32.mrf.mxu0
    %v487 = vadd.f32 0.0, %v486
    %488 = vdwg.mxu0
    %v489 = vadd.f32 %v405, %v427
    %v490 = vadd.f32 %v406, %v447
    %v491 = vadd.f32 %v407, %v467
    %v492 = vadd.f32 %v408, %v487
    %v493 = vxor.u32 %v489, 2147483648
    %v494 = vmul.f32 %v493, 1.442695
    %v495 = vpow.pop %v494
    %v496 = vadd.f32 %v495, 1.0
    %v497 = vrcp.pop %v496
    %v498 = vmul.f32 %v496, %v497
    %v499 = vsub.f32 1.0, %v498
    %v500 = vmul.f32 %v497, %v499
    %v501 = vadd.f32 %v497, %v500
    %vm502 = vweird.f32 %v496
    %vm503 = vweird.f32 %v497
    %vm504 = vmor %vm502, %vm503
    %v505 = vsel %vm504, %v497, %v501
    %v506 = vand.u32 2147483647, %v496
    %vm507 = vcmp.eq.f32.partialorder %v506, 8.507059e+37
    %v508 = vand.u32 %v496, 2147483648
    %v509 = vor.u32 1.1754944e-38, %v508
    %v510 = vsel %vm507, %v509, %v505
    %v511 = vmul.f32 1.0, %v510
    %v512 = vxor.u32 %v490, 2147483648
    %v513 = vmul.f32 %v512, 1.442695
    %v514 = vpow.pop %v513
    %v515 = vadd.f32 %v514, 1.0
    %v516 = vrcp.pop %v515
    %v517 = vmul.f32 %v515, %v516
    %v518 = vsub.f32 1.0, %v517
    %v519 = vmul.f32 %v516, %v518
    %v520 = vadd.f32 %v516, %v519
    %vm521 = vweird.f32 %v515
    %vm522 = vweird.f32 %v516
    %vm523 = vmor %vm521, %vm522
    %v524 = vsel %vm523, %v516, %v520
    %v525 = vand.u32 2147483647, %v515
    %vm526 = vcmp.eq.f32.partialorder %v525, 8.507059e+37
    %v527 = vand.u32 %v515, 2147483648
    %v528 = vor.u32 1.1754944e-38, %v527
    %v529 = vsel %vm526, %v528, %v524
    %v530 = vmul.f32 1.0, %v529
    %v531 = vtanh.pop %v491
    %v532 = vxor.u32 %v492, 2147483648
    %v533 = vmul.f32 %v532, 1.442695
    %v534 = vpow.pop %v533
    %v535 = vadd.f32 %v534, 1.0
    %v536 = vrcp.pop %v535
    %v537 = vmul.f32 %v535, %v536
    %v538 = vsub.f32 1.0, %v537
    %v539 = vmul.f32 %v536, %v538
    %v540 = vadd.f32 %v536, %v539
    %vm541 = vweird.f32 %v535
    %vm542 = vweird.f32 %v536
    %vm543 = vmor %vm541, %vm542
    %v544 = vsel %vm543, %v536, %v540
    %v545 = vand.u32 2147483647, %v535
    %vm546 = vcmp.eq.f32.partialorder %v545, 8.507059e+37
    %v547 = vand.u32 %v535, 2147483648
    %v548 = vor.u32 1.1754944e-38, %v547
    %v549 = vsel %vm546, %v548, %v544
    %v550 = vmul.f32 1.0, %v549
    %v551 = vmul.f32 %v530, %v404
    %v552 = vmul.f32 %v511, %v531
    %v553 = vadd.f32 %v551, %v552
    %v554 = vtanh.pop %v553
    %v555 = vmul.f32 %v550, %v554
    %556 = vst [vmem:[#allocation2] sm:$0xff] %v555
    %v557 = vld [vmem:[#allocation3 + $0x20] sm:$0xff]
    %v558 = vld [vmem:[#allocation3 + $0x28] sm:$0xff]
    %v559 = vld [vmem:[#allocation3 + $0x30] sm:$0xff]
    %v560 = vld [vmem:[#allocation3 + $0x38] sm:$0xff]
    %561 = vmatpush.msra.mxu0 %v399
    %562 = vmatpush.msra.mxu0 %v395
    %563 = vmatpush.msra.mxu0 %v391
    %564 = vmatpush.msra.mxu0 %v387
    %565 = vmatpush.msra.mxu0 %v383
    %566 = vmatpush.msra.mxu0 %v379
    %567 = vmatpush.msra.mxu0 %v375
    %568 = vmatpush.msra.mxu0 %v371
    %569 = vmatpush.msra.mxu0 %v367
    %570 = vmatpush.msra.mxu0 %v363
    %571 = vmatpush.msra.mxu0 %v359
    %572 = vmatpush.msra.mxu0 %v355
    %573 = vmatpush.msra.mxu0 %v351
    %574 = vmatpush.msra.mxu0 %v347
    %575 = vmatpush.msra.mxu0 %v343
    %576 = vmatpush.msra.mxu0 %v339
    %577 = vmatmul.f32.gmra.mxu0 %v555
    %v578 = vpop.f32.mrf.mxu0
    %v579 = vadd.f32 0.0, %v578
    %580 = vdwg.mxu0
    %581 = vmatpush.msra.mxu0 %v400
    %582 = vmatpush.msra.mxu0 %v396
    %583 = vmatpush.msra.mxu0 %v392
    %584 = vmatpush.msra.mxu0 %v388
    %585 = vmatpush.msra.mxu0 %v384
    %586 = vmatpush.msra.mxu0 %v380
    %587 = vmatpush.msra.mxu0 %v376
    %588 = vmatpush.msra.mxu0 %v372
    %589 = vmatpush.msra.mxu0 %v368
    %590 = vmatpush.msra.mxu0 %v364
    %591 = vmatpush.msra.mxu0 %v360
    %592 = vmatpush.msra.mxu0 %v356
    %593 = vmatpush.msra.mxu0 %v352
    %594 = vmatpush.msra.mxu0 %v348
    %595 = vmatpush.msra.mxu0 %v344
    %596 = vmatpush.msra.mxu0 %v340
    %597 = vmatmul.f32.gmra.mxu0 %v555
    %v598 = vpop.f32.mrf.mxu0
    %v599 = vadd.f32 0.0, %v598
    %600 = vdwg.mxu0
    %601 = vmatpush.msra.mxu0 %v401
    %602 = vmatpush.msra.mxu0 %v397
    %603 = vmatpush.msra.mxu0 %v393
    %604 = vmatpush.msra.mxu0 %v389
    %605 = vmatpush.msra.mxu0 %v385
    %606 = vmatpush.msra.mxu0 %v381
    %607 = vmatpush.msra.mxu0 %v377
    %608 = vmatpush.msra.mxu0 %v373
    %609 = vmatpush.msra.mxu0 %v369
    %610 = vmatpush.msra.mxu0 %v365
    %611 = vmatpush.msra.mxu0 %v361
    %612 = vmatpush.msra.mxu0 %v357
    %613 = vmatpush.msra.mxu0 %v353
    %614 = vmatpush.msra.mxu0 %v349
    %615 = vmatpush.msra.mxu0 %v345
    %616 = vmatpush.msra.mxu0 %v341
    %617 = vmatmul.f32.gmra.mxu0 %v555
    %v618 = vpop.f32.mrf.mxu0
    %v619 = vadd.f32 0.0, %v618
    %620 = vdwg.mxu0
    %621 = vmatpush.msra.mxu0 %v402
    %622 = vmatpush.msra.mxu0 %v398
    %623 = vmatpush.msra.mxu0 %v394
    %624 = vmatpush.msra.mxu0 %v390
    %625 = vmatpush.msra.mxu0 %v386
    %626 = vmatpush.msra.mxu0 %v382
    %627 = vmatpush.msra.mxu0 %v378
    %628 = vmatpush.msra.mxu0 %v374
    %629 = vmatpush.msra.mxu0 %v370
    %630 = vmatpush.msra.mxu0 %v366
    %631 = vmatpush.msra.mxu0 %v362
    %632 = vmatpush.msra.mxu0 %v358
    %633 = vmatpush.msra.mxu0 %v354
    %634 = vmatpush.msra.mxu0 %v350
    %635 = vmatpush.msra.mxu0 %v346
    %636 = vmatpush.msra.mxu0 %v342
    %637 = vmatmul.f32.gmra.mxu0 %v555
    %v638 = vpop.f32.mrf.mxu0
    %v639 = vadd.f32 0.0, %v638
    %640 = vdwg.mxu0
    %v641 = vadd.f32 %v557, %v579
    %v642 = vadd.f32 %v558, %v599
    %v643 = vadd.f32 %v559, %v619
    %v644 = vadd.f32 %v560, %v639
    %v645 = vxor.u32 %v641, 2147483648
    %v646 = vmul.f32 %v645, 1.442695
    %v647 = vpow.pop %v646
    %v648 = vadd.f32 %v647, 1.0
    %v649 = vrcp.pop %v648
    %v650 = vmul.f32 %v648, %v649
    %v651 = vsub.f32 1.0, %v650
    %v652 = vmul.f32 %v649, %v651
    %v653 = vadd.f32 %v649, %v652
    %vm654 = vweird.f32 %v648
    %vm655 = vweird.f32 %v649
    %vm656 = vmor %vm654, %vm655
    %v657 = vsel %vm656, %v649, %v653
    %v658 = vand.u32 2147483647, %v648
    %vm659 = vcmp.eq.f32.partialorder %v658, 8.507059e+37
    %v660 = vand.u32 %v648, 2147483648
    %v661 = vor.u32 1.1754944e-38, %v660
    %v662 = vsel %vm659, %v661, %v657
    %v663 = vmul.f32 1.0, %v662
    %v664 = vxor.u32 %v642, 2147483648
    %v665 = vmul.f32 %v664, 1.442695
    %v666 = vpow.pop %v665
    %v667 = vadd.f32 %v666, 1.0
    %v668 = vrcp.pop %v667
    %v669 = vmul.f32 %v667, %v668
    %v670 = vsub.f32 1.0, %v669
    %v671 = vmul.f32 %v668, %v670
    %v672 = vadd.f32 %v668, %v671
    %vm673 = vweird.f32 %v667
    %vm674 = vweird.f32 %v668
    %vm675 = vmor %vm673, %vm674
    %v676 = vsel %vm675, %v668, %v672
    %v677 = vand.u32 2147483647, %v667
    %vm678 = vcmp.eq.f32.partialorder %v677, 8.507059e+37
    %v679 = vand.u32 %v667, 2147483648
    %v680 = vor.u32 1.1754944e-38, %v679
    %v681 = vsel %vm678, %v680, %v676
    %v682 = vmul.f32 1.0, %v681
    %v683 = vtanh.pop %v643
    %v684 = vxor.u32 %v644, 2147483648
    %v685 = vmul.f32 %v684, 1.442695
    %v686 = vpow.pop %v685
    %v687 = vadd.f32 %v686, 1.0
    %v688 = vrcp.pop %v687
    %v689 = vmul.f32 %v687, %v688
    %v690 = vsub.f32 1.0, %v689
    %v691 = vmul.f32 %v688, %v690
    %v692 = vadd.f32 %v688, %v691
    %vm693 = vweird.f32 %v687
    %vm694 = vweird.f32 %v688
    %vm695 = vmor %vm693, %vm694
    %v696 = vsel %vm695, %v688, %v692
    %v697 = vand.u32 2147483647, %v687
    %vm698 = vcmp.eq.f32.partialorder %v697, 8.507059e+37
    %v699 = vand.u32 %v687, 2147483648
    %v700 = vor.u32 1.1754944e-38, %v699
    %v701 = vsel %vm698, %v700, %v696
    %v702 = vmul.f32 1.0, %v701
    %v703 = vmul.f32 %v682, %v553
    %v704 = vmul.f32 %v663, %v683
    %v705 = vadd.f32 %v703, %v704
    %v706 = vtanh.pop %v705
    %v707 = vmul.f32 %v702, %v706
    %708 = vst [vmem:[#allocation2 + $0x8] sm:$0xff] %v707
    %v709 = vld [vmem:[#allocation3 + $0x40] sm:$0xff]
    %v710 = vld [vmem:[#allocation3 + $0x48] sm:$0xff]
    %v711 = vld [vmem:[#allocation3 + $0x50] sm:$0xff]
    %v712 = vld [vmem:[#allocation3 + $0x58] sm:$0xff]
    %713 = vmatpush.msra.mxu0 %v399
    %714 = vmatpush.msra.mxu0 %v395
    %715 = vmatpush.msra.mxu0 %v391
    %716 = vmatpush.msra.mxu0 %v387
    %717 = vmatpush.msra.mxu0 %v383
    %718 = vmatpush.msra.mxu0 %v379
    %719 = vmatpush.msra.mxu0 %v375
    %720 = vmatpush.msra.mxu0 %v371
    %721 = vmatpush.msra.mxu0 %v367
    %722 = vmatpush.msra.mxu0 %v363
    %723 = vmatpush.msra.mxu0 %v359
    %724 = vmatpush.msra.mxu0 %v355
    %725 = vmatpush.msra.mxu0 %v351
    %726 = vmatpush.msra.mxu0 %v347
    %727 = vmatpush.msra.mxu0 %v343
    %728 = vmatpush.msra.mxu0 %v339
    %729 = vmatmul.f32.gmra.mxu0 %v707
    %v730 = vpop.f32.mrf.mxu0
    %v731 = vadd.f32 0.0, %v730
    %732 = vdwg.mxu0
    %733 = vmatpush.msra.mxu0 %v400
    %734 = vmatpush.msra.mxu0 %v396
    %735 = vmatpush.msra.mxu0 %v392
    %736 = vmatpush.msra.mxu0 %v388
    %737 = vmatpush.msra.mxu0 %v384
    %738 = vmatpush.msra.mxu0 %v380
    %739 = vmatpush.msra.mxu0 %v376
    %740 = vmatpush.msra.mxu0 %v372
    %741 = vmatpush.msra.mxu0 %v368
    %742 = vmatpush.msra.mxu0 %v364
    %743 = vmatpush.msra.mxu0 %v360
    %744 = vmatpush.msra.mxu0 %v356
    %745 = vmatpush.msra.mxu0 %v352
    %746 = vmatpush.msra.mxu0 %v348
    %747 = vmatpush.msra.mxu0 %v344
    %748 = vmatpush.msra.mxu0 %v340
    %749 = vmatmul.f32.gmra.mxu0 %v707
    %v750 = vpop.f32.mrf.mxu0
    %v751 = vadd.f32 0.0, %v750
    %752 = vdwg.mxu0
    %753 = vmatpush.msra.mxu0 %v401
    %754 = vmatpush.msra.mxu0 %v397
    %755 = vmatpush.msra.mxu0 %v393
    %756 = vmatpush.msra.mxu0 %v389
    %757 = vmatpush.msra.mxu0 %v385
    %758 = vmatpush.msra.mxu0 %v381
    %759 = vmatpush.msra.mxu0 %v377
    %760 = vmatpush.msra.mxu0 %v373
    %761 = vmatpush.msra.mxu0 %v369
    %762 = vmatpush.msra.mxu0 %v365
    %763 = vmatpush.msra.mxu0 %v361
    %764 = vmatpush.msra.mxu0 %v357
    %765 = vmatpush.msra.mxu0 %v353
    %766 = vmatpush.msra.mxu0 %v349
    %767 = vmatpush.msra.mxu0 %v345
    %768 = vmatpush.msra.mxu0 %v341
    %769 = vmatmul.f32.gmra.mxu0 %v707
    %v770 = vpop.f32.mrf.mxu0
    %v771 = vadd.f32 0.0, %v770
    %772 = vdwg.mxu0
    %773 = vmatpush.msra.mxu0 %v402
    %774 = vmatpush.msra.mxu0 %v398
    %775 = vmatpush.msra.mxu0 %v394
    %776 = vmatpush.msra.mxu0 %v390
    %777 = vmatpush.msra.mxu0 %v386
    %778 = vmatpush.msra.mxu0 %v382
    %779 = vmatpush.msra.mxu0 %v378
    %780 = vmatpush.msra.mxu0 %v374
    %781 = vmatpush.msra.mxu0 %v370
    %782 = vmatpush.msra.mxu0 %v366
    %783 = vmatpush.msra.mxu0 %v362
    %784 = vmatpush.msra.mxu0 %v358
    %785 = vmatpush.msra.mxu0 %v354
    %786 = vmatpush.msra.mxu0 %v350
    %787 = vmatpush.msra.mxu0 %v346
    %788 = vmatpush.msra.mxu0 %v342
    %789 = vmatmul.f32.gmra.mxu0 %v707
    %v790 = vpop.f32.mrf.mxu0
    %v791 = vadd.f32 0.0, %v790
    %792 = vdwg.mxu0
    %v793 = vadd.f32 %v709, %v731
    %v794 = vadd.f32 %v710, %v751
    %v795 = vadd.f32 %v711, %v771
    %v796 = vadd.f32 %v712, %v791
    %v797 = vxor.u32 %v793, 2147483648
    %v798 = vmul.f32 %v797, 1.442695
    %v799 = vpow.pop %v798
    %v800 = vadd.f32 %v799, 1.0
    %v801 = vrcp.pop %v800
    %v802 = vmul.f32 %v800, %v801
    %v803 = vsub.f32 1.0, %v802
    %v804 = vmul.f32 %v801, %v803
    %v805 = vadd.f32 %v801, %v804
    %vm806 = vweird.f32 %v800
    %vm807 = vweird.f32 %v801
    %vm808 = vmor %vm806, %vm807
    %v809 = vsel %vm808, %v801, %v805
    %v810 = vand.u32 2147483647, %v800
    %vm811 = vcmp.eq.f32.partialorder %v810, 8.507059e+37
    %v812 = vand.u32 %v800, 2147483648
    %v813 = vor.u32 1.1754944e-38, %v812
    %v814 = vsel %vm811, %v813, %v809
    %v815 = vmul.f32 1.0, %v814
    %v816 = vxor.u32 %v794, 2147483648
    %v817 = vmul.f32 %v816, 1.442695
    %v818 = vpow.pop %v817
    %v819 = vadd.f32 %v818, 1.0
    %v820 = vrcp.pop %v819
    %v821 = vmul.f32 %v819, %v820
    %v822 = vsub.f32 1.0, %v821
    %v823 = vmul.f32 %v820, %v822
    %v824 = vadd.f32 %v820, %v823
    %vm825 = vweird.f32 %v819
    %vm826 = vweird.f32 %v820
    %vm827 = vmor %vm825, %vm826
    %v828 = vsel %vm827, %v820, %v824
    %v829 = vand.u32 2147483647, %v819
    %vm830 = vcmp.eq.f32.partialorder %v829, 8.507059e+37
    %v831 = vand.u32 %v819, 2147483648
    %v832 = vor.u32 1.1754944e-38, %v831
    %v833 = vsel %vm830, %v832, %v828
    %v834 = vmul.f32 1.0, %v833
    %v835 = vtanh.pop %v795
    %v836 = vxor.u32 %v796, 2147483648
    %v837 = vmul.f32 %v836, 1.442695
    %v838 = vpow.pop %v837
    %v839 = vadd.f32 %v838, 1.0
    %v840 = vrcp.pop %v839
    %v841 = vmul.f32 %v839, %v840
    %v842 = vsub.f32 1.0, %v841
    %v843 = vmul.f32 %v840, %v842
    %v844 = vadd.f32 %v840, %v843
    %vm845 = vweird.f32 %v839
    %vm846 = vweird.f32 %v840
    %vm847 = vmor %vm845, %vm846
    %v848 = vsel %vm847, %v840, %v844
    %v849 = vand.u32 2147483647, %v839
    %vm850 = vcmp.eq.f32.partialorder %v849, 8.507059e+37
    %v851 = vand.u32 %v839, 2147483648
    %v852 = vor.u32 1.1754944e-38, %v851
    %v853 = vsel %vm850, %v852, %v848
    %v854 = vmul.f32 1.0, %v853
    %v855 = vmul.f32 %v834, %v705
    %v856 = vmul.f32 %v815, %v835
    %v857 = vadd.f32 %v855, %v856
    %v858 = vtanh.pop %v857
    %v859 = vmul.f32 %v854, %v858
    %860 = vst [vmem:[#allocation2 + $0x10] sm:$0xff] %v859
    %v861 = vld [vmem:[#allocation3 + $0x60] sm:$0xff]
    %v862 = vld [vmem:[#allocation3 + $0x68] sm:$0xff]
    %v863 = vld [vmem:[#allocation3 + $0x70] sm:$0xff]
    %v864 = vld [vmem:[#allocation3 + $0x78] sm:$0xff]
    %865 = vmatpush.msra.mxu0 %v399
    %866 = vmatpush.msra.mxu0 %v395
    %867 = vmatpush.msra.mxu0 %v391
    %868 = vmatpush.msra.mxu0 %v387
    %869 = vmatpush.msra.mxu0 %v383
    %870 = vmatpush.msra.mxu0 %v379
    %871 = vmatpush.msra.mxu0 %v375
    %872 = vmatpush.msra.mxu0 %v371
    %873 = vmatpush.msra.mxu0 %v367
    %874 = vmatpush.msra.mxu0 %v363
    %875 = vmatpush.msra.mxu0 %v359
    %876 = vmatpush.msra.mxu0 %v355
    %877 = vmatpush.msra.mxu0 %v351
    %878 = vmatpush.msra.mxu0 %v347
    %879 = vmatpush.msra.mxu0 %v343
    %880 = vmatpush.msra.mxu0 %v339
    %881 = vmatmul.f32.gmra.mxu0 %v859
    %v882 = vpop.f32.mrf.mxu0
    %v883 = vadd.f32 0.0, %v882
    %884 = vdwg.mxu0
    %885 = vmatpush.msra.mxu0 %v400
    %886 = vmatpush.msra.mxu0 %v396
    %887 = vmatpush.msra.mxu0 %v392
    %888 = vmatpush.msra.mxu0 %v388
    %889 = vmatpush.msra.mxu0 %v384
    %890 = vmatpush.msra.mxu0 %v380
    %891 = vmatpush.msra.mxu0 %v376
    %892 = vmatpush.msra.mxu0 %v372
    %893 = vmatpush.msra.mxu0 %v368
    %894 = vmatpush.msra.mxu0 %v364
    %895 = vmatpush.msra.mxu0 %v360
    %896 = vmatpush.msra.mxu0 %v356
    %897 = vmatpush.msra.mxu0 %v352
    %898 = vmatpush.msra.mxu0 %v348
    %899 = vmatpush.msra.mxu0 %v344
    %900 = vmatpush.msra.mxu0 %v340
    %901 = vmatmul.f32.gmra.mxu0 %v859
    %v902 = vpop.f32.mrf.mxu0
    %v903 = vadd.f32 0.0, %v902
    %904 = vdwg.mxu0
    %905 = vmatpush.msra.mxu0 %v401
    %906 = vmatpush.msra.mxu0 %v397
    %907 = vmatpush.msra.mxu0 %v393
    %908 = vmatpush.msra.mxu0 %v389
    %909 = vmatpush.msra.mxu0 %v385
    %910 = vmatpush.msra.mxu0 %v381
    %911 = vmatpush.msra.mxu0 %v377
    %912 = vmatpush.msra.mxu0 %v373
    %913 = vmatpush.msra.mxu0 %v369
    %914 = vmatpush.msra.mxu0 %v365
    %915 = vmatpush.msra.mxu0 %v361
    %916 = vmatpush.msra.mxu0 %v357
    %917 = vmatpush.msra.mxu0 %v353
    %918 = vmatpush.msra.mxu0 %v349
    %919 = vmatpush.msra.mxu0 %v345
    %920 = vmatpush.msra.mxu0 %v341
    %921 = vmatmul.f32.gmra.mxu0 %v859
    %v922 = vpop.f32.mrf.mxu0
    %v923 = vadd.f32 0.0, %v922
    %924 = vdwg.mxu0
    %925 = vmatpush.msra.mxu0 %v402
    %926 = vmatpush.msra.mxu0 %v398
    %927 = vmatpush.msra.mxu0 %v394
    %928 = vmatpush.msra.mxu0 %v390
    %929 = vmatpush.msra.mxu0 %v386
    %930 = vmatpush.msra.mxu0 %v382
    %931 = vmatpush.msra.mxu0 %v378
    %932 = vmatpush.msra.mxu0 %v374
    %933 = vmatpush.msra.mxu0 %v370
    %934 = vmatpush.msra.mxu0 %v366
    %935 = vmatpush.msra.mxu0 %v362
    %936 = vmatpush.msra.mxu0 %v358
    %937 = vmatpush.msra.mxu0 %v354
    %938 = vmatpush.msra.mxu0 %v350
    %939 = vmatpush.msra.mxu0 %v346
    %940 = vmatpush.msra.mxu0 %v342
    %941 = vmatmul.f32.gmra.mxu0 %v859
    %v942 = vpop.f32.mrf.mxu0
    %v943 = vadd.f32 0.0, %v942
    %944 = vdwg.mxu0
    %v945 = vadd.f32 %v861, %v883
    %v946 = vadd.f32 %v862, %v903
    %v947 = vadd.f32 %v863, %v923
    %v948 = vadd.f32 %v864, %v943
    %v949 = vxor.u32 %v945, 2147483648
    %v950 = vmul.f32 %v949, 1.442695
    %v951 = vpow.pop %v950
    %v952 = vadd.f32 %v951, 1.0
    %v953 = vrcp.pop %v952
    %v954 = vmul.f32 %v952, %v953
    %v955 = vsub.f32 1.0, %v954
    %v956 = vmul.f32 %v953, %v955
    %v957 = vadd.f32 %v953, %v956
    %vm958 = vweird.f32 %v952
    %vm959 = vweird.f32 %v953
    %vm960 = vmor %vm958, %vm959
    %v961 = vsel %vm960, %v953, %v957
    %v962 = vand.u32 2147483647, %v952
    %vm963 = vcmp.eq.f32.partialorder %v962, 8.507059e+37
    %v964 = vand.u32 %v952, 2147483648
    %v965 = vor.u32 1.1754944e-38, %v964
    %v966 = vsel %vm963, %v965, %v961
    %v967 = vmul.f32 1.0, %v966
    %v968 = vxor.u32 %v946, 2147483648
    %v969 = vmul.f32 %v968, 1.442695
    %v970 = vpow.pop %v969
    %v971 = vadd.f32 %v970, 1.0
    %v972 = vrcp.pop %v971
    %v973 = vmul.f32 %v971, %v972
    %v974 = vsub.f32 1.0, %v973
    %v975 = vmul.f32 %v972, %v974
    %v976 = vadd.f32 %v972, %v975
    %vm977 = vweird.f32 %v971
    %vm978 = vweird.f32 %v972
    %vm979 = vmor %vm977, %vm978
    %v980 = vsel %vm979, %v972, %v976
    %v981 = vand.u32 2147483647, %v971
    %vm982 = vcmp.eq.f32.partialorder %v981, 8.507059e+37
    %v983 = vand.u32 %v971, 2147483648
    %v984 = vor.u32 1.1754944e-38, %v983
    %v985 = vsel %vm982, %v984, %v980
    %v986 = vmul.f32 1.0, %v985
    %v987 = vtanh.pop %v947
    %v988 = vxor.u32 %v948, 2147483648
    %v989 = vmul.f32 %v988, 1.442695
    %v990 = vpow.pop %v989
    %v991 = vadd.f32 %v990, 1.0
    %v992 = vrcp.pop %v991
    %v993 = vmul.f32 %v991, %v992
    %v994 = vsub.f32 1.0, %v993
    %v995 = vmul.f32 %v992, %v994
    %v996 = vadd.f32 %v992, %v995
    %vm997 = vweird.f32 %v991
    %vm998 = vweird.f32 %v992
    %vm999 = vmor %vm997, %vm998
    %v1000 = vsel %vm999, %v992, %v996
    %v1001 = vand.u32 2147483647, %v991
    %vm1002 = vcmp.eq.f32.partialorder %v1001, 8.507059e+37
    %v1003 = vand.u32 %v991, 2147483648
    %v1004 = vor.u32 1.1754944e-38, %v1003
    %v1005 = vsel %vm1002, %v1004, %v1000
    %v1006 = vmul.f32 1.0, %v1005
    %v1007 = vmul.f32 %v986, %v857
    %v1008 = vmul.f32 %v967, %v987
    %v1009 = vadd.f32 %v1007, %v1008
    %v1010 = vtanh.pop %v1009
    %v1011 = vmul.f32 %v1006, %v1010
    %1012 = vst [vmem:[#allocation2 + $0x18] sm:$0xff] %v1011
    %v1013 = vld [vmem:[#allocation3 + $0x80] sm:$0xff]
    %v1014 = vld [vmem:[#allocation3 + $0x88] sm:$0xff]
    %v1015 = vld [vmem:[#allocation3 + $0x90] sm:$0xff]
    %v1016 = vld [vmem:[#allocation3 + $0x98] sm:$0xff]
    %1017 = vmatpush.msra.mxu0 %v399
    %1018 = vmatpush.msra.mxu0 %v395
    %1019 = vmatpush.msra.mxu0 %v391
    %1020 = vmatpush.msra.mxu0 %v387
    %1021 = vmatpush.msra.mxu0 %v383
    %1022 = vmatpush.msra.mxu0 %v379
    %1023 = vmatpush.msra.mxu0 %v375
    %1024 = vmatpush.msra.mxu0 %v371
    %1025 = vmatpush.msra.mxu0 %v367
    %1026 = vmatpush.msra.mxu0 %v363
    %1027 = vmatpush.msra.mxu0 %v359
    %1028 = vmatpush.msra.mxu0 %v355
    %1029 = vmatpush.msra.mxu0 %v351
    %1030 = vmatpush.msra.mxu0 %v347
    %1031 = vmatpush.msra.mxu0 %v343
    %1032 = vmatpush.msra.mxu0 %v339
    %1033 = vmatmul.f32.gmra.mxu0 %v1011
    %v1034 = vpop.f32.mrf.mxu0
    %v1035 = vadd.f32 0.0, %v1034
    %1036 = vdwg.mxu0
    %1037 = vmatpush.msra.mxu0 %v400
    %1038 = vmatpush.msra.mxu0 %v396
    %1039 = vmatpush.msra.mxu0 %v392
    %1040 = vmatpush.msra.mxu0 %v388
    %1041 = vmatpush.msra.mxu0 %v384
    %1042 = vmatpush.msra.mxu0 %v380
    %1043 = vmatpush.msra.mxu0 %v376
    %1044 = vmatpush.msra.mxu0 %v372
    %1045 = vmatpush.msra.mxu0 %v368
    %1046 = vmatpush.msra.mxu0 %v364
    %1047 = vmatpush.msra.mxu0 %v360
    %1048 = vmatpush.msra.mxu0 %v356
    %1049 = vmatpush.msra.mxu0 %v352
    %1050 = vmatpush.msra.mxu0 %v348
    %1051 = vmatpush.msra.mxu0 %v344
    %1052 = vmatpush.msra.mxu0 %v340
    %1053 = vmatmul.f32.gmra.mxu0 %v1011
    %v1054 = vpop.f32.mrf.mxu0
    %v1055 = vadd.f32 0.0, %v1054
    %1056 = vdwg.mxu0
    %1057 = vmatpush.msra.mxu0 %v401
    %1058 = vmatpush.msra.mxu0 %v397
    %1059 = vmatpush.msra.mxu0 %v393
    %1060 = vmatpush.msra.mxu0 %v389
    %1061 = vmatpush.msra.mxu0 %v385
    %1062 = vmatpush.msra.mxu0 %v381
    %1063 = vmatpush.msra.mxu0 %v377
    %1064 = vmatpush.msra.mxu0 %v373
    %1065 = vmatpush.msra.mxu0 %v369
    %1066 = vmatpush.msra.mxu0 %v365
    %1067 = vmatpush.msra.mxu0 %v361
    %1068 = vmatpush.msra.mxu0 %v357
    %1069 = vmatpush.msra.mxu0 %v353
    %1070 = vmatpush.msra.mxu0 %v349
    %1071 = vmatpush.msra.mxu0 %v345
    %1072 = vmatpush.msra.mxu0 %v341
    %1073 = vmatmul.f32.gmra.mxu0 %v1011
    %v1074 = vpop.f32.mrf.mxu0
    %v1075 = vadd.f32 0.0, %v1074
    %1076 = vdwg.mxu0
    %1077 = vmatpush.msra.mxu0 %v402
    %1078 = vmatpush.msra.mxu0 %v398
    %1079 = vmatpush.msra.mxu0 %v394
    %1080 = vmatpush.msra.mxu0 %v390
    %1081 = vmatpush.msra.mxu0 %v386
    %1082 = vmatpush.msra.mxu0 %v382
    %1083 = vmatpush.msra.mxu0 %v378
    %1084 = vmatpush.msra.mxu0 %v374
    %1085 = vmatpush.msra.mxu0 %v370
    %1086 = vmatpush.msra.mxu0 %v366
    %1087 = vmatpush.msra.mxu0 %v362
    %1088 = vmatpush.msra.mxu0 %v358
    %1089 = vmatpush.msra.mxu0 %v354
    %1090 = vmatpush.msra.mxu0 %v350
    %1091 = vmatpush.msra.mxu0 %v346
    %1092 = vmatpush.msra.mxu0 %v342
    %1093 = vmatmul.f32.gmra.mxu0 %v1011
    %v1094 = vpop.f32.mrf.mxu0
    %v1095 = vadd.f32 0.0, %v1094
    %1096 = vdwg.mxu0
    %v1097 = vadd.f32 %v1013, %v1035
    %v1098 = vadd.f32 %v1014, %v1055
    %v1099 = vadd.f32 %v1015, %v1075
    %v1100 = vadd.f32 %v1016, %v1095
    %v1101 = vxor.u32 %v1097, 2147483648
    %v1102 = vmul.f32 %v1101, 1.442695
    %v1103 = vpow.pop %v1102
    %v1104 = vadd.f32 %v1103, 1.0
    %v1105 = vrcp.pop %v1104
    %v1106 = vmul.f32 %v1104, %v1105
    %v1107 = vsub.f32 1.0, %v1106
    %v1108 = vmul.f32 %v1105, %v1107
    %v1109 = vadd.f32 %v1105, %v1108
    %vm1110 = vweird.f32 %v1104
    %vm1111 = vweird.f32 %v1105
    %vm1112 = vmor %vm1110, %vm1111
    %v1113 = vsel %vm1112, %v1105, %v1109
    %v1114 = vand.u32 2147483647, %v1104
    %vm1115 = vcmp.eq.f32.partialorder %v1114, 8.507059e+37
    %v1116 = vand.u32 %v1104, 2147483648
    %v1117 = vor.u32 1.1754944e-38, %v1116
    %v1118 = vsel %vm1115, %v1117, %v1113
    %v1119 = vmul.f32 1.0, %v1118
    %v1120 = vxor.u32 %v1098, 2147483648
    %v1121 = vmul.f32 %v1120, 1.442695
    %v1122 = vpow.pop %v1121
    %v1123 = vadd.f32 %v1122, 1.0
    %v1124 = vrcp.pop %v1123
    %v1125 = vmul.f32 %v1123, %v1124
    %v1126 = vsub.f32 1.0, %v1125
    %v1127 = vmul.f32 %v1124, %v1126
    %v1128 = vadd.f32 %v1124, %v1127
    %vm1129 = vweird.f32 %v1123
    %vm1130 = vweird.f32 %v1124
    %vm1131 = vmor %vm1129, %vm1130
    %v1132 = vsel %vm1131, %v1124, %v1128
    %v1133 = vand.u32 2147483647, %v1123
    %vm1134 = vcmp.eq.f32.partialorder %v1133, 8.507059e+37
    %v1135 = vand.u32 %v1123, 2147483648
    %v1136 = vor.u32 1.1754944e-38, %v1135
    %v1137 = vsel %vm1134, %v1136, %v1132
    %v1138 = vmul.f32 1.0, %v1137
    %v1139 = vtanh.pop %v1099
    %v1140 = vxor.u32 %v1100, 2147483648
    %v1141 = vmul.f32 %v1140, 1.442695
    %v1142 = vpow.pop %v1141
    %v1143 = vadd.f32 %v1142, 1.0
    %v1144 = vrcp.pop %v1143
    %v1145 = vmul.f32 %v1143, %v1144
    %v1146 = vsub.f32 1.0, %v1145
    %v1147 = vmul.f32 %v1144, %v1146
    %v1148 = vadd.f32 %v1144, %v1147
    %vm1149 = vweird.f32 %v1143
    %vm1150 = vweird.f32 %v1144
    %vm1151 = vmor %vm1149, %vm1150
    %v1152 = vsel %vm1151, %v1144, %v1148
    %v1153 = vand.u32 2147483647, %v1143
    %vm1154 = vcmp.eq.f32.partialorder %v1153, 8.507059e+37
    %v1155 = vand.u32 %v1143, 2147483648
    %v1156 = vor.u32 1.1754944e-38, %v1155
    %v1157 = vsel %vm1154, %v1156, %v1152
    %v1158 = vmul.f32 1.0, %v1157
    %v1159 = vmul.f32 %v1138, %v1009
    %v1160 = vmul.f32 %v1119, %v1139
    %v1161 = vadd.f32 %v1159, %v1160
    %v1162 = vtanh.pop %v1161
    %v1163 = vmul.f32 %v1158, %v1162
    %1164 = vst [vmem:[#allocation2 + $0x20] sm:$0xff] %v1163
    %v1165 = vld [vmem:[#allocation3 + $0xa0] sm:$0xff]
    %v1166 = vld [vmem:[#allocation3 + $0xa8] sm:$0xff]
    %v1167 = vld [vmem:[#allocation3 + $0xb0] sm:$0xff]
    %v1168 = vld [vmem:[#allocation3 + $0xb8] sm:$0xff]
    %1169 = vmatpush.msra.mxu0 %v399
    %1170 = vmatpush.msra.mxu0 %v395
    %1171 = vmatpush.msra.mxu0 %v391
    %1172 = vmatpush.msra.mxu0 %v387
    %1173 = vmatpush.msra.mxu0 %v383
    %1174 = vmatpush.msra.mxu0 %v379
    %1175 = vmatpush.msra.mxu0 %v375
    %1176 = vmatpush.msra.mxu0 %v371
    %1177 = vmatpush.msra.mxu0 %v367
    %1178 = vmatpush.msra.mxu0 %v363
    %1179 = vmatpush.msra.mxu0 %v359
    %1180 = vmatpush.msra.mxu0 %v355
    %1181 = vmatpush.msra.mxu0 %v351
    %1182 = vmatpush.msra.mxu0 %v347
    %1183 = vmatpush.msra.mxu0 %v343
    %1184 = vmatpush.msra.mxu0 %v339
    %1185 = vmatmul.f32.gmra.mxu0 %v1163
    %v1186 = vpop.f32.mrf.mxu0
    %v1187 = vadd.f32 0.0, %v1186
    %1188 = vdwg.mxu0
    %1189 = vmatpush.msra.mxu0 %v400
    %1190 = vmatpush.msra.mxu0 %v396
    %1191 = vmatpush.msra.mxu0 %v392
    %1192 = vmatpush.msra.mxu0 %v388
    %1193 = vmatpush.msra.mxu0 %v384
    %1194 = vmatpush.msra.mxu0 %v380
    %1195 = vmatpush.msra.mxu0 %v376
    %1196 = vmatpush.msra.mxu0 %v372
    %1197 = vmatpush.msra.mxu0 %v368
    %1198 = vmatpush.msra.mxu0 %v364
    %1199 = vmatpush.msra.mxu0 %v360
    %1200 = vmatpush.msra.mxu0 %v356
    %1201 = vmatpush.msra.mxu0 %v352
    %1202 = vmatpush.msra.mxu0 %v348
    %1203 = vmatpush.msra.mxu0 %v344
    %1204 = vmatpush.msra.mxu0 %v340
    %1205 = vmatmul.f32.gmra.mxu0 %v1163
    %v1206 = vpop.f32.mrf.mxu0
    %v1207 = vadd.f32 0.0, %v1206
    %1208 = vdwg.mxu0
    %1209 = vmatpush.msra.mxu0 %v401
    %1210 = vmatpush.msra.mxu0 %v397
    %1211 = vmatpush.msra.mxu0 %v393
    %1212 = vmatpush.msra.mxu0 %v389
    %1213 = vmatpush.msra.mxu0 %v385
    %1214 = vmatpush.msra.mxu0 %v381
    %1215 = vmatpush.msra.mxu0 %v377
    %1216 = vmatpush.msra.mxu0 %v373
    %1217 = vmatpush.msra.mxu0 %v369
    %1218 = vmatpush.msra.mxu0 %v365
    %1219 = vmatpush.msra.mxu0 %v361
    %1220 = vmatpush.msra.mxu0 %v357
    %1221 = vmatpush.msra.mxu0 %v353
    %1222 = vmatpush.msra.mxu0 %v349
    %1223 = vmatpush.msra.mxu0 %v345
    %1224 = vmatpush.msra.mxu0 %v341
    %1225 = vmatmul.f32.gmra.mxu0 %v1163
    %v1226 = vpop.f32.mrf.mxu0
    %v1227 = vadd.f32 0.0, %v1226
    %1228 = vdwg.mxu0
    %1229 = vmatpush.msra.mxu0 %v402
    %1230 = vmatpush.msra.mxu0 %v398
    %1231 = vmatpush.msra.mxu0 %v394
    %1232 = vmatpush.msra.mxu0 %v390
    %1233 = vmatpush.msra.mxu0 %v386
    %1234 = vmatpush.msra.mxu0 %v382
    %1235 = vmatpush.msra.mxu0 %v378
    %1236 = vmatpush.msra.mxu0 %v374
    %1237 = vmatpush.msra.mxu0 %v370
    %1238 = vmatpush.msra.mxu0 %v366
    %1239 = vmatpush.msra.mxu0 %v362
    %1240 = vmatpush.msra.mxu0 %v358
    %1241 = vmatpush.msra.mxu0 %v354
    %1242 = vmatpush.msra.mxu0 %v350
    %1243 = vmatpush.msra.mxu0 %v346
    %1244 = vmatpush.msra.mxu0 %v342
    %1245 = vmatmul.f32.gmra.mxu0 %v1163
    %v1246 = vpop.f32.mrf.mxu0
    %v1247 = vadd.f32 0.0, %v1246
    %1248 = vdwg.mxu0
    %v1249 = vadd.f32 %v1165, %v1187
    %v1250 = vadd.f32 %v1166, %v1207
    %v1251 = vadd.f32 %v1167, %v1227
    %v1252 = vadd.f32 %v1168, %v1247
    %v1253 = vxor.u32 %v1249, 2147483648
    %v1254 = vmul.f32 %v1253, 1.442695
    %v1255 = vpow.pop %v1254
    %v1256 = vadd.f32 %v1255, 1.0
    %v1257 = vrcp.pop %v1256
    %v1258 = vmul.f32 %v1256, %v1257
    %v1259 = vsub.f32 1.0, %v1258
    %v1260 = vmul.f32 %v1257, %v1259
    %v1261 = vadd.f32 %v1257, %v1260
    %vm1262 = vweird.f32 %v1256
    %vm1263 = vweird.f32 %v1257
    %vm1264 = vmor %vm1262, %vm1263
    %v1265 = vsel %vm1264, %v1257, %v1261
    %v1266 = vand.u32 2147483647, %v1256
    %vm1267 = vcmp.eq.f32.partialorder %v1266, 8.507059e+37
    %v1268 = vand.u32 %v1256, 2147483648
    %v1269 = vor.u32 1.1754944e-38, %v1268
    %v1270 = vsel %vm1267, %v1269, %v1265
    %v1271 = vmul.f32 1.0, %v1270
    %v1272 = vxor.u32 %v1250, 2147483648
    %v1273 = vmul.f32 %v1272, 1.442695
    %v1274 = vpow.pop %v1273
    %v1275 = vadd.f32 %v1274, 1.0
    %v1276 = vrcp.pop %v1275
    %v1277 = vmul.f32 %v1275, %v1276
    %v1278 = vsub.f32 1.0, %v1277
    %v1279 = vmul.f32 %v1276, %v1278
    %v1280 = vadd.f32 %v1276, %v1279
    %vm1281 = vweird.f32 %v1275
    %vm1282 = vweird.f32 %v1276
    %vm1283 = vmor %vm1281, %vm1282
    %v1284 = vsel %vm1283, %v1276, %v1280
    %v1285 = vand.u32 2147483647, %v1275
    %vm1286 = vcmp.eq.f32.partialorder %v1285, 8.507059e+37
    %v1287 = vand.u32 %v1275, 2147483648
    %v1288 = vor.u32 1.1754944e-38, %v1287
    %v1289 = vsel %vm1286, %v1288, %v1284
    %v1290 = vmul.f32 1.0, %v1289
    %v1291 = vtanh.pop %v1251
    %v1292 = vxor.u32 %v1252, 2147483648
    %v1293 = vmul.f32 %v1292, 1.442695
    %v1294 = vpow.pop %v1293
    %v1295 = vadd.f32 %v1294, 1.0
    %v1296 = vrcp.pop %v1295
    %v1297 = vmul.f32 %v1295, %v1296
    %v1298 = vsub.f32 1.0, %v1297
    %v1299 = vmul.f32 %v1296, %v1298
    %v1300 = vadd.f32 %v1296, %v1299
    %vm1301 = vweird.f32 %v1295
    %vm1302 = vweird.f32 %v1296
    %vm1303 = vmor %vm1301, %vm1302
    %v1304 = vsel %vm1303, %v1296, %v1300
    %v1305 = vand.u32 2147483647, %v1295
    %vm1306 = vcmp.eq.f32.partialorder %v1305, 8.507059e+37
    %v1307 = vand.u32 %v1295, 2147483648
    %v1308 = vor.u32 1.1754944e-38, %v1307
    %v1309 = vsel %vm1306, %v1308, %v1304
    %v1310 = vmul.f32 1.0, %v1309
    %v1311 = vmul.f32 %v1290, %v1161
    %v1312 = vmul.f32 %v1271, %v1291
    %v1313 = vadd.f32 %v1311, %v1312
    %v1314 = vtanh.pop %v1313
    %v1315 = vmul.f32 %v1310, %v1314
    %1316 = vst [vmem:[#allocation2 + $0x28] sm:$0xff] %v1315
    %v1317 = vld [vmem:[#allocation3 + $0xc0] sm:$0xff]
    %v1318 = vld [vmem:[#allocation3 + $0xc8] sm:$0xff]
    %v1319 = vld [vmem:[#allocation3 + $0xd0] sm:$0xff]
    %v1320 = vld [vmem:[#allocation3 + $0xd8] sm:$0xff]
    %1321 = vmatpush.msra.mxu0 %v399
    %1322 = vmatpush.msra.mxu0 %v395
    %1323 = vmatpush.msra.mxu0 %v391
    %1324 = vmatpush.msra.mxu0 %v387
    %1325 = vmatpush.msra.mxu0 %v383
    %1326 = vmatpush.msra.mxu0 %v379
    %1327 = vmatpush.msra.mxu0 %v375
    %1328 = vmatpush.msra.mxu0 %v371
    %1329 = vmatpush.msra.mxu0 %v367
    %1330 = vmatpush.msra.mxu0 %v363
    %1331 = vmatpush.msra.mxu0 %v359
    %1332 = vmatpush.msra.mxu0 %v355
    %1333 = vmatpush.msra.mxu0 %v351
    %1334 = vmatpush.msra.mxu0 %v347
    %1335 = vmatpush.msra.mxu0 %v343
    %1336 = vmatpush.msra.mxu0 %v339
    %1337 = vmatmul.f32.gmra.mxu0 %v1315
    %v1338 = vpop.f32.mrf.mxu0
    %v1339 = vadd.f32 0.0, %v1338
    %1340 = vdwg.mxu0
    %1341 = vmatpush.msra.mxu0 %v400
    %1342 = vmatpush.msra.mxu0 %v396
    %1343 = vmatpush.msra.mxu0 %v392
    %1344 = vmatpush.msra.mxu0 %v388
    %1345 = vmatpush.msra.mxu0 %v384
    %1346 = vmatpush.msra.mxu0 %v380
    %1347 = vmatpush.msra.mxu0 %v376
    %1348 = vmatpush.msra.mxu0 %v372
    %1349 = vmatpush.msra.mxu0 %v368
    %1350 = vmatpush.msra.mxu0 %v364
    %1351 = vmatpush.msra.mxu0 %v360
    %1352 = vmatpush.msra.mxu0 %v356
    %1353 = vmatpush.msra.mxu0 %v352
    %1354 = vmatpush.msra.mxu0 %v348
    %1355 = vmatpush.msra.mxu0 %v344
    %1356 = vmatpush.msra.mxu0 %v340
    %1357 = vmatmul.f32.gmra.mxu0 %v1315
    %v1358 = vpop.f32.mrf.mxu0
    %v1359 = vadd.f32 0.0, %v1358
    %1360 = vdwg.mxu0
    %1361 = vmatpush.msra.mxu0 %v401
    %1362 = vmatpush.msra.mxu0 %v397
    %1363 = vmatpush.msra.mxu0 %v393
    %1364 = vmatpush.msra.mxu0 %v389
    %1365 = vmatpush.msra.mxu0 %v385
    %1366 = vmatpush.msra.mxu0 %v381
    %1367 = vmatpush.msra.mxu0 %v377
    %1368 = vmatpush.msra.mxu0 %v373
    %1369 = vmatpush.msra.mxu0 %v369
    %1370 = vmatpush.msra.mxu0 %v365
    %1371 = vmatpush.msra.mxu0 %v361
    %1372 = vmatpush.msra.mxu0 %v357
    %1373 = vmatpush.msra.mxu0 %v353
    %1374 = vmatpush.msra.mxu0 %v349
    %1375 = vmatpush.msra.mxu0 %v345
    %1376 = vmatpush.msra.mxu0 %v341
    %1377 = vmatmul.f32.gmra.mxu0 %v1315
    %v1378 = vpop.f32.mrf.mxu0
    %v1379 = vadd.f32 0.0, %v1378
    %1380 = vdwg.mxu0
    %1381 = vmatpush.msra.mxu0 %v402
    %1382 = vmatpush.msra.mxu0 %v398
    %1383 = vmatpush.msra.mxu0 %v394
    %1384 = vmatpush.msra.mxu0 %v390
    %1385 = vmatpush.msra.mxu0 %v386
    %1386 = vmatpush.msra.mxu0 %v382
    %1387 = vmatpush.msra.mxu0 %v378
    %1388 = vmatpush.msra.mxu0 %v374
    %1389 = vmatpush.msra.mxu0 %v370
    %1390 = vmatpush.msra.mxu0 %v366
    %1391 = vmatpush.msra.mxu0 %v362
    %1392 = vmatpush.msra.mxu0 %v358
    %1393 = vmatpush.msra.mxu0 %v354
    %1394 = vmatpush.msra.mxu0 %v350
    %1395 = vmatpush.msra.mxu0 %v346
    %1396 = vmatpush.msra.mxu0 %v342
    %1397 = vmatmul.f32.gmra.mxu0 %v1315
    %v1398 = vpop.f32.mrf.mxu0
    %v1399 = vadd.f32 0.0, %v1398
    %1400 = vdwg.mxu0
    %v1401 = vadd.f32 %v1317, %v1339
    %v1402 = vadd.f32 %v1318, %v1359
    %v1403 = vadd.f32 %v1319, %v1379
    %v1404 = vadd.f32 %v1320, %v1399
    %v1405 = vxor.u32 %v1401, 2147483648
    %v1406 = vmul.f32 %v1405, 1.442695
    %v1407 = vpow.pop %v1406
    %v1408 = vadd.f32 %v1407, 1.0
    %v1409 = vrcp.pop %v1408
    %v1410 = vmul.f32 %v1408, %v1409
    %v1411 = vsub.f32 1.0, %v1410
    %v1412 = vmul.f32 %v1409, %v1411
    %v1413 = vadd.f32 %v1409, %v1412
    %vm1414 = vweird.f32 %v1408
    %vm1415 = vweird.f32 %v1409
    %vm1416 = vmor %vm1414, %vm1415
    %v1417 = vsel %vm1416, %v1409, %v1413
    %v1418 = vand.u32 2147483647, %v1408
    %vm1419 = vcmp.eq.f32.partialorder %v1418, 8.507059e+37
    %v1420 = vand.u32 %v1408, 2147483648
    %v1421 = vor.u32 1.1754944e-38, %v1420
    %v1422 = vsel %vm1419, %v1421, %v1417
    %v1423 = vmul.f32 1.0, %v1422
    %v1424 = vxor.u32 %v1402, 2147483648
    %v1425 = vmul.f32 %v1424, 1.442695
    %v1426 = vpow.pop %v1425
    %v1427 = vadd.f32 %v1426, 1.0
    %v1428 = vrcp.pop %v1427
    %v1429 = vmul.f32 %v1427, %v1428
    %v1430 = vsub.f32 1.0, %v1429
    %v1431 = vmul.f32 %v1428, %v1430
    %v1432 = vadd.f32 %v1428, %v1431
    %vm1433 = vweird.f32 %v1427
    %vm1434 = vweird.f32 %v1428
    %vm1435 = vmor %vm1433, %vm1434
    %v1436 = vsel %vm1435, %v1428, %v1432
    %v1437 = vand.u32 2147483647, %v1427
    %vm1438 = vcmp.eq.f32.partialorder %v1437, 8.507059e+37
    %v1439 = vand.u32 %v1427, 2147483648
    %v1440 = vor.u32 1.1754944e-38, %v1439
    %v1441 = vsel %vm1438, %v1440, %v1436
    %v1442 = vmul.f32 1.0, %v1441
    %v1443 = vtanh.pop %v1403
    %v1444 = vxor.u32 %v1404, 2147483648
    %v1445 = vmul.f32 %v1444, 1.442695
    %v1446 = vpow.pop %v1445
    %v1447 = vadd.f32 %v1446, 1.0
    %v1448 = vrcp.pop %v1447
    %v1449 = vmul.f32 %v1447, %v1448
    %v1450 = vsub.f32 1.0, %v1449
    %v1451 = vmul.f32 %v1448, %v1450
    %v1452 = vadd.f32 %v1448, %v1451
    %vm1453 = vweird.f32 %v1447
    %vm1454 = vweird.f32 %v1448
    %vm1455 = vmor %vm1453, %vm1454
    %v1456 = vsel %vm1455, %v1448, %v1452
    %v1457 = vand.u32 2147483647, %v1447
    %vm1458 = vcmp.eq.f32.partialorder %v1457, 8.507059e+37
    %v1459 = vand.u32 %v1447, 2147483648
    %v1460 = vor.u32 1.1754944e-38, %v1459
    %v1461 = vsel %vm1458, %v1460, %v1456
    %v1462 = vmul.f32 1.0, %v1461
    %v1463 = vmul.f32 %v1442, %v1313
    %v1464 = vmul.f32 %v1423, %v1443
    %v1465 = vadd.f32 %v1463, %v1464
    %v1466 = vtanh.pop %v1465
    %v1467 = vmul.f32 %v1462, %v1466
    %1468 = vst [vmem:[#allocation2 + $0x30] sm:$0xff] %v1467
    %v1469 = vld [vmem:[#allocation3 + $0xe0] sm:$0xff]
    %v1470 = vld [vmem:[#allocation3 + $0xe8] sm:$0xff]
    %v1471 = vld [vmem:[#allocation3 + $0xf0] sm:$0xff]
    %v1472 = vld [vmem:[#allocation3 + $0xf8] sm:$0xff]
    %1473 = vmatpush.msra.mxu0 %v399
    %1474 = vmatpush.msra.mxu0 %v395
    %1475 = vmatpush.msra.mxu0 %v391
    %1476 = vmatpush.msra.mxu0 %v387
    %1477 = vmatpush.msra.mxu0 %v383
    %1478 = vmatpush.msra.mxu0 %v379
    %1479 = vmatpush.msra.mxu0 %v375
    %1480 = vmatpush.msra.mxu0 %v371
    %1481 = vmatpush.msra.mxu0 %v367
    %1482 = vmatpush.msra.mxu0 %v363
    %1483 = vmatpush.msra.mxu0 %v359
    %1484 = vmatpush.msra.mxu0 %v355
    %1485 = vmatpush.msra.mxu0 %v351
    %1486 = vmatpush.msra.mxu0 %v347
    %1487 = vmatpush.msra.mxu0 %v343
    %1488 = vmatpush.msra.mxu0 %v339
    %1489 = vmatmul.f32.gmra.mxu0 %v1467
    %v1490 = vpop.f32.mrf.mxu0
    %v1491 = vadd.f32 0.0, %v1490
    %1492 = vdwg.mxu0
    %1493 = vmatpush.msra.mxu0 %v400
    %1494 = vmatpush.msra.mxu0 %v396
    %1495 = vmatpush.msra.mxu0 %v392
    %1496 = vmatpush.msra.mxu0 %v388
    %1497 = vmatpush.msra.mxu0 %v384
    %1498 = vmatpush.msra.mxu0 %v380
    %1499 = vmatpush.msra.mxu0 %v376
    %1500 = vmatpush.msra.mxu0 %v372
    %1501 = vmatpush.msra.mxu0 %v368
    %1502 = vmatpush.msra.mxu0 %v364
    %1503 = vmatpush.msra.mxu0 %v360
    %1504 = vmatpush.msra.mxu0 %v356
    %1505 = vmatpush.msra.mxu0 %v352
    %1506 = vmatpush.msra.mxu0 %v348
    %1507 = vmatpush.msra.mxu0 %v344
    %1508 = vmatpush.msra.mxu0 %v340
    %1509 = vmatmul.f32.gmra.mxu0 %v1467
    %v1510 = vpop.f32.mrf.mxu0
    %v1511 = vadd.f32 0.0, %v1510
    %1512 = vdwg.mxu0
    %1513 = vmatpush.msra.mxu0 %v401
    %1514 = vmatpush.msra.mxu0 %v397
    %1515 = vmatpush.msra.mxu0 %v393
    %1516 = vmatpush.msra.mxu0 %v389
    %1517 = vmatpush.msra.mxu0 %v385
    %1518 = vmatpush.msra.mxu0 %v381
    %1519 = vmatpush.msra.mxu0 %v377
    %1520 = vmatpush.msra.mxu0 %v373
    %1521 = vmatpush.msra.mxu0 %v369
    %1522 = vmatpush.msra.mxu0 %v365
    %1523 = vmatpush.msra.mxu0 %v361
    %1524 = vmatpush.msra.mxu0 %v357
    %1525 = vmatpush.msra.mxu0 %v353
    %1526 = vmatpush.msra.mxu0 %v349
    %1527 = vmatpush.msra.mxu0 %v345
    %1528 = vmatpush.msra.mxu0 %v341
    %1529 = vmatmul.f32.gmra.mxu0 %v1467
    %v1530 = vpop.f32.mrf.mxu0
    %v1531 = vadd.f32 0.0, %v1530
    %1532 = vdwg.mxu0
    %1533 = vmatpush.msra.mxu0 %v402
    %1534 = vmatpush.msra.mxu0 %v398
    %1535 = vmatpush.msra.mxu0 %v394
    %1536 = vmatpush.msra.mxu0 %v390
    %1537 = vmatpush.msra.mxu0 %v386
    %1538 = vmatpush.msra.mxu0 %v382
    %1539 = vmatpush.msra.mxu0 %v378
    %1540 = vmatpush.msra.mxu0 %v374
    %1541 = vmatpush.msra.mxu0 %v370
    %1542 = vmatpush.msra.mxu0 %v366
    %1543 = vmatpush.msra.mxu0 %v362
    %1544 = vmatpush.msra.mxu0 %v358
    %1545 = vmatpush.msra.mxu0 %v354
    %1546 = vmatpush.msra.mxu0 %v350
    %1547 = vmatpush.msra.mxu0 %v346
    %1548 = vmatpush.msra.mxu0 %v342
    %1549 = vmatmul.f32.gmra.mxu0 %v1467
    %v1550 = vpop.f32.mrf.mxu0
    %v1551 = vadd.f32 0.0, %v1550
    %1552 = vdwg.mxu0
    %v1553 = vadd.f32 %v1469, %v1491
    %v1554 = vadd.f32 %v1470, %v1511
    %v1555 = vadd.f32 %v1471, %v1531
    %v1556 = vadd.f32 %v1472, %v1551
    %v1557 = vxor.u32 %v1553, 2147483648
    %v1558 = vmul.f32 %v1557, 1.442695
    %v1559 = vpow.pop %v1558
    %v1560 = vadd.f32 %v1559, 1.0
    %v1561 = vrcp.pop %v1560
    %v1562 = vmul.f32 %v1560, %v1561
    %v1563 = vsub.f32 1.0, %v1562
    %v1564 = vmul.f32 %v1561, %v1563
    %v1565 = vadd.f32 %v1561, %v1564
    %vm1566 = vweird.f32 %v1560
    %vm1567 = vweird.f32 %v1561
    %vm1568 = vmor %vm1566, %vm1567
    %v1569 = vsel %vm1568, %v1561, %v1565
    %v1570 = vand.u32 2147483647, %v1560
    %vm1571 = vcmp.eq.f32.partialorder %v1570, 8.507059e+37
    %v1572 = vand.u32 %v1560, 2147483648
    %v1573 = vor.u32 1.1754944e-38, %v1572
    %v1574 = vsel %vm1571, %v1573, %v1569
    %v1575 = vmul.f32 1.0, %v1574
    %v1576 = vxor.u32 %v1554, 2147483648
    %v1577 = vmul.f32 %v1576, 1.442695
    %v1578 = vpow.pop %v1577
    %v1579 = vadd.f32 %v1578, 1.0
    %v1580 = vrcp.pop %v1579
    %v1581 = vmul.f32 %v1579, %v1580
    %v1582 = vsub.f32 1.0, %v1581
    %v1583 = vmul.f32 %v1580, %v1582
    %v1584 = vadd.f32 %v1580, %v1583
    %vm1585 = vweird.f32 %v1579
    %vm1586 = vweird.f32 %v1580
    %vm1587 = vmor %vm1585, %vm1586
    %v1588 = vsel %vm1587, %v1580, %v1584
    %v1589 = vand.u32 2147483647, %v1579
    %vm1590 = vcmp.eq.f32.partialorder %v1589, 8.507059e+37
    %v1591 = vand.u32 %v1579, 2147483648
    %v1592 = vor.u32 1.1754944e-38, %v1591
    %v1593 = vsel %vm1590, %v1592, %v1588
    %v1594 = vmul.f32 1.0, %v1593
    %v1595 = vtanh.pop %v1555
    %v1596 = vxor.u32 %v1556, 2147483648
    %v1597 = vmul.f32 %v1596, 1.442695
    %v1598 = vpow.pop %v1597
    %v1599 = vadd.f32 %v1598, 1.0
    %v1600 = vrcp.pop %v1599
    %v1601 = vmul.f32 %v1599, %v1600
    %v1602 = vsub.f32 1.0, %v1601
    %v1603 = vmul.f32 %v1600, %v1602
    %v1604 = vadd.f32 %v1600, %v1603
    %vm1605 = vweird.f32 %v1599
    %vm1606 = vweird.f32 %v1600
    %vm1607 = vmor %vm1605, %vm1606
    %v1608 = vsel %vm1607, %v1600, %v1604
    %v1609 = vand.u32 2147483647, %v1599
    %vm1610 = vcmp.eq.f32.partialorder %v1609, 8.507059e+37
    %v1611 = vand.u32 %v1599, 2147483648
    %v1612 = vor.u32 1.1754944e-38, %v1611
    %v1613 = vsel %vm1610, %v1612, %v1608
    %v1614 = vmul.f32 1.0, %v1613
    %v1615 = vmul.f32 %v1594, %v1465
    %v1616 = vmul.f32 %v1575, %v1595
    %v1617 = vadd.f32 %v1615, %v1616
    %v1618 = vtanh.pop %v1617
    %v1619 = vmul.f32 %v1614, %v1618
    %1620 = vst [vmem:[#allocation2 + $0x38] sm:$0xff] %v1619
    %v1621 = vld [vmem:[#allocation2] sm:$0xff]
    %v1622 = vld [vmem:[#allocation2 + $0x8] sm:$0xff]
    %v1623 = vld [vmem:[#allocation2 + $0x10] sm:$0xff]
    %v1624 = vld [vmem:[#allocation2 + $0x18] sm:$0xff]
    %v1625 = vld [vmem:[#allocation2 + $0x20] sm:$0xff]
    %v1626 = vld [vmem:[#allocation2 + $0x28] sm:$0xff]
    %v1627 = vld [vmem:[#allocation2 + $0x30] sm:$0xff]
    %v1628 = vld [vmem:[#allocation2 + $0x38] sm:$0xff]
    %s1629 = scalar_lea.vmem [#allocation4], 512
    %v1630 = vld [vmem:[%s1629] sm:$0xff]
    %v1631 = vld [vmem:[%s1629 + $0x8] sm:$0xff]
    %v1632 = vld [vmem:[%s1629 + $0x10] sm:$0xff]
    %v1633 = vld [vmem:[%s1629 + $0x18] sm:$0xff]
    %v1634 = vld [vmem:[%s1629 + $0x20] sm:$0xff]
    %v1635 = vld [vmem:[%s1629 + $0x28] sm:$0xff]
    %v1636 = vld [vmem:[%s1629 + $0x30] sm:$0xff]
    %v1637 = vld [vmem:[%s1629 + $0x38] sm:$0xff]
    %v1638 = vld [vmem:[%s1629 + $0x40] sm:$0xff]
    %v1639 = vld [vmem:[%s1629 + $0x48] sm:$0xff]
    %v1640 = vld [vmem:[%s1629 + $0x50] sm:$0xff]
    %v1641 = vld [vmem:[%s1629 + $0x58] sm:$0xff]
    %v1642 = vld [vmem:[%s1629 + $0x60] sm:$0xff]
    %v1643 = vld [vmem:[%s1629 + $0x68] sm:$0xff]
    %v1644 = vld [vmem:[%s1629 + $0x70] sm:$0xff]
    %v1645 = vld [vmem:[%s1629 + $0x78] sm:$0xff]
    %v1646 = vld [vmem:[%s1629 + $0x80] sm:$0xff]
    %v1647 = vld [vmem:[%s1629 + $0x88] sm:$0xff]
    %v1648 = vld [vmem:[%s1629 + $0x90] sm:$0xff]
    %v1649 = vld [vmem:[%s1629 + $0x98] sm:$0xff]
    %v1650 = vld [vmem:[%s1629 + $0xa0] sm:$0xff]
    %v1651 = vld [vmem:[%s1629 + $0xa8] sm:$0xff]
    %v1652 = vld [vmem:[%s1629 + $0xb0] sm:$0xff]
    %v1653 = vld [vmem:[%s1629 + $0xb8] sm:$0xff]
    %v1654 = vld [vmem:[%s1629 + $0xc0] sm:$0xff]
    %v1655 = vld [vmem:[%s1629 + $0xc8] sm:$0xff]
    %v1656 = vld [vmem:[%s1629 + $0xd0] sm:$0xff]
    %v1657 = vld [vmem:[%s1629 + $0xd8] sm:$0xff]
    %v1658 = vld [vmem:[%s1629 + $0xe0] sm:$0xff]
    %v1659 = vld [vmem:[%s1629 + $0xe8] sm:$0xff]
    %v1660 = vld [vmem:[%s1629 + $0xf0] sm:$0xff]
    %v1661 = vld [vmem:[%s1629 + $0xf8] sm:$0xff]
    %v1662 = vld [vmem:[%s1629 + $0x100] sm:$0xff]
    %v1663 = vld [vmem:[%s1629 + $0x108] sm:$0xff]
    %v1664 = vld [vmem:[%s1629 + $0x110] sm:$0xff]
    %v1665 = vld [vmem:[%s1629 + $0x118] sm:$0xff]
    %v1666 = vld [vmem:[%s1629 + $0x120] sm:$0xff]
    %v1667 = vld [vmem:[%s1629 + $0x128] sm:$0xff]
    %v1668 = vld [vmem:[%s1629 + $0x130] sm:$0xff]
    %v1669 = vld [vmem:[%s1629 + $0x138] sm:$0xff]
    %v1670 = vld [vmem:[%s1629 + $0x140] sm:$0xff]
    %v1671 = vld [vmem:[%s1629 + $0x148] sm:$0xff]
    %v1672 = vld [vmem:[%s1629 + $0x150] sm:$0xff]
    %v1673 = vld [vmem:[%s1629 + $0x158] sm:$0xff]
    %v1674 = vld [vmem:[%s1629 + $0x160] sm:$0xff]
    %v1675 = vld [vmem:[%s1629 + $0x168] sm:$0xff]
    %v1676 = vld [vmem:[%s1629 + $0x170] sm:$0xff]
    %v1677 = vld [vmem:[%s1629 + $0x178] sm:$0xff]
    %v1678 = vld [vmem:[%s1629 + $0x180] sm:$0xff]
    %v1679 = vld [vmem:[%s1629 + $0x188] sm:$0xff]
    %v1680 = vld [vmem:[%s1629 + $0x190] sm:$0xff]
    %v1681 = vld [vmem:[%s1629 + $0x198] sm:$0xff]
    %v1682 = vld [vmem:[%s1629 + $0x1a0] sm:$0xff]
    %v1683 = vld [vmem:[%s1629 + $0x1a8] sm:$0xff]
    %v1684 = vld [vmem:[%s1629 + $0x1b0] sm:$0xff]
    %v1685 = vld [vmem:[%s1629 + $0x1b8] sm:$0xff]
    %v1686 = vld [vmem:[%s1629 + $0x1c0] sm:$0xff]
    %v1687 = vld [vmem:[%s1629 + $0x1c8] sm:$0xff]
    %v1688 = vld [vmem:[%s1629 + $0x1d0] sm:$0xff]
    %v1689 = vld [vmem:[%s1629 + $0x1d8] sm:$0xff]
    %v1690 = vld [vmem:[%s1629 + $0x1e0] sm:$0xff]
    %v1691 = vld [vmem:[%s1629 + $0x1e8] sm:$0xff]
    %v1692 = vld [vmem:[%s1629 + $0x1f0] sm:$0xff]
    %v1693 = vld [vmem:[%s1629 + $0x1f8] sm:$0xff]
    %s1694 = scalar_lea.vmem %s5, 4
    %v1695 = vld [vmem:[%s1694] sm:$0xf]
    %v1697 = vperm.slane %v1695, 0
    %v1698 = vperm.slane %v1695, 1
    %v1699 = vperm.slane %v1695, 2
    %v1700 = vperm.slane %v1695, 3
    %1705 = vmatpush.msra.mxu0 %v1690
    %1706 = vmatpush.msra.mxu0 %v1686
    %1707 = vmatpush.msra.mxu0 %v1682
    %1708 = vmatpush.msra.mxu0 %v1678
    %1709 = vmatpush.msra.mxu0 %v1674
    %1710 = vmatpush.msra.mxu0 %v1670
    %1711 = vmatpush.msra.mxu0 %v1666
    %1712 = vmatpush.msra.mxu0 %v1662
    %1713 = vmatpush.msra.mxu0 %v1658
    %1714 = vmatpush.msra.mxu0 %v1654
    %1715 = vmatpush.msra.mxu0 %v1650
    %1716 = vmatpush.msra.mxu0 %v1646
    %1717 = vmatpush.msra.mxu0 %v1642
    %1718 = vmatpush.msra.mxu0 %v1638
    %1719 = vmatpush.msra.mxu0 %v1634
    %1720 = vmatpush.msra.mxu0 %v1630
    %1721 = vmatmul.f32.gmra.mxu0 %v1621
    %v1722 = vpop.f32.mrf.mxu0
    %v1723 = vadd.f32 %v1697, %v1722
    %1724 = vmatmul.f32.gmra.mxu0 %v1622
    %v1725 = vpop.f32.mrf.mxu0
    %v1726 = vadd.f32 %v1697, %v1725
    %1727 = vmatmul.f32.gmra.mxu0 %v1623
    %v1728 = vpop.f32.mrf.mxu0
    %v1729 = vadd.f32 %v1697, %v1728
    %1730 = vmatmul.f32.gmra.mxu0 %v1624
    %v1731 = vpop.f32.mrf.mxu0
    %v1732 = vadd.f32 %v1697, %v1731
    %1733 = vmatmul.f32.gmra.mxu0 %v1625
    %v1734 = vpop.f32.mrf.mxu0
    %v1735 = vadd.f32 %v1697, %v1734
    %1736 = vmatmul.f32.gmra.mxu0 %v1626
    %v1737 = vpop.f32.mrf.mxu0
    %v1738 = vadd.f32 %v1697, %v1737
    %1739 = vmatmul.f32.gmra.mxu0 %v1627
    %v1740 = vpop.f32.mrf.mxu0
    %v1741 = vadd.f32 %v1697, %v1740
    %1742 = vmatmul.f32.gmra.mxu0 %v1628
    %v1743 = vpop.f32.mrf.mxu0
    %v1744 = vadd.f32 %v1697, %v1743
    %1745 = vdwg.mxu0
    %1746 = vmatpush.msra.mxu0 %v1691
    %1747 = vmatpush.msra.mxu0 %v1687
    %1748 = vmatpush.msra.mxu0 %v1683
    %1749 = vmatpush.msra.mxu0 %v1679
    %1750 = vmatpush.msra.mxu0 %v1675
    %1751 = vmatpush.msra.mxu0 %v1671
    %1752 = vmatpush.msra.mxu0 %v1667
    %1753 = vmatpush.msra.mxu0 %v1663
    %1754 = vmatpush.msra.mxu0 %v1659
    %1755 = vmatpush.msra.mxu0 %v1655
    %1756 = vmatpush.msra.mxu0 %v1651
    %1757 = vmatpush.msra.mxu0 %v1647
    %1758 = vmatpush.msra.mxu0 %v1643
    %1759 = vmatpush.msra.mxu0 %v1639
    %1760 = vmatpush.msra.mxu0 %v1635
    %1761 = vmatpush.msra.mxu0 %v1631
    %1762 = vmatmul.f32.gmra.mxu0 %v1621
    %v1763 = vpop.f32.mrf.mxu0
    %v1764 = vadd.f32 %v1698, %v1763
    %1765 = vmatmul.f32.gmra.mxu0 %v1622
    %v1766 = vpop.f32.mrf.mxu0
    %v1767 = vadd.f32 %v1698, %v1766
    %1768 = vmatmul.f32.gmra.mxu0 %v1623
    %v1769 = vpop.f32.mrf.mxu0
    %v1770 = vadd.f32 %v1698, %v1769
    %1771 = vmatmul.f32.gmra.mxu0 %v1624
    %v1772 = vpop.f32.mrf.mxu0
    %v1773 = vadd.f32 %v1698, %v1772
    %1774 = vmatmul.f32.gmra.mxu0 %v1625
    %v1775 = vpop.f32.mrf.mxu0
    %v1776 = vadd.f32 %v1698, %v1775
    %1777 = vmatmul.f32.gmra.mxu0 %v1626
    %v1778 = vpop.f32.mrf.mxu0
    %v1779 = vadd.f32 %v1698, %v1778
    %1780 = vmatmul.f32.gmra.mxu0 %v1627
    %v1781 = vpop.f32.mrf.mxu0
    %v1782 = vadd.f32 %v1698, %v1781
    %1783 = vmatmul.f32.gmra.mxu0 %v1628
    %v1784 = vpop.f32.mrf.mxu0
    %v1785 = vadd.f32 %v1698, %v1784
    %1786 = vdwg.mxu0
    %1787 = vmatpush.msra.mxu0 %v1692
    %1788 = vmatpush.msra.mxu0 %v1688
    %1789 = vmatpush.msra.mxu0 %v1684
    %1790 = vmatpush.msra.mxu0 %v1680
    %1791 = vmatpush.msra.mxu0 %v1676
    %1792 = vmatpush.msra.mxu0 %v1672
    %1793 = vmatpush.msra.mxu0 %v1668
    %1794 = vmatpush.msra.mxu0 %v1664
    %1795 = vmatpush.msra.mxu0 %v1660
    %1796 = vmatpush.msra.mxu0 %v1656
    %1797 = vmatpush.msra.mxu0 %v1652
    %1798 = vmatpush.msra.mxu0 %v1648
    %1799 = vmatpush.msra.mxu0 %v1644
    %1800 = vmatpush.msra.mxu0 %v1640
    %1801 = vmatpush.msra.mxu0 %v1636
    %1802 = vmatpush.msra.mxu0 %v1632
    %1803 = vmatmul.f32.gmra.mxu0 %v1621
    %v1804 = vpop.f32.mrf.mxu0
    %v1805 = vadd.f32 %v1699, %v1804
    %1806 = vmatmul.f32.gmra.mxu0 %v1622
    %v1807 = vpop.f32.mrf.mxu0
    %v1808 = vadd.f32 %v1699, %v1807
    %1809 = vmatmul.f32.gmra.mxu0 %v1623
    %v1810 = vpop.f32.mrf.mxu0
    %v1811 = vadd.f32 %v1699, %v1810
    %1812 = vmatmul.f32.gmra.mxu0 %v1624
    %v1813 = vpop.f32.mrf.mxu0
    %v1814 = vadd.f32 %v1699, %v1813
    %1815 = vmatmul.f32.gmra.mxu0 %v1625
    %v1816 = vpop.f32.mrf.mxu0
    %v1817 = vadd.f32 %v1699, %v1816
    %1818 = vmatmul.f32.gmra.mxu0 %v1626
    %v1819 = vpop.f32.mrf.mxu0
    %v1820 = vadd.f32 %v1699, %v1819
    %1821 = vmatmul.f32.gmra.mxu0 %v1627
    %v1822 = vpop.f32.mrf.mxu0
    %v1823 = vadd.f32 %v1699, %v1822
    %1824 = vmatmul.f32.gmra.mxu0 %v1628
    %v1825 = vpop.f32.mrf.mxu0
    %v1826 = vadd.f32 %v1699, %v1825
    %1827 = vdwg.mxu0
    %1828 = vmatpush.msra.mxu0 %v1693
    %1829 = vmatpush.msra.mxu0 %v1689
    %1830 = vmatpush.msra.mxu0 %v1685
    %1831 = vmatpush.msra.mxu0 %v1681
    %1832 = vmatpush.msra.mxu0 %v1677
    %1833 = vmatpush.msra.mxu0 %v1673
    %1834 = vmatpush.msra.mxu0 %v1669
    %1835 = vmatpush.msra.mxu0 %v1665
    %1836 = vmatpush.msra.mxu0 %v1661
    %1837 = vmatpush.msra.mxu0 %v1657
    %1838 = vmatpush.msra.mxu0 %v1653
    %1839 = vmatpush.msra.mxu0 %v1649
    %1840 = vmatpush.msra.mxu0 %v1645
    %1841 = vmatpush.msra.mxu0 %v1641
    %1842 = vmatpush.msra.mxu0 %v1637
    %1843 = vmatpush.msra.mxu0 %v1633
    %1844 = vmatmul.f32.gmra.mxu0 %v1621
    %v1845 = vpop.f32.mrf.mxu0
    %v1846 = vadd.f32 %v1700, %v1845
    %1847 = vmatmul.f32.gmra.mxu0 %v1622
    %v1848 = vpop.f32.mrf.mxu0
    %v1849 = vadd.f32 %v1700, %v1848
    %1850 = vmatmul.f32.gmra.mxu0 %v1623
    %v1851 = vpop.f32.mrf.mxu0
    %v1852 = vadd.f32 %v1700, %v1851
    %1853 = vmatmul.f32.gmra.mxu0 %v1624
    %v1854 = vpop.f32.mrf.mxu0
    %v1855 = vadd.f32 %v1700, %v1854
    %1856 = vmatmul.f32.gmra.mxu0 %v1625
    %v1857 = vpop.f32.mrf.mxu0
    %v1858 = vadd.f32 %v1700, %v1857
    %1859 = vmatmul.f32.gmra.mxu0 %v1626
    %v1860 = vpop.f32.mrf.mxu0
    %v1861 = vadd.f32 %v1700, %v1860
    %1862 = vmatmul.f32.gmra.mxu0 %v1627
    %v1863 = vpop.f32.mrf.mxu0
    %v1864 = vadd.f32 %v1700, %v1863
    %1865 = vmatmul.f32.gmra.mxu0 %v1628
    %v1866 = vpop.f32.mrf.mxu0
    %v1867 = vadd.f32 %v1700, %v1866
    %1868 = vdwg.mxu0
    %1869 = vst [vmem:[#allocation3] sm:$0xff] %v1723
    %1870 = vst [vmem:[#allocation3 + $0x8] sm:$0xff] %v1764
    %1871 = vst [vmem:[#allocation3 + $0x10] sm:$0xff] %v1805
    %1872 = vst [vmem:[#allocation3 + $0x18] sm:$0xff] %v1846
    %1873 = vst [vmem:[#allocation3 + $0x20] sm:$0xff] %v1726
    %1874 = vst [vmem:[#allocation3 + $0x28] sm:$0xff] %v1767
    %1875 = vst [vmem:[#allocation3 + $0x30] sm:$0xff] %v1808
    %1876 = vst [vmem:[#allocation3 + $0x38] sm:$0xff] %v1849
    %1877 = vst [vmem:[#allocation3 + $0x40] sm:$0xff] %v1729
    %1878 = vst [vmem:[#allocation3 + $0x48] sm:$0xff] %v1770
    %1879 = vst [vmem:[#allocation3 + $0x50] sm:$0xff] %v1811
    %1880 = vst [vmem:[#allocation3 + $0x58] sm:$0xff] %v1852
    %1881 = vst [vmem:[#allocation3 + $0x60] sm:$0xff] %v1732
    %1882 = vst [vmem:[#allocation3 + $0x68] sm:$0xff] %v1773
    %1883 = vst [vmem:[#allocation3 + $0x70] sm:$0xff] %v1814
    %1884 = vst [vmem:[#allocation3 + $0x78] sm:$0xff] %v1855
    %1885 = vst [vmem:[#allocation3 + $0x80] sm:$0xff] %v1735
    %1886 = vst [vmem:[#allocation3 + $0x88] sm:$0xff] %v1776
    %1887 = vst [vmem:[#allocation3 + $0x90] sm:$0xff] %v1817
    %1888 = vst [vmem:[#allocation3 + $0x98] sm:$0xff] %v1858
    %1889 = vst [vmem:[#allocation3 + $0xa0] sm:$0xff] %v1738
    %1890 = vst [vmem:[#allocation3 + $0xa8] sm:$0xff] %v1779
    %1891 = vst [vmem:[#allocation3 + $0xb0] sm:$0xff] %v1820
    %1892 = vst [vmem:[#allocation3 + $0xb8] sm:$0xff] %v1861
    %1893 = vst [vmem:[#allocation3 + $0xc0] sm:$0xff] %v1741
    %1894 = vst [vmem:[#allocation3 + $0xc8] sm:$0xff] %v1782
    %1895 = vst [vmem:[#allocation3 + $0xd0] sm:$0xff] %v1823
    %1896 = vst [vmem:[#allocation3 + $0xd8] sm:$0xff] %v1864
    %1897 = vst [vmem:[#allocation3 + $0xe0] sm:$0xff] %v1744
    %1898 = vst [vmem:[#allocation3 + $0xe8] sm:$0xff] %v1785
    %1899 = vst [vmem:[#allocation3 + $0xf0] sm:$0xff] %v1826
    %1900 = vst [vmem:[#allocation3 + $0xf8] sm:$0xff] %v1867
    %s1901 = scalar_lea.vmem [#allocation6], 512
    %v1902 = vld [vmem:[%s1901] sm:$0xff]
    %v1903 = vld [vmem:[%s1901 + $0x8] sm:$0xff]
    %v1904 = vld [vmem:[%s1901 + $0x10] sm:$0xff]
    %v1905 = vld [vmem:[%s1901 + $0x18] sm:$0xff]
    %v1906 = vld [vmem:[%s1901 + $0x20] sm:$0xff]
    %v1907 = vld [vmem:[%s1901 + $0x28] sm:$0xff]
    %v1908 = vld [vmem:[%s1901 + $0x30] sm:$0xff]
    %v1909 = vld [vmem:[%s1901 + $0x38] sm:$0xff]
    %v1910 = vld [vmem:[%s1901 + $0x40] sm:$0xff]
    %v1911 = vld [vmem:[%s1901 + $0x48] sm:$0xff]
    %v1912 = vld [vmem:[%s1901 + $0x50] sm:$0xff]
    %v1913 = vld [vmem:[%s1901 + $0x58] sm:$0xff]
    %v1914 = vld [vmem:[%s1901 + $0x60] sm:$0xff]
    %v1915 = vld [vmem:[%s1901 + $0x68] sm:$0xff]
    %v1916 = vld [vmem:[%s1901 + $0x70] sm:$0xff]
    %v1917 = vld [vmem:[%s1901 + $0x78] sm:$0xff]
    %v1918 = vld [vmem:[%s1901 + $0x80] sm:$0xff]
    %v1919 = vld [vmem:[%s1901 + $0x88] sm:$0xff]
    %v1920 = vld [vmem:[%s1901 + $0x90] sm:$0xff]
    %v1921 = vld [vmem:[%s1901 + $0x98] sm:$0xff]
    %v1922 = vld [vmem:[%s1901 + $0xa0] sm:$0xff]
    %v1923 = vld [vmem:[%s1901 + $0xa8] sm:$0xff]
    %v1924 = vld [vmem:[%s1901 + $0xb0] sm:$0xff]
    %v1925 = vld [vmem:[%s1901 + $0xb8] sm:$0xff]
    %v1926 = vld [vmem:[%s1901 + $0xc0] sm:$0xff]
    %v1927 = vld [vmem:[%s1901 + $0xc8] sm:$0xff]
    %v1928 = vld [vmem:[%s1901 + $0xd0] sm:$0xff]
    %v1929 = vld [vmem:[%s1901 + $0xd8] sm:$0xff]
    %v1930 = vld [vmem:[%s1901 + $0xe0] sm:$0xff]
    %v1931 = vld [vmem:[%s1901 + $0xe8] sm:$0xff]
    %v1932 = vld [vmem:[%s1901 + $0xf0] sm:$0xff]
    %v1933 = vld [vmem:[%s1901 + $0xf8] sm:$0xff]
    %v1934 = vld [vmem:[%s1901 + $0x100] sm:$0xff]
    %v1935 = vld [vmem:[%s1901 + $0x108] sm:$0xff]
    %v1936 = vld [vmem:[%s1901 + $0x110] sm:$0xff]
    %v1937 = vld [vmem:[%s1901 + $0x118] sm:$0xff]
    %v1938 = vld [vmem:[%s1901 + $0x120] sm:$0xff]
    %v1939 = vld [vmem:[%s1901 + $0x128] sm:$0xff]
    %v1940 = vld [vmem:[%s1901 + $0x130] sm:$0xff]
    %v1941 = vld [vmem:[%s1901 + $0x138] sm:$0xff]
    %v1942 = vld [vmem:[%s1901 + $0x140] sm:$0xff]
    %v1943 = vld [vmem:[%s1901 + $0x148] sm:$0xff]
    %v1944 = vld [vmem:[%s1901 + $0x150] sm:$0xff]
    %v1945 = vld [vmem:[%s1901 + $0x158] sm:$0xff]
    %v1946 = vld [vmem:[%s1901 + $0x160] sm:$0xff]
    %v1947 = vld [vmem:[%s1901 + $0x168] sm:$0xff]
    %v1948 = vld [vmem:[%s1901 + $0x170] sm:$0xff]
    %v1949 = vld [vmem:[%s1901 + $0x178] sm:$0xff]
    %v1950 = vld [vmem:[%s1901 + $0x180] sm:$0xff]
    %v1951 = vld [vmem:[%s1901 + $0x188] sm:$0xff]
    %v1952 = vld [vmem:[%s1901 + $0x190] sm:$0xff]
    %v1953 = vld [vmem:[%s1901 + $0x198] sm:$0xff]
    %v1954 = vld [vmem:[%s1901 + $0x1a0] sm:$0xff]
    %v1955 = vld [vmem:[%s1901 + $0x1a8] sm:$0xff]
    %v1956 = vld [vmem:[%s1901 + $0x1b0] sm:$0xff]
    %v1957 = vld [vmem:[%s1901 + $0x1b8] sm:$0xff]
    %v1958 = vld [vmem:[%s1901 + $0x1c0] sm:$0xff]
    %v1959 = vld [vmem:[%s1901 + $0x1c8] sm:$0xff]
    %v1960 = vld [vmem:[%s1901 + $0x1d0] sm:$0xff]
    %v1961 = vld [vmem:[%s1901 + $0x1d8] sm:$0xff]
    %v1962 = vld [vmem:[%s1901 + $0x1e0] sm:$0xff]
    %v1963 = vld [vmem:[%s1901 + $0x1e8] sm:$0xff]
    %v1964 = vld [vmem:[%s1901 + $0x1f0] sm:$0xff]
    %v1965 = vld [vmem:[%s1901 + $0x1f8] sm:$0xff]
    %s1966 = scalar_lea.vmem %s1, 8
    %v1967 = vld [vmem:[%s1966] sm:$0xff]
    %s1968 = scalar_lea.vmem %s2, 8
    %v1969 = vld [vmem:[%s1968] sm:$0xff]
    %v1970 = vld [vmem:[#allocation3] sm:$0xff]
    %v1971 = vld [vmem:[#allocation3 + $0x8] sm:$0xff]
    %v1972 = vld [vmem:[#allocation3 + $0x10] sm:$0xff]
    %v1973 = vld [vmem:[#allocation3 + $0x18] sm:$0xff]
    %1974 = vmatpush.msra.mxu0 %v1962
    %1975 = vmatpush.msra.mxu0 %v1958
    %1976 = vmatpush.msra.mxu0 %v1954
    %1977 = vmatpush.msra.mxu0 %v1950
    %1978 = vmatpush.msra.mxu0 %v1946
    %1979 = vmatpush.msra.mxu0 %v1942
    %1980 = vmatpush.msra.mxu0 %v1938
    %1981 = vmatpush.msra.mxu0 %v1934
    %1982 = vmatpush.msra.mxu0 %v1930
    %1983 = vmatpush.msra.mxu0 %v1926
    %1984 = vmatpush.msra.mxu0 %v1922
    %1985 = vmatpush.msra.mxu0 %v1918
    %1986 = vmatpush.msra.mxu0 %v1914
    %1987 = vmatpush.msra.mxu0 %v1910
    %1988 = vmatpush.msra.mxu0 %v1906
    %1989 = vmatpush.msra.mxu0 %v1902
    %1990 = vmatmul.f32.gmra.mxu0 %v1967
    %v1991 = vpop.f32.mrf.mxu0
    %v1992 = vadd.f32 0.0, %v1991
    %1993 = vdwg.mxu0
    %1994 = vmatpush.msra.mxu0 %v1963
    %1995 = vmatpush.msra.mxu0 %v1959
    %1996 = vmatpush.msra.mxu0 %v1955
    %1997 = vmatpush.msra.mxu0 %v1951
    %1998 = vmatpush.msra.mxu0 %v1947
    %1999 = vmatpush.msra.mxu0 %v1943
    %2000 = vmatpush.msra.mxu0 %v1939
    %2001 = vmatpush.msra.mxu0 %v1935
    %2002 = vmatpush.msra.mxu0 %v1931
    %2003 = vmatpush.msra.mxu0 %v1927
    %2004 = vmatpush.msra.mxu0 %v1923
    %2005 = vmatpush.msra.mxu0 %v1919
    %2006 = vmatpush.msra.mxu0 %v1915
    %2007 = vmatpush.msra.mxu0 %v1911
    %2008 = vmatpush.msra.mxu0 %v1907
    %2009 = vmatpush.msra.mxu0 %v1903
    %2010 = vmatmul.f32.gmra.mxu0 %v1967
    %v2011 = vpop.f32.mrf.mxu0
    %v2012 = vadd.f32 0.0, %v2011
    %2013 = vdwg.mxu0
    %2014 = vmatpush.msra.mxu0 %v1964
    %2015 = vmatpush.msra.mxu0 %v1960
    %2016 = vmatpush.msra.mxu0 %v1956
    %2017 = vmatpush.msra.mxu0 %v1952
    %2018 = vmatpush.msra.mxu0 %v1948
    %2019 = vmatpush.msra.mxu0 %v1944
    %2020 = vmatpush.msra.mxu0 %v1940
    %2021 = vmatpush.msra.mxu0 %v1936
    %2022 = vmatpush.msra.mxu0 %v1932
    %2023 = vmatpush.msra.mxu0 %v1928
    %2024 = vmatpush.msra.mxu0 %v1924
    %2025 = vmatpush.msra.mxu0 %v1920
    %2026 = vmatpush.msra.mxu0 %v1916
    %2027 = vmatpush.msra.mxu0 %v1912
    %2028 = vmatpush.msra.mxu0 %v1908
    %2029 = vmatpush.msra.mxu0 %v1904
    %2030 = vmatmul.f32.gmra.mxu0 %v1967
    %v2031 = vpop.f32.mrf.mxu0
    %v2032 = vadd.f32 0.0, %v2031
    %2033 = vdwg.mxu0
    %2034 = vmatpush.msra.mxu0 %v1965
    %2035 = vmatpush.msra.mxu0 %v1961
    %2036 = vmatpush.msra.mxu0 %v1957
    %2037 = vmatpush.msra.mxu0 %v1953
    %2038 = vmatpush.msra.mxu0 %v1949
    %2039 = vmatpush.msra.mxu0 %v1945
    %2040 = vmatpush.msra.mxu0 %v1941
    %2041 = vmatpush.msra.mxu0 %v1937
    %2042 = vmatpush.msra.mxu0 %v1933
    %2043 = vmatpush.msra.mxu0 %v1929
    %2044 = vmatpush.msra.mxu0 %v1925
    %2045 = vmatpush.msra.mxu0 %v1921
    %2046 = vmatpush.msra.mxu0 %v1917
    %2047 = vmatpush.msra.mxu0 %v1913
    %2048 = vmatpush.msra.mxu0 %v1909
    %2049 = vmatpush.msra.mxu0 %v1905
    %2050 = vmatmul.f32.gmra.mxu0 %v1967
    %v2051 = vpop.f32.mrf.mxu0
    %v2052 = vadd.f32 0.0, %v2051
    %2053 = vdwg.mxu0
    %v2054 = vadd.f32 %v1970, %v1992
    %v2055 = vadd.f32 %v1971, %v2012
    %v2056 = vadd.f32 %v1972, %v2032
    %v2057 = vadd.f32 %v1973, %v2052
    %v2058 = vxor.u32 %v2054, 2147483648
    %v2059 = vmul.f32 %v2058, 1.442695
    %v2060 = vpow.pop %v2059
    %v2061 = vadd.f32 %v2060, 1.0
    %v2062 = vrcp.pop %v2061
    %v2063 = vmul.f32 %v2061, %v2062
    %v2064 = vsub.f32 1.0, %v2063
    %v2065 = vmul.f32 %v2062, %v2064
    %v2066 = vadd.f32 %v2062, %v2065
    %vm2067 = vweird.f32 %v2061
    %vm2068 = vweird.f32 %v2062
    %vm2069 = vmor %vm2067, %vm2068
    %v2070 = vsel %vm2069, %v2062, %v2066
    %v2071 = vand.u32 2147483647, %v2061
    %vm2072 = vcmp.eq.f32.partialorder %v2071, 8.507059e+37
    %v2073 = vand.u32 %v2061, 2147483648
    %v2074 = vor.u32 1.1754944e-38, %v2073
    %v2075 = vsel %vm2072, %v2074, %v2070
    %v2076 = vmul.f32 1.0, %v2075
    %v2077 = vxor.u32 %v2055, 2147483648
    %v2078 = vmul.f32 %v2077, 1.442695
    %v2079 = vpow.pop %v2078
    %v2080 = vadd.f32 %v2079, 1.0
    %v2081 = vrcp.pop %v2080
    %v2082 = vmul.f32 %v2080, %v2081
    %v2083 = vsub.f32 1.0, %v2082
    %v2084 = vmul.f32 %v2081, %v2083
    %v2085 = vadd.f32 %v2081, %v2084
    %vm2086 = vweird.f32 %v2080
    %vm2087 = vweird.f32 %v2081
    %vm2088 = vmor %vm2086, %vm2087
    %v2089 = vsel %vm2088, %v2081, %v2085
    %v2090 = vand.u32 2147483647, %v2080
    %vm2091 = vcmp.eq.f32.partialorder %v2090, 8.507059e+37
    %v2092 = vand.u32 %v2080, 2147483648
    %v2093 = vor.u32 1.1754944e-38, %v2092
    %v2094 = vsel %vm2091, %v2093, %v2089
    %v2095 = vmul.f32 1.0, %v2094
    %v2096 = vtanh.pop %v2056
    %v2097 = vxor.u32 %v2057, 2147483648
    %v2098 = vmul.f32 %v2097, 1.442695
    %v2099 = vpow.pop %v2098
    %v2100 = vadd.f32 %v2099, 1.0
    %v2101 = vrcp.pop %v2100
    %v2102 = vmul.f32 %v2100, %v2101
    %v2103 = vsub.f32 1.0, %v2102
    %v2104 = vmul.f32 %v2101, %v2103
    %v2105 = vadd.f32 %v2101, %v2104
    %vm2106 = vweird.f32 %v2100
    %vm2107 = vweird.f32 %v2101
    %vm2108 = vmor %vm2106, %vm2107
    %v2109 = vsel %vm2108, %v2101, %v2105
    %v2110 = vand.u32 2147483647, %v2100
    %vm2111 = vcmp.eq.f32.partialorder %v2110, 8.507059e+37
    %v2112 = vand.u32 %v2100, 2147483648
    %v2113 = vor.u32 1.1754944e-38, %v2112
    %v2114 = vsel %vm2111, %v2113, %v2109
    %v2115 = vmul.f32 1.0, %v2114
    %v2116 = vmul.f32 %v2095, %v1969
    %v2117 = vmul.f32 %v2076, %v2096
    %v2118 = vadd.f32 %v2116, %v2117
    %v2119 = vtanh.pop %v2118
    %v2120 = vmul.f32 %v2115, %v2119
    %v2121 = vld [vmem:[#allocation3 + $0x20] sm:$0xff]
    %v2122 = vld [vmem:[#allocation3 + $0x28] sm:$0xff]
    %v2123 = vld [vmem:[#allocation3 + $0x30] sm:$0xff]
    %v2124 = vld [vmem:[#allocation3 + $0x38] sm:$0xff]
    %2125 = vmatpush.msra.mxu0 %v1962
    %2126 = vmatpush.msra.mxu0 %v1958
    %2127 = vmatpush.msra.mxu0 %v1954
    %2128 = vmatpush.msra.mxu0 %v1950
    %2129 = vmatpush.msra.mxu0 %v1946
    %2130 = vmatpush.msra.mxu0 %v1942
    %2131 = vmatpush.msra.mxu0 %v1938
    %2132 = vmatpush.msra.mxu0 %v1934
    %2133 = vmatpush.msra.mxu0 %v1930
    %2134 = vmatpush.msra.mxu0 %v1926
    %2135 = vmatpush.msra.mxu0 %v1922
    %2136 = vmatpush.msra.mxu0 %v1918
    %2137 = vmatpush.msra.mxu0 %v1914
    %2138 = vmatpush.msra.mxu0 %v1910
    %2139 = vmatpush.msra.mxu0 %v1906
    %2140 = vmatpush.msra.mxu0 %v1902
    %2141 = vmatmul.f32.gmra.mxu0 %v2120
    %v2142 = vpop.f32.mrf.mxu0
    %v2143 = vadd.f32 0.0, %v2142
    %2144 = vdwg.mxu0
    %2145 = vmatpush.msra.mxu0 %v1963
    %2146 = vmatpush.msra.mxu0 %v1959
    %2147 = vmatpush.msra.mxu0 %v1955
    %2148 = vmatpush.msra.mxu0 %v1951
    %2149 = vmatpush.msra.mxu0 %v1947
    %2150 = vmatpush.msra.mxu0 %v1943
    %2151 = vmatpush.msra.mxu0 %v1939
    %2152 = vmatpush.msra.mxu0 %v1935
    %2153 = vmatpush.msra.mxu0 %v1931
    %2154 = vmatpush.msra.mxu0 %v1927
    %2155 = vmatpush.msra.mxu0 %v1923
    %2156 = vmatpush.msra.mxu0 %v1919
    %2157 = vmatpush.msra.mxu0 %v1915
    %2158 = vmatpush.msra.mxu0 %v1911
    %2159 = vmatpush.msra.mxu0 %v1907
    %2160 = vmatpush.msra.mxu0 %v1903
    %2161 = vmatmul.f32.gmra.mxu0 %v2120
    %v2162 = vpop.f32.mrf.mxu0
    %v2163 = vadd.f32 0.0, %v2162
    %2164 = vdwg.mxu0
    %2165 = vmatpush.msra.mxu0 %v1964
    %2166 = vmatpush.msra.mxu0 %v1960
    %2167 = vmatpush.msra.mxu0 %v1956
    %2168 = vmatpush.msra.mxu0 %v1952
    %2169 = vmatpush.msra.mxu0 %v1948
    %2170 = vmatpush.msra.mxu0 %v1944
    %2171 = vmatpush.msra.mxu0 %v1940
    %2172 = vmatpush.msra.mxu0 %v1936
    %2173 = vmatpush.msra.mxu0 %v1932
    %2174 = vmatpush.msra.mxu0 %v1928
    %2175 = vmatpush.msra.mxu0 %v1924
    %2176 = vmatpush.msra.mxu0 %v1920
    %2177 = vmatpush.msra.mxu0 %v1916
    %2178 = vmatpush.msra.mxu0 %v1912
    %2179 = vmatpush.msra.mxu0 %v1908
    %2180 = vmatpush.msra.mxu0 %v1904
    %2181 = vmatmul.f32.gmra.mxu0 %v2120
    %v2182 = vpop.f32.mrf.mxu0
    %v2183 = vadd.f32 0.0, %v2182
    %2184 = vdwg.mxu0
    %2185 = vmatpush.msra.mxu0 %v1965
    %2186 = vmatpush.msra.mxu0 %v1961
    %2187 = vmatpush.msra.mxu0 %v1957
    %2188 = vmatpush.msra.mxu0 %v1953
    %2189 = vmatpush.msra.mxu0 %v1949
    %2190 = vmatpush.msra.mxu0 %v1945
    %2191 = vmatpush.msra.mxu0 %v1941
    %2192 = vmatpush.msra.mxu0 %v1937
    %2193 = vmatpush.msra.mxu0 %v1933
    %2194 = vmatpush.msra.mxu0 %v1929
    %2195 = vmatpush.msra.mxu0 %v1925
    %2196 = vmatpush.msra.mxu0 %v1921
    %2197 = vmatpush.msra.mxu0 %v1917
    %2198 = vmatpush.msra.mxu0 %v1913
    %2199 = vmatpush.msra.mxu0 %v1909
    %2200 = vmatpush.msra.mxu0 %v1905
    %2201 = vmatmul.f32.gmra.mxu0 %v2120
    %v2202 = vpop.f32.mrf.mxu0
    %v2203 = vadd.f32 0.0, %v2202
    %2204 = vdwg.mxu0
    %v2205 = vadd.f32 %v2121, %v2143
    %v2206 = vadd.f32 %v2122, %v2163
    %v2207 = vadd.f32 %v2123, %v2183
    %v2208 = vadd.f32 %v2124, %v2203
    %v2209 = vxor.u32 %v2205, 2147483648
    %v2210 = vmul.f32 %v2209, 1.442695
    %v2211 = vpow.pop %v2210
    %v2212 = vadd.f32 %v2211, 1.0
    %v2213 = vrcp.pop %v2212
    %v2214 = vmul.f32 %v2212, %v2213
    %v2215 = vsub.f32 1.0, %v2214
    %v2216 = vmul.f32 %v2213, %v2215
    %v2217 = vadd.f32 %v2213, %v2216
    %vm2218 = vweird.f32 %v2212
    %vm2219 = vweird.f32 %v2213
    %vm2220 = vmor %vm2218, %vm2219
    %v2221 = vsel %vm2220, %v2213, %v2217
    %v2222 = vand.u32 2147483647, %v2212
    %vm2223 = vcmp.eq.f32.partialorder %v2222, 8.507059e+37
    %v2224 = vand.u32 %v2212, 2147483648
    %v2225 = vor.u32 1.1754944e-38, %v2224
    %v2226 = vsel %vm2223, %v2225, %v2221
    %v2227 = vmul.f32 1.0, %v2226
    %v2228 = vxor.u32 %v2206, 2147483648
    %v2229 = vmul.f32 %v2228, 1.442695
    %v2230 = vpow.pop %v2229
    %v2231 = vadd.f32 %v2230, 1.0
    %v2232 = vrcp.pop %v2231
    %v2233 = vmul.f32 %v2231, %v2232
    %v2234 = vsub.f32 1.0, %v2233
    %v2235 = vmul.f32 %v2232, %v2234
    %v2236 = vadd.f32 %v2232, %v2235
    %vm2237 = vweird.f32 %v2231
    %vm2238 = vweird.f32 %v2232
    %vm2239 = vmor %vm2237, %vm2238
    %v2240 = vsel %vm2239, %v2232, %v2236
    %v2241 = vand.u32 2147483647, %v2231
    %vm2242 = vcmp.eq.f32.partialorder %v2241, 8.507059e+37
    %v2243 = vand.u32 %v2231, 2147483648
    %v2244 = vor.u32 1.1754944e-38, %v2243
    %v2245 = vsel %vm2242, %v2244, %v2240
    %v2246 = vmul.f32 1.0, %v2245
    %v2247 = vtanh.pop %v2207
    %v2248 = vxor.u32 %v2208, 2147483648
    %v2249 = vmul.f32 %v2248, 1.442695
    %v2250 = vpow.pop %v2249
    %v2251 = vadd.f32 %v2250, 1.0
    %v2252 = vrcp.pop %v2251
    %v2253 = vmul.f32 %v2251, %v2252
    %v2254 = vsub.f32 1.0, %v2253
    %v2255 = vmul.f32 %v2252, %v2254
    %v2256 = vadd.f32 %v2252, %v2255
    %vm2257 = vweird.f32 %v2251
    %vm2258 = vweird.f32 %v2252
    %vm2259 = vmor %vm2257, %vm2258
    %v2260 = vsel %vm2259, %v2252, %v2256
    %v2261 = vand.u32 2147483647, %v2251
    %vm2262 = vcmp.eq.f32.partialorder %v2261, 8.507059e+37
    %v2263 = vand.u32 %v2251, 2147483648
    %v2264 = vor.u32 1.1754944e-38, %v2263
    %v2265 = vsel %vm2262, %v2264, %v2260
    %v2266 = vmul.f32 1.0, %v2265
    %v2267 = vmul.f32 %v2246, %v2118
    %v2268 = vmul.f32 %v2227, %v2247
    %v2269 = vadd.f32 %v2267, %v2268
    %v2270 = vtanh.pop %v2269
    %v2271 = vmul.f32 %v2266, %v2270
    %v2272 = vld [vmem:[#allocation3 + $0x40] sm:$0xff]
    %v2273 = vld [vmem:[#allocation3 + $0x48] sm:$0xff]
    %v2274 = vld [vmem:[#allocation3 + $0x50] sm:$0xff]
    %v2275 = vld [vmem:[#allocation3 + $0x58] sm:$0xff]
    %2276 = vmatpush.msra.mxu0 %v1962
    %2277 = vmatpush.msra.mxu0 %v1958
    %2278 = vmatpush.msra.mxu0 %v1954
    %2279 = vmatpush.msra.mxu0 %v1950
    %2280 = vmatpush.msra.mxu0 %v1946
    %2281 = vmatpush.msra.mxu0 %v1942
    %2282 = vmatpush.msra.mxu0 %v1938
    %2283 = vmatpush.msra.mxu0 %v1934
    %2284 = vmatpush.msra.mxu0 %v1930
    %2285 = vmatpush.msra.mxu0 %v1926
    %2286 = vmatpush.msra.mxu0 %v1922
    %2287 = vmatpush.msra.mxu0 %v1918
    %2288 = vmatpush.msra.mxu0 %v1914
    %2289 = vmatpush.msra.mxu0 %v1910
    %2290 = vmatpush.msra.mxu0 %v1906
    %2291 = vmatpush.msra.mxu0 %v1902
    %2292 = vmatmul.f32.gmra.mxu0 %v2271
    %v2293 = vpop.f32.mrf.mxu0
    %v2294 = vadd.f32 0.0, %v2293
    %2295 = vdwg.mxu0
    %2296 = vmatpush.msra.mxu0 %v1963
    %2297 = vmatpush.msra.mxu0 %v1959
    %2298 = vmatpush.msra.mxu0 %v1955
    %2299 = vmatpush.msra.mxu0 %v1951
    %2300 = vmatpush.msra.mxu0 %v1947
    %2301 = vmatpush.msra.mxu0 %v1943
    %2302 = vmatpush.msra.mxu0 %v1939
    %2303 = vmatpush.msra.mxu0 %v1935
    %2304 = vmatpush.msra.mxu0 %v1931
    %2305 = vmatpush.msra.mxu0 %v1927
    %2306 = vmatpush.msra.mxu0 %v1923
    %2307 = vmatpush.msra.mxu0 %v1919
    %2308 = vmatpush.msra.mxu0 %v1915
    %2309 = vmatpush.msra.mxu0 %v1911
    %2310 = vmatpush.msra.mxu0 %v1907
    %2311 = vmatpush.msra.mxu0 %v1903
    %2312 = vmatmul.f32.gmra.mxu0 %v2271
    %v2313 = vpop.f32.mrf.mxu0
    %v2314 = vadd.f32 0.0, %v2313
    %2315 = vdwg.mxu0
    %2316 = vmatpush.msra.mxu0 %v1964
    %2317 = vmatpush.msra.mxu0 %v1960
    %2318 = vmatpush.msra.mxu0 %v1956
    %2319 = vmatpush.msra.mxu0 %v1952
    %2320 = vmatpush.msra.mxu0 %v1948
    %2321 = vmatpush.msra.mxu0 %v1944
    %2322 = vmatpush.msra.mxu0 %v1940
    %2323 = vmatpush.msra.mxu0 %v1936
    %2324 = vmatpush.msra.mxu0 %v1932
    %2325 = vmatpush.msra.mxu0 %v1928
    %2326 = vmatpush.msra.mxu0 %v1924
    %2327 = vmatpush.msra.mxu0 %v1920
    %2328 = vmatpush.msra.mxu0 %v1916
    %2329 = vmatpush.msra.mxu0 %v1912
    %2330 = vmatpush.msra.mxu0 %v1908
    %2331 = vmatpush.msra.mxu0 %v1904
    %2332 = vmatmul.f32.gmra.mxu0 %v2271
    %v2333 = vpop.f32.mrf.mxu0
    %v2334 = vadd.f32 0.0, %v2333
    %2335 = vdwg.mxu0
    %2336 = vmatpush.msra.mxu0 %v1965
    %2337 = vmatpush.msra.mxu0 %v1961
    %2338 = vmatpush.msra.mxu0 %v1957
    %2339 = vmatpush.msra.mxu0 %v1953
    %2340 = vmatpush.msra.mxu0 %v1949
    %2341 = vmatpush.msra.mxu0 %v1945
    %2342 = vmatpush.msra.mxu0 %v1941
    %2343 = vmatpush.msra.mxu0 %v1937
    %2344 = vmatpush.msra.mxu0 %v1933
    %2345 = vmatpush.msra.mxu0 %v1929
    %2346 = vmatpush.msra.mxu0 %v1925
    %2347 = vmatpush.msra.mxu0 %v1921
    %2348 = vmatpush.msra.mxu0 %v1917
    %2349 = vmatpush.msra.mxu0 %v1913
    %2350 = vmatpush.msra.mxu0 %v1909
    %2351 = vmatpush.msra.mxu0 %v1905
    %2352 = vmatmul.f32.gmra.mxu0 %v2271
    %v2353 = vpop.f32.mrf.mxu0
    %v2354 = vadd.f32 0.0, %v2353
    %2355 = vdwg.mxu0
    %v2356 = vadd.f32 %v2272, %v2294
    %v2357 = vadd.f32 %v2273, %v2314
    %v2358 = vadd.f32 %v2274, %v2334
    %v2359 = vadd.f32 %v2275, %v2354
    %v2360 = vxor.u32 %v2356, 2147483648
    %v2361 = vmul.f32 %v2360, 1.442695
    %v2362 = vpow.pop %v2361
    %v2363 = vadd.f32 %v2362, 1.0
    %v2364 = vrcp.pop %v2363
    %v2365 = vmul.f32 %v2363, %v2364
    %v2366 = vsub.f32 1.0, %v2365
    %v2367 = vmul.f32 %v2364, %v2366
    %v2368 = vadd.f32 %v2364, %v2367
    %vm2369 = vweird.f32 %v2363
    %vm2370 = vweird.f32 %v2364
    %vm2371 = vmor %vm2369, %vm2370
    %v2372 = vsel %vm2371, %v2364, %v2368
    %v2373 = vand.u32 2147483647, %v2363
    %vm2374 = vcmp.eq.f32.partialorder %v2373, 8.507059e+37
    %v2375 = vand.u32 %v2363, 2147483648
    %v2376 = vor.u32 1.1754944e-38, %v2375
    %v2377 = vsel %vm2374, %v2376, %v2372
    %v2378 = vmul.f32 1.0, %v2377
    %v2379 = vxor.u32 %v2357, 2147483648
    %v2380 = vmul.f32 %v2379, 1.442695
    %v2381 = vpow.pop %v2380
    %v2382 = vadd.f32 %v2381, 1.0
    %v2383 = vrcp.pop %v2382
    %v2384 = vmul.f32 %v2382, %v2383
    %v2385 = vsub.f32 1.0, %v2384
    %v2386 = vmul.f32 %v2383, %v2385
    %v2387 = vadd.f32 %v2383, %v2386
    %vm2388 = vweird.f32 %v2382
    %vm2389 = vweird.f32 %v2383
    %vm2390 = vmor %vm2388, %vm2389
    %v2391 = vsel %vm2390, %v2383, %v2387
    %v2392 = vand.u32 2147483647, %v2382
    %vm2393 = vcmp.eq.f32.partialorder %v2392, 8.507059e+37
    %v2394 = vand.u32 %v2382, 2147483648
    %v2395 = vor.u32 1.1754944e-38, %v2394
    %v2396 = vsel %vm2393, %v2395, %v2391
    %v2397 = vmul.f32 1.0, %v2396
    %v2398 = vtanh.pop %v2358
    %v2399 = vxor.u32 %v2359, 2147483648
    %v2400 = vmul.f32 %v2399, 1.442695
    %v2401 = vpow.pop %v2400
    %v2402 = vadd.f32 %v2401, 1.0
    %v2403 = vrcp.pop %v2402
    %v2404 = vmul.f32 %v2402, %v2403
    %v2405 = vsub.f32 1.0, %v2404
    %v2406 = vmul.f32 %v2403, %v2405
    %v2407 = vadd.f32 %v2403, %v2406
    %vm2408 = vweird.f32 %v2402
    %vm2409 = vweird.f32 %v2403
    %vm2410 = vmor %vm2408, %vm2409
    %v2411 = vsel %vm2410, %v2403, %v2407
    %v2412 = vand.u32 2147483647, %v2402
    %vm2413 = vcmp.eq.f32.partialorder %v2412, 8.507059e+37
    %v2414 = vand.u32 %v2402, 2147483648
    %v2415 = vor.u32 1.1754944e-38, %v2414
    %v2416 = vsel %vm2413, %v2415, %v2411
    %v2417 = vmul.f32 1.0, %v2416
    %v2418 = vmul.f32 %v2397, %v2269
    %v2419 = vmul.f32 %v2378, %v2398
    %v2420 = vadd.f32 %v2418, %v2419
    %v2421 = vtanh.pop %v2420
    %v2422 = vmul.f32 %v2417, %v2421
    %v2423 = vld [vmem:[#allocation3 + $0x60] sm:$0xff]
    %v2424 = vld [vmem:[#allocation3 + $0x68] sm:$0xff]
    %v2425 = vld [vmem:[#allocation3 + $0x70] sm:$0xff]
    %v2426 = vld [vmem:[#allocation3 + $0x78] sm:$0xff]
    %2427 = vmatpush.msra.mxu0 %v1962
    %2428 = vmatpush.msra.mxu0 %v1958
    %2429 = vmatpush.msra.mxu0 %v1954
    %2430 = vmatpush.msra.mxu0 %v1950
    %2431 = vmatpush.msra.mxu0 %v1946
    %2432 = vmatpush.msra.mxu0 %v1942
    %2433 = vmatpush.msra.mxu0 %v1938
    %2434 = vmatpush.msra.mxu0 %v1934
    %2435 = vmatpush.msra.mxu0 %v1930
    %2436 = vmatpush.msra.mxu0 %v1926
    %2437 = vmatpush.msra.mxu0 %v1922
    %2438 = vmatpush.msra.mxu0 %v1918
    %2439 = vmatpush.msra.mxu0 %v1914
    %2440 = vmatpush.msra.mxu0 %v1910
    %2441 = vmatpush.msra.mxu0 %v1906
    %2442 = vmatpush.msra.mxu0 %v1902
    %2443 = vmatmul.f32.gmra.mxu0 %v2422
    %v2444 = vpop.f32.mrf.mxu0
    %v2445 = vadd.f32 0.0, %v2444
    %2446 = vdwg.mxu0
    %2447 = vmatpush.msra.mxu0 %v1963
    %2448 = vmatpush.msra.mxu0 %v1959
    %2449 = vmatpush.msra.mxu0 %v1955
    %2450 = vmatpush.msra.mxu0 %v1951
    %2451 = vmatpush.msra.mxu0 %v1947
    %2452 = vmatpush.msra.mxu0 %v1943
    %2453 = vmatpush.msra.mxu0 %v1939
    %2454 = vmatpush.msra.mxu0 %v1935
    %2455 = vmatpush.msra.mxu0 %v1931
    %2456 = vmatpush.msra.mxu0 %v1927
    %2457 = vmatpush.msra.mxu0 %v1923
    %2458 = vmatpush.msra.mxu0 %v1919
    %2459 = vmatpush.msra.mxu0 %v1915
    %2460 = vmatpush.msra.mxu0 %v1911
    %2461 = vmatpush.msra.mxu0 %v1907
    %2462 = vmatpush.msra.mxu0 %v1903
    %2463 = vmatmul.f32.gmra.mxu0 %v2422
    %v2464 = vpop.f32.mrf.mxu0
    %v2465 = vadd.f32 0.0, %v2464
    %2466 = vdwg.mxu0
    %2467 = vmatpush.msra.mxu0 %v1964
    %2468 = vmatpush.msra.mxu0 %v1960
    %2469 = vmatpush.msra.mxu0 %v1956
    %2470 = vmatpush.msra.mxu0 %v1952
    %2471 = vmatpush.msra.mxu0 %v1948
    %2472 = vmatpush.msra.mxu0 %v1944
    %2473 = vmatpush.msra.mxu0 %v1940
    %2474 = vmatpush.msra.mxu0 %v1936
    %2475 = vmatpush.msra.mxu0 %v1932
    %2476 = vmatpush.msra.mxu0 %v1928
    %2477 = vmatpush.msra.mxu0 %v1924
    %2478 = vmatpush.msra.mxu0 %v1920
    %2479 = vmatpush.msra.mxu0 %v1916
    %2480 = vmatpush.msra.mxu0 %v1912
    %2481 = vmatpush.msra.mxu0 %v1908
    %2482 = vmatpush.msra.mxu0 %v1904
    %2483 = vmatmul.f32.gmra.mxu0 %v2422
    %v2484 = vpop.f32.mrf.mxu0
    %v2485 = vadd.f32 0.0, %v2484
    %2486 = vdwg.mxu0
    %2487 = vmatpush.msra.mxu0 %v1965
    %2488 = vmatpush.msra.mxu0 %v1961
    %2489 = vmatpush.msra.mxu0 %v1957
    %2490 = vmatpush.msra.mxu0 %v1953
    %2491 = vmatpush.msra.mxu0 %v1949
    %2492 = vmatpush.msra.mxu0 %v1945
    %2493 = vmatpush.msra.mxu0 %v1941
    %2494 = vmatpush.msra.mxu0 %v1937
    %2495 = vmatpush.msra.mxu0 %v1933
    %2496 = vmatpush.msra.mxu0 %v1929
    %2497 = vmatpush.msra.mxu0 %v1925
    %2498 = vmatpush.msra.mxu0 %v1921
    %2499 = vmatpush.msra.mxu0 %v1917
    %2500 = vmatpush.msra.mxu0 %v1913
    %2501 = vmatpush.msra.mxu0 %v1909
    %2502 = vmatpush.msra.mxu0 %v1905
    %2503 = vmatmul.f32.gmra.mxu0 %v2422
    %v2504 = vpop.f32.mrf.mxu0
    %v2505 = vadd.f32 0.0, %v2504
    %2506 = vdwg.mxu0
    %v2507 = vadd.f32 %v2423, %v2445
    %v2508 = vadd.f32 %v2424, %v2465
    %v2509 = vadd.f32 %v2425, %v2485
    %v2510 = vadd.f32 %v2426, %v2505
    %v2511 = vxor.u32 %v2507, 2147483648
    %v2512 = vmul.f32 %v2511, 1.442695
    %v2513 = vpow.pop %v2512
    %v2514 = vadd.f32 %v2513, 1.0
    %v2515 = vrcp.pop %v2514
    %v2516 = vmul.f32 %v2514, %v2515
    %v2517 = vsub.f32 1.0, %v2516
    %v2518 = vmul.f32 %v2515, %v2517
    %v2519 = vadd.f32 %v2515, %v2518
    %vm2520 = vweird.f32 %v2514
    %vm2521 = vweird.f32 %v2515
    %vm2522 = vmor %vm2520, %vm2521
    %v2523 = vsel %vm2522, %v2515, %v2519
    %v2524 = vand.u32 2147483647, %v2514
    %vm2525 = vcmp.eq.f32.partialorder %v2524, 8.507059e+37
    %v2526 = vand.u32 %v2514, 2147483648
    %v2527 = vor.u32 1.1754944e-38, %v2526
    %v2528 = vsel %vm2525, %v2527, %v2523
    %v2529 = vmul.f32 1.0, %v2528
    %v2530 = vxor.u32 %v2508, 2147483648
    %v2531 = vmul.f32 %v2530, 1.442695
    %v2532 = vpow.pop %v2531
    %v2533 = vadd.f32 %v2532, 1.0
    %v2534 = vrcp.pop %v2533
    %v2535 = vmul.f32 %v2533, %v2534
    %v2536 = vsub.f32 1.0, %v2535
    %v2537 = vmul.f32 %v2534, %v2536
    %v2538 = vadd.f32 %v2534, %v2537
    %vm2539 = vweird.f32 %v2533
    %vm2540 = vweird.f32 %v2534
    %vm2541 = vmor %vm2539, %vm2540
    %v2542 = vsel %vm2541, %v2534, %v2538
    %v2543 = vand.u32 2147483647, %v2533
    %vm2544 = vcmp.eq.f32.partialorder %v2543, 8.507059e+37
    %v2545 = vand.u32 %v2533, 2147483648
    %v2546 = vor.u32 1.1754944e-38, %v2545
    %v2547 = vsel %vm2544, %v2546, %v2542
    %v2548 = vmul.f32 1.0, %v2547
    %v2549 = vtanh.pop %v2509
    %v2550 = vxor.u32 %v2510, 2147483648
    %v2551 = vmul.f32 %v2550, 1.442695
    %v2552 = vpow.pop %v2551
    %v2553 = vadd.f32 %v2552, 1.0
    %v2554 = vrcp.pop %v2553
    %v2555 = vmul.f32 %v2553, %v2554
    %v2556 = vsub.f32 1.0, %v2555
    %v2557 = vmul.f32 %v2554, %v2556
    %v2558 = vadd.f32 %v2554, %v2557
    %vm2559 = vweird.f32 %v2553
    %vm2560 = vweird.f32 %v2554
    %vm2561 = vmor %vm2559, %vm2560
    %v2562 = vsel %vm2561, %v2554, %v2558
    %v2563 = vand.u32 2147483647, %v2553
    %vm2564 = vcmp.eq.f32.partialorder %v2563, 8.507059e+37
    %v2565 = vand.u32 %v2553, 2147483648
    %v2566 = vor.u32 1.1754944e-38, %v2565
    %v2567 = vsel %vm2564, %v2566, %v2562
    %v2568 = vmul.f32 1.0, %v2567
    %v2569 = vmul.f32 %v2548, %v2420
    %v2570 = vmul.f32 %v2529, %v2549
    %v2571 = vadd.f32 %v2569, %v2570
    %v2572 = vtanh.pop %v2571
    %v2573 = vmul.f32 %v2568, %v2572
    %v2574 = vld [vmem:[#allocation3 + $0x80] sm:$0xff]
    %v2575 = vld [vmem:[#allocation3 + $0x88] sm:$0xff]
    %v2576 = vld [vmem:[#allocation3 + $0x90] sm:$0xff]
    %v2577 = vld [vmem:[#allocation3 + $0x98] sm:$0xff]
    %2578 = vmatpush.msra.mxu0 %v1962
    %2579 = vmatpush.msra.mxu0 %v1958
    %2580 = vmatpush.msra.mxu0 %v1954
    %2581 = vmatpush.msra.mxu0 %v1950
    %2582 = vmatpush.msra.mxu0 %v1946
    %2583 = vmatpush.msra.mxu0 %v1942
    %2584 = vmatpush.msra.mxu0 %v1938
    %2585 = vmatpush.msra.mxu0 %v1934
    %2586 = vmatpush.msra.mxu0 %v1930
    %2587 = vmatpush.msra.mxu0 %v1926
    %2588 = vmatpush.msra.mxu0 %v1922
    %2589 = vmatpush.msra.mxu0 %v1918
    %2590 = vmatpush.msra.mxu0 %v1914
    %2591 = vmatpush.msra.mxu0 %v1910
    %2592 = vmatpush.msra.mxu0 %v1906
    %2593 = vmatpush.msra.mxu0 %v1902
    %2594 = vmatmul.f32.gmra.mxu0 %v2573
    %v2595 = vpop.f32.mrf.mxu0
    %v2596 = vadd.f32 0.0, %v2595
    %2597 = vdwg.mxu0
    %2598 = vmatpush.msra.mxu0 %v1963
    %2599 = vmatpush.msra.mxu0 %v1959
    %2600 = vmatpush.msra.mxu0 %v1955
    %2601 = vmatpush.msra.mxu0 %v1951
    %2602 = vmatpush.msra.mxu0 %v1947
    %2603 = vmatpush.msra.mxu0 %v1943
    %2604 = vmatpush.msra.mxu0 %v1939
    %2605 = vmatpush.msra.mxu0 %v1935
    %2606 = vmatpush.msra.mxu0 %v1931
    %2607 = vmatpush.msra.mxu0 %v1927
    %2608 = vmatpush.msra.mxu0 %v1923
    %2609 = vmatpush.msra.mxu0 %v1919
    %2610 = vmatpush.msra.mxu0 %v1915
    %2611 = vmatpush.msra.mxu0 %v1911
    %2612 = vmatpush.msra.mxu0 %v1907
    %2613 = vmatpush.msra.mxu0 %v1903
    %2614 = vmatmul.f32.gmra.mxu0 %v2573
    %v2615 = vpop.f32.mrf.mxu0
    %v2616 = vadd.f32 0.0, %v2615
    %2617 = vdwg.mxu0
    %2618 = vmatpush.msra.mxu0 %v1964
    %2619 = vmatpush.msra.mxu0 %v1960
    %2620 = vmatpush.msra.mxu0 %v1956
    %2621 = vmatpush.msra.mxu0 %v1952
    %2622 = vmatpush.msra.mxu0 %v1948
    %2623 = vmatpush.msra.mxu0 %v1944
    %2624 = vmatpush.msra.mxu0 %v1940
    %2625 = vmatpush.msra.mxu0 %v1936
    %2626 = vmatpush.msra.mxu0 %v1932
    %2627 = vmatpush.msra.mxu0 %v1928
    %2628 = vmatpush.msra.mxu0 %v1924
    %2629 = vmatpush.msra.mxu0 %v1920
    %2630 = vmatpush.msra.mxu0 %v1916
    %2631 = vmatpush.msra.mxu0 %v1912
    %2632 = vmatpush.msra.mxu0 %v1908
    %2633 = vmatpush.msra.mxu0 %v1904
    %2634 = vmatmul.f32.gmra.mxu0 %v2573
    %v2635 = vpop.f32.mrf.mxu0
    %v2636 = vadd.f32 0.0, %v2635
    %2637 = vdwg.mxu0
    %2638 = vmatpush.msra.mxu0 %v1965
    %2639 = vmatpush.msra.mxu0 %v1961
    %2640 = vmatpush.msra.mxu0 %v1957
    %2641 = vmatpush.msra.mxu0 %v1953
    %2642 = vmatpush.msra.mxu0 %v1949
    %2643 = vmatpush.msra.mxu0 %v1945
    %2644 = vmatpush.msra.mxu0 %v1941
    %2645 = vmatpush.msra.mxu0 %v1937
    %2646 = vmatpush.msra.mxu0 %v1933
    %2647 = vmatpush.msra.mxu0 %v1929
    %2648 = vmatpush.msra.mxu0 %v1925
    %2649 = vmatpush.msra.mxu0 %v1921
    %2650 = vmatpush.msra.mxu0 %v1917
    %2651 = vmatpush.msra.mxu0 %v1913
    %2652 = vmatpush.msra.mxu0 %v1909
    %2653 = vmatpush.msra.mxu0 %v1905
    %2654 = vmatmul.f32.gmra.mxu0 %v2573
    %v2655 = vpop.f32.mrf.mxu0
    %v2656 = vadd.f32 0.0, %v2655
    %2657 = vdwg.mxu0
    %v2658 = vadd.f32 %v2574, %v2596
    %v2659 = vadd.f32 %v2575, %v2616
    %v2660 = vadd.f32 %v2576, %v2636
    %v2661 = vadd.f32 %v2577, %v2656
    %v2662 = vxor.u32 %v2658, 2147483648
    %v2663 = vmul.f32 %v2662, 1.442695
    %v2664 = vpow.pop %v2663
    %v2665 = vadd.f32 %v2664, 1.0
    %v2666 = vrcp.pop %v2665
    %v2667 = vmul.f32 %v2665, %v2666
    %v2668 = vsub.f32 1.0, %v2667
    %v2669 = vmul.f32 %v2666, %v2668
    %v2670 = vadd.f32 %v2666, %v2669
    %vm2671 = vweird.f32 %v2665
    %vm2672 = vweird.f32 %v2666
    %vm2673 = vmor %vm2671, %vm2672
    %v2674 = vsel %vm2673, %v2666, %v2670
    %v2675 = vand.u32 2147483647, %v2665
    %vm2676 = vcmp.eq.f32.partialorder %v2675, 8.507059e+37
    %v2677 = vand.u32 %v2665, 2147483648
    %v2678 = vor.u32 1.1754944e-38, %v2677
    %v2679 = vsel %vm2676, %v2678, %v2674
    %v2680 = vmul.f32 1.0, %v2679
    %v2681 = vxor.u32 %v2659, 2147483648
    %v2682 = vmul.f32 %v2681, 1.442695
    %v2683 = vpow.pop %v2682
    %v2684 = vadd.f32 %v2683, 1.0
    %v2685 = vrcp.pop %v2684
    %v2686 = vmul.f32 %v2684, %v2685
    %v2687 = vsub.f32 1.0, %v2686
    %v2688 = vmul.f32 %v2685, %v2687
    %v2689 = vadd.f32 %v2685, %v2688
    %vm2690 = vweird.f32 %v2684
    %vm2691 = vweird.f32 %v2685
    %vm2692 = vmor %vm2690, %vm2691
    %v2693 = vsel %vm2692, %v2685, %v2689
    %v2694 = vand.u32 2147483647, %v2684
    %vm2695 = vcmp.eq.f32.partialorder %v2694, 8.507059e+37
    %v2696 = vand.u32 %v2684, 2147483648
    %v2697 = vor.u32 1.1754944e-38, %v2696
    %v2698 = vsel %vm2695, %v2697, %v2693
    %v2699 = vmul.f32 1.0, %v2698
    %v2700 = vtanh.pop %v2660
    %v2701 = vxor.u32 %v2661, 2147483648
    %v2702 = vmul.f32 %v2701, 1.442695
    %v2703 = vpow.pop %v2702
    %v2704 = vadd.f32 %v2703, 1.0
    %v2705 = vrcp.pop %v2704
    %v2706 = vmul.f32 %v2704, %v2705
    %v2707 = vsub.f32 1.0, %v2706
    %v2708 = vmul.f32 %v2705, %v2707
    %v2709 = vadd.f32 %v2705, %v2708
    %vm2710 = vweird.f32 %v2704
    %vm2711 = vweird.f32 %v2705
    %vm2712 = vmor %vm2710, %vm2711
    %v2713 = vsel %vm2712, %v2705, %v2709
    %v2714 = vand.u32 2147483647, %v2704
    %vm2715 = vcmp.eq.f32.partialorder %v2714, 8.507059e+37
    %v2716 = vand.u32 %v2704, 2147483648
    %v2717 = vor.u32 1.1754944e-38, %v2716
    %v2718 = vsel %vm2715, %v2717, %v2713
    %v2719 = vmul.f32 1.0, %v2718
    %v2720 = vmul.f32 %v2699, %v2571
    %v2721 = vmul.f32 %v2680, %v2700
    %v2722 = vadd.f32 %v2720, %v2721
    %v2723 = vtanh.pop %v2722
    %v2724 = vmul.f32 %v2719, %v2723
    %v2725 = vld [vmem:[#allocation3 + $0xa0] sm:$0xff]
    %v2726 = vld [vmem:[#allocation3 + $0xa8] sm:$0xff]
    %v2727 = vld [vmem:[#allocation3 + $0xb0] sm:$0xff]
    %v2728 = vld [vmem:[#allocation3 + $0xb8] sm:$0xff]
    %2729 = vmatpush.msra.mxu0 %v1962
    %2730 = vmatpush.msra.mxu0 %v1958
    %2731 = vmatpush.msra.mxu0 %v1954
    %2732 = vmatpush.msra.mxu0 %v1950
    %2733 = vmatpush.msra.mxu0 %v1946
    %2734 = vmatpush.msra.mxu0 %v1942
    %2735 = vmatpush.msra.mxu0 %v1938
    %2736 = vmatpush.msra.mxu0 %v1934
    %2737 = vmatpush.msra.mxu0 %v1930
    %2738 = vmatpush.msra.mxu0 %v1926
    %2739 = vmatpush.msra.mxu0 %v1922
    %2740 = vmatpush.msra.mxu0 %v1918
    %2741 = vmatpush.msra.mxu0 %v1914
    %2742 = vmatpush.msra.mxu0 %v1910
    %2743 = vmatpush.msra.mxu0 %v1906
    %2744 = vmatpush.msra.mxu0 %v1902
    %2745 = vmatmul.f32.gmra.mxu0 %v2724
    %v2746 = vpop.f32.mrf.mxu0
    %v2747 = vadd.f32 0.0, %v2746
    %2748 = vdwg.mxu0
    %2749 = vmatpush.msra.mxu0 %v1963
    %2750 = vmatpush.msra.mxu0 %v1959
    %2751 = vmatpush.msra.mxu0 %v1955
    %2752 = vmatpush.msra.mxu0 %v1951
    %2753 = vmatpush.msra.mxu0 %v1947
    %2754 = vmatpush.msra.mxu0 %v1943
    %2755 = vmatpush.msra.mxu0 %v1939
    %2756 = vmatpush.msra.mxu0 %v1935
    %2757 = vmatpush.msra.mxu0 %v1931
    %2758 = vmatpush.msra.mxu0 %v1927
    %2759 = vmatpush.msra.mxu0 %v1923
    %2760 = vmatpush.msra.mxu0 %v1919
    %2761 = vmatpush.msra.mxu0 %v1915
    %2762 = vmatpush.msra.mxu0 %v1911
    %2763 = vmatpush.msra.mxu0 %v1907
    %2764 = vmatpush.msra.mxu0 %v1903
    %2765 = vmatmul.f32.gmra.mxu0 %v2724
    %v2766 = vpop.f32.mrf.mxu0
    %v2767 = vadd.f32 0.0, %v2766
    %2768 = vdwg.mxu0
    %2769 = vmatpush.msra.mxu0 %v1964
    %2770 = vmatpush.msra.mxu0 %v1960
    %2771 = vmatpush.msra.mxu0 %v1956
    %2772 = vmatpush.msra.mxu0 %v1952
    %2773 = vmatpush.msra.mxu0 %v1948
    %2774 = vmatpush.msra.mxu0 %v1944
    %2775 = vmatpush.msra.mxu0 %v1940
    %2776 = vmatpush.msra.mxu0 %v1936
    %2777 = vmatpush.msra.mxu0 %v1932
    %2778 = vmatpush.msra.mxu0 %v1928
    %2779 = vmatpush.msra.mxu0 %v1924
    %2780 = vmatpush.msra.mxu0 %v1920
    %2781 = vmatpush.msra.mxu0 %v1916
    %2782 = vmatpush.msra.mxu0 %v1912
    %2783 = vmatpush.msra.mxu0 %v1908
    %2784 = vmatpush.msra.mxu0 %v1904
    %2785 = vmatmul.f32.gmra.mxu0 %v2724
    %v2786 = vpop.f32.mrf.mxu0
    %v2787 = vadd.f32 0.0, %v2786
    %2788 = vdwg.mxu0
    %2789 = vmatpush.msra.mxu0 %v1965
    %2790 = vmatpush.msra.mxu0 %v1961
    %2791 = vmatpush.msra.mxu0 %v1957
    %2792 = vmatpush.msra.mxu0 %v1953
    %2793 = vmatpush.msra.mxu0 %v1949
    %2794 = vmatpush.msra.mxu0 %v1945
    %2795 = vmatpush.msra.mxu0 %v1941
    %2796 = vmatpush.msra.mxu0 %v1937
    %2797 = vmatpush.msra.mxu0 %v1933
    %2798 = vmatpush.msra.mxu0 %v1929
    %2799 = vmatpush.msra.mxu0 %v1925
    %2800 = vmatpush.msra.mxu0 %v1921
    %2801 = vmatpush.msra.mxu0 %v1917
    %2802 = vmatpush.msra.mxu0 %v1913
    %2803 = vmatpush.msra.mxu0 %v1909
    %2804 = vmatpush.msra.mxu0 %v1905
    %2805 = vmatmul.f32.gmra.mxu0 %v2724
    %v2806 = vpop.f32.mrf.mxu0
    %v2807 = vadd.f32 0.0, %v2806
    %2808 = vdwg.mxu0
    %v2809 = vadd.f32 %v2725, %v2747
    %v2810 = vadd.f32 %v2726, %v2767
    %v2811 = vadd.f32 %v2727, %v2787
    %v2812 = vadd.f32 %v2728, %v2807
    %v2813 = vxor.u32 %v2809, 2147483648
    %v2814 = vmul.f32 %v2813, 1.442695
    %v2815 = vpow.pop %v2814
    %v2816 = vadd.f32 %v2815, 1.0
    %v2817 = vrcp.pop %v2816
    %v2818 = vmul.f32 %v2816, %v2817
    %v2819 = vsub.f32 1.0, %v2818
    %v2820 = vmul.f32 %v2817, %v2819
    %v2821 = vadd.f32 %v2817, %v2820
    %vm2822 = vweird.f32 %v2816
    %vm2823 = vweird.f32 %v2817
    %vm2824 = vmor %vm2822, %vm2823
    %v2825 = vsel %vm2824, %v2817, %v2821
    %v2826 = vand.u32 2147483647, %v2816
    %vm2827 = vcmp.eq.f32.partialorder %v2826, 8.507059e+37
    %v2828 = vand.u32 %v2816, 2147483648
    %v2829 = vor.u32 1.1754944e-38, %v2828
    %v2830 = vsel %vm2827, %v2829, %v2825
    %v2831 = vmul.f32 1.0, %v2830
    %v2832 = vxor.u32 %v2810, 2147483648
    %v2833 = vmul.f32 %v2832, 1.442695
    %v2834 = vpow.pop %v2833
    %v2835 = vadd.f32 %v2834, 1.0
    %v2836 = vrcp.pop %v2835
    %v2837 = vmul.f32 %v2835, %v2836
    %v2838 = vsub.f32 1.0, %v2837
    %v2839 = vmul.f32 %v2836, %v2838
    %v2840 = vadd.f32 %v2836, %v2839
    %vm2841 = vweird.f32 %v2835
    %vm2842 = vweird.f32 %v2836
    %vm2843 = vmor %vm2841, %vm2842
    %v2844 = vsel %vm2843, %v2836, %v2840
    %v2845 = vand.u32 2147483647, %v2835
    %vm2846 = vcmp.eq.f32.partialorder %v2845, 8.507059e+37
    %v2847 = vand.u32 %v2835, 2147483648
    %v2848 = vor.u32 1.1754944e-38, %v2847
    %v2849 = vsel %vm2846, %v2848, %v2844
    %v2850 = vmul.f32 1.0, %v2849
    %v2851 = vtanh.pop %v2811
    %v2852 = vxor.u32 %v2812, 2147483648
    %v2853 = vmul.f32 %v2852, 1.442695
    %v2854 = vpow.pop %v2853
    %v2855 = vadd.f32 %v2854, 1.0
    %v2856 = vrcp.pop %v2855
    %v2857 = vmul.f32 %v2855, %v2856
    %v2858 = vsub.f32 1.0, %v2857
    %v2859 = vmul.f32 %v2856, %v2858
    %v2860 = vadd.f32 %v2856, %v2859
    %vm2861 = vweird.f32 %v2855
    %vm2862 = vweird.f32 %v2856
    %vm2863 = vmor %vm2861, %vm2862
    %v2864 = vsel %vm2863, %v2856, %v2860
    %v2865 = vand.u32 2147483647, %v2855
    %vm2866 = vcmp.eq.f32.partialorder %v2865, 8.507059e+37
    %v2867 = vand.u32 %v2855, 2147483648
    %v2868 = vor.u32 1.1754944e-38, %v2867
    %v2869 = vsel %vm2866, %v2868, %v2864
    %v2870 = vmul.f32 1.0, %v2869
    %v2871 = vmul.f32 %v2850, %v2722
    %v2872 = vmul.f32 %v2831, %v2851
    %v2873 = vadd.f32 %v2871, %v2872
    %v2874 = vtanh.pop %v2873
    %v2875 = vmul.f32 %v2870, %v2874
    %v2876 = vld [vmem:[#allocation3 + $0xc0] sm:$0xff]
    %v2877 = vld [vmem:[#allocation3 + $0xc8] sm:$0xff]
    %v2878 = vld [vmem:[#allocation3 + $0xd0] sm:$0xff]
    %v2879 = vld [vmem:[#allocation3 + $0xd8] sm:$0xff]
    %2880 = vmatpush.msra.mxu0 %v1962
    %2881 = vmatpush.msra.mxu0 %v1958
    %2882 = vmatpush.msra.mxu0 %v1954
    %2883 = vmatpush.msra.mxu0 %v1950
    %2884 = vmatpush.msra.mxu0 %v1946
    %2885 = vmatpush.msra.mxu0 %v1942
    %2886 = vmatpush.msra.mxu0 %v1938
    %2887 = vmatpush.msra.mxu0 %v1934
    %2888 = vmatpush.msra.mxu0 %v1930
    %2889 = vmatpush.msra.mxu0 %v1926
    %2890 = vmatpush.msra.mxu0 %v1922
    %2891 = vmatpush.msra.mxu0 %v1918
    %2892 = vmatpush.msra.mxu0 %v1914
    %2893 = vmatpush.msra.mxu0 %v1910
    %2894 = vmatpush.msra.mxu0 %v1906
    %2895 = vmatpush.msra.mxu0 %v1902
    %2896 = vmatmul.f32.gmra.mxu0 %v2875
    %v2897 = vpop.f32.mrf.mxu0
    %v2898 = vadd.f32 0.0, %v2897
    %2899 = vdwg.mxu0
    %2900 = vmatpush.msra.mxu0 %v1963
    %2901 = vmatpush.msra.mxu0 %v1959
    %2902 = vmatpush.msra.mxu0 %v1955
    %2903 = vmatpush.msra.mxu0 %v1951
    %2904 = vmatpush.msra.mxu0 %v1947
    %2905 = vmatpush.msra.mxu0 %v1943
    %2906 = vmatpush.msra.mxu0 %v1939
    %2907 = vmatpush.msra.mxu0 %v1935
    %2908 = vmatpush.msra.mxu0 %v1931
    %2909 = vmatpush.msra.mxu0 %v1927
    %2910 = vmatpush.msra.mxu0 %v1923
    %2911 = vmatpush.msra.mxu0 %v1919
    %2912 = vmatpush.msra.mxu0 %v1915
    %2913 = vmatpush.msra.mxu0 %v1911
    %2914 = vmatpush.msra.mxu0 %v1907
    %2915 = vmatpush.msra.mxu0 %v1903
    %2916 = vmatmul.f32.gmra.mxu0 %v2875
    %v2917 = vpop.f32.mrf.mxu0
    %v2918 = vadd.f32 0.0, %v2917
    %2919 = vdwg.mxu0
    %2920 = vmatpush.msra.mxu0 %v1964
    %2921 = vmatpush.msra.mxu0 %v1960
    %2922 = vmatpush.msra.mxu0 %v1956
    %2923 = vmatpush.msra.mxu0 %v1952
    %2924 = vmatpush.msra.mxu0 %v1948
    %2925 = vmatpush.msra.mxu0 %v1944
    %2926 = vmatpush.msra.mxu0 %v1940
    %2927 = vmatpush.msra.mxu0 %v1936
    %2928 = vmatpush.msra.mxu0 %v1932
    %2929 = vmatpush.msra.mxu0 %v1928
    %2930 = vmatpush.msra.mxu0 %v1924
    %2931 = vmatpush.msra.mxu0 %v1920
    %2932 = vmatpush.msra.mxu0 %v1916
    %2933 = vmatpush.msra.mxu0 %v1912
    %2934 = vmatpush.msra.mxu0 %v1908
    %2935 = vmatpush.msra.mxu0 %v1904
    %2936 = vmatmul.f32.gmra.mxu0 %v2875
    %v2937 = vpop.f32.mrf.mxu0
    %v2938 = vadd.f32 0.0, %v2937
    %2939 = vdwg.mxu0
    %2940 = vmatpush.msra.mxu0 %v1965
    %2941 = vmatpush.msra.mxu0 %v1961
    %2942 = vmatpush.msra.mxu0 %v1957
    %2943 = vmatpush.msra.mxu0 %v1953
    %2944 = vmatpush.msra.mxu0 %v1949
    %2945 = vmatpush.msra.mxu0 %v1945
    %2946 = vmatpush.msra.mxu0 %v1941
    %2947 = vmatpush.msra.mxu0 %v1937
    %2948 = vmatpush.msra.mxu0 %v1933
    %2949 = vmatpush.msra.mxu0 %v1929
    %2950 = vmatpush.msra.mxu0 %v1925
    %2951 = vmatpush.msra.mxu0 %v1921
    %2952 = vmatpush.msra.mxu0 %v1917
    %2953 = vmatpush.msra.mxu0 %v1913
    %2954 = vmatpush.msra.mxu0 %v1909
    %2955 = vmatpush.msra.mxu0 %v1905
    %2956 = vmatmul.f32.gmra.mxu0 %v2875
    %v2957 = vpop.f32.mrf.mxu0
    %v2958 = vadd.f32 0.0, %v2957
    %2959 = vdwg.mxu0
    %v2960 = vadd.f32 %v2876, %v2898
    %v2961 = vadd.f32 %v2877, %v2918
    %v2962 = vadd.f32 %v2878, %v2938
    %v2963 = vadd.f32 %v2879, %v2958
    %v2964 = vxor.u32 %v2960, 2147483648
    %v2965 = vmul.f32 %v2964, 1.442695
    %v2966 = vpow.pop %v2965
    %v2967 = vadd.f32 %v2966, 1.0
    %v2968 = vrcp.pop %v2967
    %v2969 = vmul.f32 %v2967, %v2968
    %v2970 = vsub.f32 1.0, %v2969
    %v2971 = vmul.f32 %v2968, %v2970
    %v2972 = vadd.f32 %v2968, %v2971
    %vm2973 = vweird.f32 %v2967
    %vm2974 = vweird.f32 %v2968
    %vm2975 = vmor %vm2973, %vm2974
    %v2976 = vsel %vm2975, %v2968, %v2972
    %v2977 = vand.u32 2147483647, %v2967
    %vm2978 = vcmp.eq.f32.partialorder %v2977, 8.507059e+37
    %v2979 = vand.u32 %v2967, 2147483648
    %v2980 = vor.u32 1.1754944e-38, %v2979
    %v2981 = vsel %vm2978, %v2980, %v2976
    %v2982 = vmul.f32 1.0, %v2981
    %v2983 = vxor.u32 %v2961, 2147483648
    %v2984 = vmul.f32 %v2983, 1.442695
    %v2985 = vpow.pop %v2984
    %v2986 = vadd.f32 %v2985, 1.0
    %v2987 = vrcp.pop %v2986
    %v2988 = vmul.f32 %v2986, %v2987
    %v2989 = vsub.f32 1.0, %v2988
    %v2990 = vmul.f32 %v2987, %v2989
    %v2991 = vadd.f32 %v2987, %v2990
    %vm2992 = vweird.f32 %v2986
    %vm2993 = vweird.f32 %v2987
    %vm2994 = vmor %vm2992, %vm2993
    %v2995 = vsel %vm2994, %v2987, %v2991
    %v2996 = vand.u32 2147483647, %v2986
    %vm2997 = vcmp.eq.f32.partialorder %v2996, 8.507059e+37
    %v2998 = vand.u32 %v2986, 2147483648
    %v2999 = vor.u32 1.1754944e-38, %v2998
    %v3000 = vsel %vm2997, %v2999, %v2995
    %v3001 = vmul.f32 1.0, %v3000
    %v3002 = vtanh.pop %v2962
    %v3003 = vxor.u32 %v2963, 2147483648
    %v3004 = vmul.f32 %v3003, 1.442695
    %v3005 = vpow.pop %v3004
    %v3006 = vadd.f32 %v3005, 1.0
    %v3007 = vrcp.pop %v3006
    %v3008 = vmul.f32 %v3006, %v3007
    %v3009 = vsub.f32 1.0, %v3008
    %v3010 = vmul.f32 %v3007, %v3009
    %v3011 = vadd.f32 %v3007, %v3010
    %vm3012 = vweird.f32 %v3006
    %vm3013 = vweird.f32 %v3007
    %vm3014 = vmor %vm3012, %vm3013
    %v3015 = vsel %vm3014, %v3007, %v3011
    %v3016 = vand.u32 2147483647, %v3006
    %vm3017 = vcmp.eq.f32.partialorder %v3016, 8.507059e+37
    %v3018 = vand.u32 %v3006, 2147483648
    %v3019 = vor.u32 1.1754944e-38, %v3018
    %v3020 = vsel %vm3017, %v3019, %v3015
    %v3021 = vmul.f32 1.0, %v3020
    %v3022 = vmul.f32 %v3001, %v2873
    %v3023 = vmul.f32 %v2982, %v3002
    %v3024 = vadd.f32 %v3022, %v3023
    %v3025 = vtanh.pop %v3024
    %v3026 = vmul.f32 %v3021, %v3025
    %v3027 = vld [vmem:[#allocation3 + $0xe0] sm:$0xff]
    %v3028 = vld [vmem:[#allocation3 + $0xe8] sm:$0xff]
    %v3029 = vld [vmem:[#allocation3 + $0xf0] sm:$0xff]
    %v3030 = vld [vmem:[#allocation3 + $0xf8] sm:$0xff]
    %3031 = vmatpush.msra.mxu0 %v1962
    %3032 = vmatpush.msra.mxu0 %v1958
    %3033 = vmatpush.msra.mxu0 %v1954
    %3034 = vmatpush.msra.mxu0 %v1950
    %3035 = vmatpush.msra.mxu0 %v1946
    %3036 = vmatpush.msra.mxu0 %v1942
    %3037 = vmatpush.msra.mxu0 %v1938
    %3038 = vmatpush.msra.mxu0 %v1934
    %3039 = vmatpush.msra.mxu0 %v1930
    %3040 = vmatpush.msra.mxu0 %v1926
    %3041 = vmatpush.msra.mxu0 %v1922
    %3042 = vmatpush.msra.mxu0 %v1918
    %3043 = vmatpush.msra.mxu0 %v1914
    %3044 = vmatpush.msra.mxu0 %v1910
    %3045 = vmatpush.msra.mxu0 %v1906
    %3046 = vmatpush.msra.mxu0 %v1902
    %3047 = vmatmul.f32.gmra.mxu0 %v3026
    %v3048 = vpop.f32.mrf.mxu0
    %v3049 = vadd.f32 0.0, %v3048
    %3050 = vdwg.mxu0
    %3051 = vmatpush.msra.mxu0 %v1963
    %3052 = vmatpush.msra.mxu0 %v1959
    %3053 = vmatpush.msra.mxu0 %v1955
    %3054 = vmatpush.msra.mxu0 %v1951
    %3055 = vmatpush.msra.mxu0 %v1947
    %3056 = vmatpush.msra.mxu0 %v1943
    %3057 = vmatpush.msra.mxu0 %v1939
    %3058 = vmatpush.msra.mxu0 %v1935
    %3059 = vmatpush.msra.mxu0 %v1931
    %3060 = vmatpush.msra.mxu0 %v1927
    %3061 = vmatpush.msra.mxu0 %v1923
    %3062 = vmatpush.msra.mxu0 %v1919
    %3063 = vmatpush.msra.mxu0 %v1915
    %3064 = vmatpush.msra.mxu0 %v1911
    %3065 = vmatpush.msra.mxu0 %v1907
    %3066 = vmatpush.msra.mxu0 %v1903
    %3067 = vmatmul.f32.gmra.mxu0 %v3026
    %v3068 = vpop.f32.mrf.mxu0
    %v3069 = vadd.f32 0.0, %v3068
    %3070 = vdwg.mxu0
    %3071 = vmatpush.msra.mxu0 %v1964
    %3072 = vmatpush.msra.mxu0 %v1960
    %3073 = vmatpush.msra.mxu0 %v1956
    %3074 = vmatpush.msra.mxu0 %v1952
    %3075 = vmatpush.msra.mxu0 %v1948
    %3076 = vmatpush.msra.mxu0 %v1944
    %3077 = vmatpush.msra.mxu0 %v1940
    %3078 = vmatpush.msra.mxu0 %v1936
    %3079 = vmatpush.msra.mxu0 %v1932
    %3080 = vmatpush.msra.mxu0 %v1928
    %3081 = vmatpush.msra.mxu0 %v1924
    %3082 = vmatpush.msra.mxu0 %v1920
    %3083 = vmatpush.msra.mxu0 %v1916
    %3084 = vmatpush.msra.mxu0 %v1912
    %3085 = vmatpush.msra.mxu0 %v1908
    %3086 = vmatpush.msra.mxu0 %v1904
    %3087 = vmatmul.f32.gmra.mxu0 %v3026
    %v3088 = vpop.f32.mrf.mxu0
    %v3089 = vadd.f32 0.0, %v3088
    %3090 = vdwg.mxu0
    %3091 = vmatpush.msra.mxu0 %v1965
    %3092 = vmatpush.msra.mxu0 %v1961
    %3093 = vmatpush.msra.mxu0 %v1957
    %3094 = vmatpush.msra.mxu0 %v1953
    %3095 = vmatpush.msra.mxu0 %v1949
    %3096 = vmatpush.msra.mxu0 %v1945
    %3097 = vmatpush.msra.mxu0 %v1941
    %3098 = vmatpush.msra.mxu0 %v1937
    %3099 = vmatpush.msra.mxu0 %v1933
    %3100 = vmatpush.msra.mxu0 %v1929
    %3101 = vmatpush.msra.mxu0 %v1925
    %3102 = vmatpush.msra.mxu0 %v1921
    %3103 = vmatpush.msra.mxu0 %v1917
    %3104 = vmatpush.msra.mxu0 %v1913
    %3105 = vmatpush.msra.mxu0 %v1909
    %3106 = vmatpush.msra.mxu0 %v1905
    %3107 = vmatmul.f32.gmra.mxu0 %v3026
    %v3108 = vpop.f32.mrf.mxu0
    %v3109 = vadd.f32 0.0, %v3108
    %3110 = vdwg.mxu0
    %v3111 = vadd.f32 %v3027, %v3049
    %v3112 = vadd.f32 %v3028, %v3069
    %v3113 = vadd.f32 %v3029, %v3089
    %v3114 = vadd.f32 %v3030, %v3109
    %v3115 = vxor.u32 %v3111, 2147483648
    %v3116 = vmul.f32 %v3115, 1.442695
    %v3117 = vpow.pop %v3116
    %v3118 = vadd.f32 %v3117, 1.0
    %v3119 = vrcp.pop %v3118
    %v3120 = vmul.f32 %v3118, %v3119
    %v3121 = vsub.f32 1.0, %v3120
    %v3122 = vmul.f32 %v3119, %v3121
    %v3123 = vadd.f32 %v3119, %v3122
    %vm3124 = vweird.f32 %v3118
    %vm3125 = vweird.f32 %v3119
    %vm3126 = vmor %vm3124, %vm3125
    %v3127 = vsel %vm3126, %v3119, %v3123
    %v3128 = vand.u32 2147483647, %v3118
    %vm3129 = vcmp.eq.f32.partialorder %v3128, 8.507059e+37
    %v3130 = vand.u32 %v3118, 2147483648
    %v3131 = vor.u32 1.1754944e-38, %v3130
    %v3132 = vsel %vm3129, %v3131, %v3127
    %v3133 = vmul.f32 1.0, %v3132
    %v3134 = vxor.u32 %v3112, 2147483648
    %v3135 = vmul.f32 %v3134, 1.442695
    %v3136 = vpow.pop %v3135
    %v3137 = vadd.f32 %v3136, 1.0
    %v3138 = vrcp.pop %v3137
    %v3139 = vmul.f32 %v3137, %v3138
    %v3140 = vsub.f32 1.0, %v3139
    %v3141 = vmul.f32 %v3138, %v3140
    %v3142 = vadd.f32 %v3138, %v3141
    %vm3143 = vweird.f32 %v3137
    %vm3144 = vweird.f32 %v3138
    %vm3145 = vmor %vm3143, %vm3144
    %v3146 = vsel %vm3145, %v3138, %v3142
    %v3147 = vand.u32 2147483647, %v3137
    %vm3148 = vcmp.eq.f32.partialorder %v3147, 8.507059e+37
    %v3149 = vand.u32 %v3137, 2147483648
    %v3150 = vor.u32 1.1754944e-38, %v3149
    %v3151 = vsel %vm3148, %v3150, %v3146
    %v3152 = vmul.f32 1.0, %v3151
    %v3153 = vtanh.pop %v3113
    %v3154 = vxor.u32 %v3114, 2147483648
    %v3155 = vmul.f32 %v3154, 1.442695
    %v3156 = vpow.pop %v3155
    %v3157 = vadd.f32 %v3156, 1.0
    %v3158 = vrcp.pop %v3157
    %v3159 = vmul.f32 %v3157, %v3158
    %v3160 = vsub.f32 1.0, %v3159
    %v3161 = vmul.f32 %v3158, %v3160
    %v3162 = vadd.f32 %v3158, %v3161
    %vm3163 = vweird.f32 %v3157
    %vm3164 = vweird.f32 %v3158
    %vm3165 = vmor %vm3163, %vm3164
    %v3166 = vsel %vm3165, %v3158, %v3162
    %v3167 = vand.u32 2147483647, %v3157
    %vm3168 = vcmp.eq.f32.partialorder %v3167, 8.507059e+37
    %v3169 = vand.u32 %v3157, 2147483648
    %v3170 = vor.u32 1.1754944e-38, %v3169
    %v3171 = vsel %vm3168, %v3170, %v3166
    %v3172 = vmul.f32 1.0, %v3171
    %v3173 = vmul.f32 %v3152, %v3024
    %v3174 = vmul.f32 %v3133, %v3153
    %v3175 = vadd.f32 %v3173, %v3174
    %v3176 = vtanh.pop %v3175
    %v3177 = vmul.f32 %v3172, %v3176
    %v3178 = vld [vmem:[%s6] sm:$0xff]
    %v3179 = vld [vmem:[%s6 + $0x8] sm:$0xff]
    %v3180 = vld [vmem:[%s6 + $0x10] sm:$0xff]
    %v3181 = vld [vmem:[%s6 + $0x18] sm:$0xff]
    %v3182 = vld [vmem:[%s6 + $0x20] sm:$0xff]
    %v3183 = vld [vmem:[%s6 + $0x28] sm:$0xff]
    %v3184 = vld [vmem:[%s6 + $0x30] sm:$0xff]
    %v3185 = vld [vmem:[%s6 + $0x38] sm:$0xff]
    %v3186 = vld [vmem:[%s6 + $0x40] sm:$0xff]
    %v3187 = vld [vmem:[%s6 + $0x48] sm:$0xff]
    %v3188 = vld [vmem:[%s6 + $0x50] sm:$0xff]
    %v3189 = vld [vmem:[%s6 + $0x58] sm:$0xff]
    %v3190 = vld [vmem:[%s6 + $0x60] sm:$0xff]
    %v3191 = vld [vmem:[%s6 + $0x68] sm:$0xff]
    %v3192 = vld [vmem:[%s6 + $0x70] sm:$0xff]
    %v3193 = vld [vmem:[%s6 + $0x78] sm:$0xff]
    %v3194 = vld [vmem:[%s7] sm:$0x1]
    %v3196 = vperm.slane %v3194, 0
    %3198 = vmatpush.msra.mxu0 %v3193
    %3199 = vmatpush.msra.mxu0 %v3192
    %3200 = vmatpush.msra.mxu0 %v3191
    %3201 = vmatpush.msra.mxu0 %v3190
    %3202 = vmatpush.msra.mxu0 %v3189
    %3203 = vmatpush.msra.mxu0 %v3188
    %3204 = vmatpush.msra.mxu0 %v3187
    %3205 = vmatpush.msra.mxu0 %v3186
    %3206 = vmatpush.msra.mxu0 %v3185
    %3207 = vmatpush.msra.mxu0 %v3184
    %3208 = vmatpush.msra.mxu0 %v3183
    %3209 = vmatpush.msra.mxu0 %v3182
    %3210 = vmatpush.msra.mxu0 %v3181
    %3211 = vmatpush.msra.mxu0 %v3180
    %3212 = vmatpush.msra.mxu0 %v3179
    %3213 = vmatpush.msra.mxu0 %v3178
    %3214 = vmatmul.f32.gmra.mxu0 %v3177
    %v3215 = vpop.f32.mrf.mxu0
    %v3216 = vadd.f32 %v3196, %v3215
    %3217 = vdwg.mxu0
    %vm3218 = vcmask 31744
    %v3219 = vsel %vm3218, %v3216, -inf
    %3220 = vmax.xlane.f32.xlu0 %v3219
    %v3221 = vpop.xlane.xlu0 %3220
    %v3222 = vsub.f32 %v3216, %v3221
    %v3223 = vmul.f32 %v3222, 1.442695
    %v3224 = vpow.pop %v3223
    %v3225 = vsel %vm3218, %v3224, 0.0
    %3226 = vadd.xlane.f32.xlu0 %v3225
    %v3227 = vpop.xlane.xlu0 %3226
    %v3228 = vlog2.pop %v3227
    %v3229 = vmul.f32 %v3228, 0.6931472
    %v3230 = vsub.f32 %v3222, %v3229
    %3231 = vst.msk [vmem:[%s8] sm:$0xff] %vm3218, %v3230
    // Predicated region
    $region42: #{tpu_custom_call.1} parent=1 // pred_check
      _
    $region43: #{tpu_custom_call.1} parent=1 // pred_check_branch
      %3233 = sbr.rel (0) target = $region45
    $region44: #{tpu_custom_call.1} parent=1 // pred_region
      _
    $region45: #{tpu_custom_call.1} parent=1 // pred_fallthru
      _
    // Predicated region
    $region46: #{tpu_custom_call.1} parent=1 // pred_check
      _
    $region47: #{tpu_custom_call.1} parent=1 // pred_check_branch
      %3235 = sbr.rel (0) target = $region49
    $region48: #{tpu_custom_call.1} parent=1 // pred_region
      _
    $region49: #{tpu_custom_call.1} parent=1 // pred_fallthru
      _
    %3236 = vsyncpa [#allocation5], 1
    %3237 = vsyncpa [#allocation7], 1

</llo_original>
